<compile_context>
chip_gen: v7x
topology: tpu7x:2x2x1
jax: 0.10.0
libtpu: 0.0.40
codegen_flags: <defaults>
</compile_context>

<pallas_src>
import functools

import jax
import jax.numpy as jnp
from jax import lax
from jax.experimental import pallas as pl
from jax.experimental.pallas import tpu as pltpu

PATCH = 14
LANE = 128

# rows of the packed per-layer vector slab
# 0 ln1_w | 1 ln1_b | 2 qkv_b | 3 proj_b | 4 ls1 | 5 ln2_w | 6 ln2_b
# 7 fc1_b | 8 fc2_b | 9 ls2
_N_VEC_ROWS = 10


def _round_up(x, m):
    return (x + m - 1) // m * m


def _gelu(x):
    # TODO(synk): DINOv2 uses exact erf-GELU; tanh approximation used here since
    # erf is not guaranteed to lower through Mosaic.
    c = 0.7978845608028654  # sqrt(2/pi)
    return 0.5 * x * (1.0 + jnp.tanh(c * (x + 0.044715 * x * x * x)))


# ----------------------------------------------------------------------------
# fused DINOv2 kernel: grid=(G, depth), tokens VMEM-resident across layers
# ----------------------------------------------------------------------------
def _dinov2_kernel(num_heads, real_d, apply_norm,
                   patch_ref, pw_ref, pb_ref, cls_ref, pos_ref,
                   nw_ref, nb_ref, vec_ref,
                   qkvw_ref, projw_ref, fc1w_ref, fc2w_ref, o_ref):
    layer = pl.program_id(1)
    Bg, N, Dp = o_ref.shape
    M = Bg * N
    Hmp = fc1w_ref.shape[2]
    hd = real_d // num_heads
    scale = float(hd) ** -0.5
    inv_d = 1.0 / float(real_d)

    # 1.0 on the real embedding lanes, 0.0 on the zero-padded lanes.
    lane_mask = (lax.broadcasted_iota(jnp.int32, (1, Dp), 1) < real_d
                 ).astype(jnp.float32)

    def layernorm(x, w, b, eps=1e-6):
        # x is zero beyond column real_d; w/b are zero there, so the padded
        # lanes of the output stay exactly zero.
        mu = jnp.sum(x, axis=-1, keepdims=True) * inv_d
        xc = (x - mu) * lane_mask
        var = jnp.sum(xc * xc, axis=-1, keepdims=True) * inv_d
        return xc * lax.rsqrt(var + eps) * w + b

    # ---- layer 0: fused patch embedding (im2col matmul + cls + pos) ----
    @pl.when(layer == 0)
    def _():
        pw = pw_ref[...]                                        # (Kp, Dp) bf16
        for g in range(Bg):                                     # static unroll
            tok = jnp.dot(patch_ref[g], pw,
                          preferred_element_type=jnp.float32) + pb_ref[...]
            o_ref[g] = jnp.concatenate([cls_ref[...], tok], axis=0) + pos_ref[...]

    x = o_ref[...].reshape(M, Dp)          # resident f32 tokens (M, Dp)

    vec = vec_ref[0]                        # (10, VW) f32
    ln1_w = vec[0:1, :Dp]
    ln1_b = vec[1:2, :Dp]
    qkv_b = vec[2:3, :3 * Dp]
    proj_b = vec[3:4, :Dp]
    ls1 = vec[4:5, :Dp]
    ln2_w = vec[5:6, :Dp]
    ln2_b = vec[6:7, :Dp]
    fc1_b = vec[7:8, :Hmp]
    fc2_b = vec[8:9, :Dp]
    ls2 = vec[9:10, :Dp]

    # ---- attention branch: x = x + ls1 * proj(attn(norm1(x))) ----
    xn = layernorm(x, ln1_w, ln1_b)
    qkv = jnp.dot(xn.astype(jnp.bfloat16), qkvw_ref[0],
                  preferred_element_type=jnp.float32) + qkv_b        # (M, 3Dp)

    # Slice to the REAL embedding columns before the head split; run the
    # score/softmax/ctx einsums over num_heads real heads only.
    ctx_rows = []
    for g in range(Bg):                                            # static unroll
        base = g * N
        qg = (qkv[base:base + N, 0:real_d] * scale).reshape(N, num_heads, hd)
        kg = qkv[base:base + N, Dp:Dp + real_d].reshape(N, num_heads, hd)
        vg = qkv[base:base + N, 2 * Dp:2 * Dp + real_d].reshape(N, num_heads, hd)
        s = jnp.einsum('qhd,khd->hqk', qg.astype(jnp.bfloat16),
                       kg.astype(jnp.bfloat16),
                       preferred_element_type=jnp.float32)           # (H, N, N)
        s = s - jnp.max(s, axis=-1, keepdims=True)
        p = jnp.exp(s)
        p = p / jnp.sum(p, axis=-1, keepdims=True)                   # exact softmax
        cg = jnp.einsum('hqk,khd->qhd', p.astype(jnp.bfloat16),
                        vg.astype(jnp.bfloat16),
                        preferred_element_type=jnp.float32)          # (N, H, hd)
        ctx_rows.append(cg.reshape(N, real_d))
    ctx = ctx_rows[0] if Bg == 1 else jnp.concatenate(ctx_rows, axis=0)  # (M, real_d)
    # TODO(synk): at real DINOv2 sequence lengths (N ~ 257-1370) the (H,N,N)
    # scores should be replaced by a flash-style online-softmax KV-tile loop.

    pw_proj = projw_ref[0][:real_d, :]                               # (real_d, Dp)
    attn = jnp.dot(ctx.astype(jnp.bfloat16), pw_proj,
                   preferred_element_type=jnp.float32) + proj_b
    x = x + ls1 * attn

    # ---- MLP branch: x = x + ls2 * fc2(gelu(fc1(norm2(x)))) ----
    xn = layernorm(x, ln2_w, ln2_b)
    h1 = jnp.dot(xn.astype(jnp.bfloat16), fc1w_ref[0],
                 preferred_element_type=jnp.float32) + fc1_b
    h1 = _gelu(h1)
    h2 = jnp.dot(h1.astype(jnp.bfloat16), fc2w_ref[0],
                 preferred_element_type=jnp.float32) + fc2_b
    x = x + ls2 * h2

    o_ref[...] = x.reshape(Bg, N, Dp)

    # ---- optional final LayerNorm, fused into the last layer ----
    if apply_norm:
        @pl.when(layer == pl.num_programs(1) - 1)
        def _():
            o_ref[...] = layernorm(x, nw_ref[...], nb_ref[...]).reshape(Bg, N, Dp)


def _dinov2_forward(patches, patch_w, patch_b, cls, pos, norm_w, norm_b,
                    vecs, qkv_w, proj_w, fc1_w, fc2_w, *,
                    num_heads, real_d, apply_norm):
    B, P, Kp = patches.shape
    N, Dp = pos.shape
    depth = vecs.shape[0]
    VW = vecs.shape[2]
    Hmp = fc1_w.shape[2]

    # G "core groups": weights stream G times (not B times); G>=2 keeps both
    # v7x TensorCores busy; on v5e/v6e (1 TC) the leading axis is just a loop.
    G = 2 if (B >= 2 and B % 2 == 0) else 1
    Bg = B // G

    kern = functools.partial(_dinov2_kernel, num_heads, real_d, apply_norm)
    return pl.pallas_call(
        kern,
        out_shape=jax.ShapeDtypeStruct((B, N, Dp), jnp.float32),
        grid=(G, depth),
        in_specs=[
            pl.BlockSpec((Bg, P, Kp), lambda g, l: (g, 0, 0)),      # patches
            pl.BlockSpec((Kp, Dp), lambda g, l: (0, 0)),            # patch_w
            pl.BlockSpec((1, Dp), lambda g, l: (0, 0)),             # patch_b
            pl.BlockSpec((1, Dp), lambda g, l: (0, 0)),             # cls
            pl.BlockSpec((N, Dp), lambda g, l: (0, 0)),             # pos
            pl.BlockSpec((1, Dp), lambda g, l: (0, 0)),             # norm_w
            pl.BlockSpec((1, Dp), lambda g, l: (0, 0)),             # norm_b
            pl.BlockSpec((1, _N_VEC_ROWS, VW), lambda g, l: (l, 0, 0)),
            pl.BlockSpec((1, Dp, 3 * Dp), lambda g, l: (l, 0, 0)),  # qkv_w
            pl.BlockSpec((1, Dp, Dp), lambda g, l: (l, 0, 0)),      # proj_w
            pl.BlockSpec((1, Dp, Hmp), lambda g, l: (l, 0, 0)),     # fc1_w
            pl.BlockSpec((1, Hmp, Dp), lambda g, l: (l, 0, 0)),     # fc2_w
        ],
        out_specs=pl.BlockSpec((Bg, N, Dp), lambda g, l: (g, 0, 0)),
        compiler_params=pltpu.CompilerParams(
            dimension_semantics=("parallel", "arbitrary")),
    )(patches, patch_w, patch_b, cls, pos, norm_w, norm_b,
      vecs, qkv_w, proj_w, fc1_w, fc2_w)


# ----------------------------------------------------------------------------
# deterministic synthetic parameter init (lane-padded layouts)
# ----------------------------------------------------------------------------
def init_dinov2_params(key, *, embed_dim, depth, num_heads, mlp_ratio,
                       in_chans, num_patches):
    D = embed_dim
    Hm = D * mlp_ratio
    Dp = _round_up(D, LANE)
    Hmp = _round_up(Hm, LANE)
    K = in_chans * PATCH * PATCH
    Kp = _round_up(K, LANE)
    N = 1 + num_patches
    VW = max(3 * Dp, Hmp)

    cnt = [0]

    def rnd(shape):
        cnt[0] += 1
        return (0.02 * jax.random.normal(jax.random.fold_in(key, cnt[0]),
                                         shape)).astype(jnp.float32)

    def pad2(a, rows, cols):
        out = jnp.zeros((rows, cols), jnp.float32)
        return out.at[:a.shape[0], :a.shape[1]].set(a)

    def padvec(a, width):
        return jnp.zeros((width,), jnp.float32).at[:a.shape[0]].set(a)

    # conv(14x14, stride 14) flattened to (K, D) for the im2col matmul
    patch_w = rnd((D, in_chans, PATCH, PATCH)).reshape(D, K).T

    params = {
        "D": D, "Dp": Dp, "Hm": Hm, "Hmp": Hmp, "K": K, "Kp": Kp, "N": N,
        "patch_w": pad2(patch_w, Kp, Dp).astype(jnp.bfloat16),
        "patch_b": pad2(rnd((1, D)), 1, Dp),
        "cls_token": pad2(rnd((1, D)), 1, Dp),
        "pos_embed": pad2(rnd((N, D)), N, Dp),
        "norm_w": pad2(jnp.ones((1, D), jnp.float32), 1, Dp),
        "norm_b": jnp.zeros((1, Dp), jnp.float32),
    }

    qkv_ws, proj_ws, fc1_ws, fc2_ws, vec_rows = [], [], [], [], []
    ones_row = padvec(jnp.ones((D,), jnp.float32), VW)
    zeros_row = jnp.zeros((VW,), jnp.float32)

    for _ in range(depth):
        qkv_w = rnd((3 * D, D)).T            # (D, 3D), x @ W layout
        qkv_b = rnd((3 * D,))
        proj_w = rnd((D, D)).T
        proj_b = rnd((D,))
        fc1_w = rnd((Hm, D)).T               # (D, Hm)
        fc1_b = rnd((Hm,))
        fc2_w = rnd((D, Hm)).T               # (Hm, D)
        fc2_b = rnd((D,))

        # pad qkv into lane-aligned q|k|v segments of width Dp each
        qkv_wp = jnp.zeros((Dp, 3 * Dp), jnp.float32)
        qkv_bp = jnp.zeros((3 * Dp,), jnp.float32)
        for seg in range(3):
            qkv_wp = qkv_wp.at[:D, seg * Dp:seg * Dp + D].set(
                qkv_w[:, seg * D:(seg + 1) * D])
            qkv_bp = qkv_bp.at[seg * Dp:seg * Dp + D].set(
                qkv_b[seg * D:(seg + 1) * D])

        qkv_ws.append(qkv_wp)
        proj_ws.append(pad2(proj_w, Dp, Dp))
        fc1_ws.append(pad2(fc1_w, Dp, Hmp))
        fc2_ws.append(pad2(fc2_w, Hmp, Dp))

        vec_rows.append(jnp.stack([
            ones_row,                 # ln1_w
            zeros_row,                # ln1_b
            padvec(qkv_bp, VW),       # qkv_b
            padvec(proj_b, VW),       # proj_b
            ones_row,                 # ls1 (LayerScale gamma)
            ones_row,                 # ln2_w
            zeros_row,                # ln2_b
            padvec(fc1_b, VW),        # fc1_b
            padvec(fc2_b, VW),        # fc2_b
            ones_row,                 # ls2
        ], axis=0))                   # (10, VW)

    params["qkv_w"] = jnp.stack(qkv_ws).astype(jnp.bfloat16)    # (depth, Dp, 3Dp)
    params["proj_w"] = jnp.stack(proj_ws).astype(jnp.bfloat16)  # (depth, Dp, Dp)
    params["fc1_w"] = jnp.stack(fc1_ws).astype(jnp.bfloat16)    # (depth, Dp, Hmp)
    params["fc2_w"] = jnp.stack(fc2_ws).astype(jnp.bfloat16)    # (depth, Hmp, Dp)
    params["vecs"] = jnp.stack(vec_rows)                        # (depth, 10, VW)
    return params


# ----------------------------------------------------------------------------
# the model
# ----------------------------------------------------------------------------
class DINOv2Pallas:
    """Synthetic small-scale DINOv2 with the same forward semantics."""

    def __init__(self, embed_dim=32, depth=4, num_heads=4, mlp_ratio=4,
                 num_trainable_blocks=2, norm_layer=False, return_token=False,
                 img_size=(28, 28), key=jax.random.PRNGKey(0)):
        self.num_channels = embed_dim
        self.num_heads = num_heads
        # num_trainable_blocks only changes the grad split; forward is identical.
        self.num_trainable_blocks = num_trainable_blocks
        self.norm_layer = norm_layer
        self.return_token = return_token
        nH, nW = img_size[0] // PATCH, img_size[1] // PATCH
        self.num_patches = nH * nW
        assert embed_dim % num_heads == 0
        self.params = init_dinov2_params(
            key, embed_dim=embed_dim, depth=depth, num_heads=num_heads,
            mlp_ratio=mlp_ratio, in_chans=3, num_patches=self.num_patches)

    def __call__(self, x):
        p = self.params
        B, C, H, W = x.shape
        # center crop to a multiple of 14 (same arithmetic as the torch module)
        if H % PATCH != 0 or W % PATCH != 0:
            tH, tW = H // PATCH * PATCH, W // PATCH * PATCH
            cl0, cl1 = (H - tH) // 2, (W - tW) // 2
            x = x[:, :, cl0:tH + cl0, cl1:tW + cl1]
        half = x.dtype == jnp.float16
        if half:
            x = x.astype(jnp.float32)
        B, C, H, W = x.shape
        nH, nW = H // PATCH, W // PATCH
        P = nH * nW
        D, Dp, K, Kp = p["D"], p["Dp"], p["K"], p["Kp"]
        # TODO(synk): bicubic pos-embed interpolation for mismatched grids not implemented.
        assert p["pos_embed"].shape[0] == 1 + P

        # im2col glue: (B,C,H,W) -> (B, P, C*14*14), zero-padded to Kp lanes, bf16.
        patches = (x.reshape(B, C, nH, PATCH, nW, PATCH)
                    .transpose(0, 2, 4, 1, 3, 5)
                    .reshape(B, P, K))
        patches = jnp.pad(patches, ((0, 0), (0, 0), (0, Kp - K)))
        patches = patches.astype(jnp.bfloat16)

        tok = _dinov2_forward(
            patches, p["patch_w"], p["patch_b"], p["cls_token"], p["pos_embed"],
            p["norm_w"], p["norm_b"], p["vecs"], p["qkv_w"], p["proj_w"],
            p["fc1_w"], p["fc2_w"],
            num_heads=self.num_heads, real_d=D, apply_norm=self.norm_layer)

        t = tok[:, 0, :D]                                            # [B, D]
        f = tok[:, 1:, :D].reshape(B, nH, nW, D).transpose(0, 3, 1, 2)  # [B, D, nH, nW]
        if half:
            f = f.astype(jnp.float16)
            t = t.astype(jnp.float16)
        if self.return_token:
            return f, t
        return f


if __name__ == "__main__":
    key = jax.random.PRNGKey(0)
    kx, kp = jax.random.split(key)
    # small shapes: B=2, 3 channels, 28x28 (divisible by 14) -> 2x2 patch grid
    x = jax.random.normal(kx, (2, 3, 28, 28), dtype=jnp.float32)

    model = DINOv2Pallas(embed_dim=32, depth=4, num_heads=4, mlp_ratio=4,
                         num_trainable_blocks=2, norm_layer=False,
                         return_token=False, img_size=(28, 28), key=kp)
    f = jax.block_until_ready(model(x))
    assert f.shape == (2, 32, 2, 2), f.shape
    assert f.dtype == jnp.float32
    assert bool(jnp.all(jnp.isfinite(f)))
    print("KERNEL_OK")
</pallas_src>

<mosaic_0001>
module attributes {stable_mosaic.version = 11 : i64} {
  func.func @_dinov2_kernel(%arg0: i32, %arg1: i32, %arg2: memref<1x4x640xbf16, #tpu.memory_space<vmem>>, %arg3: memref<640x128xbf16, #tpu.memory_space<vmem>>, %arg4: memref<1x128xf32, #tpu.memory_space<vmem>>, %arg5: memref<1x128xf32, #tpu.memory_space<vmem>>, %arg6: memref<5x128xf32, #tpu.memory_space<vmem>>, %arg7: memref<1x128xf32, #tpu.memory_space<vmem>>, %arg8: memref<1x128xf32, #tpu.memory_space<vmem>>, %arg9: memref<1x10x384xf32, #tpu.memory_space<vmem>>, %arg10: memref<1x128x384xbf16, #tpu.memory_space<vmem>>, %arg11: memref<1x128x128xbf16, #tpu.memory_space<vmem>>, %arg12: memref<1x128x128xbf16, #tpu.memory_space<vmem>>, %arg13: memref<1x128x128xbf16, #tpu.memory_space<vmem>>, %arg14: memref<1x5x128xf32, #tpu.memory_space<vmem>>) attributes {dimension_semantics = [#tpu.dimension_semantics<parallel>, #tpu.dimension_semantics<arbitrary>], iteration_bounds = array<i64: 2, 4>, scalar_prefetch = 0 : i64, scratch_operands = 0 : i64, tpu.core_type = #tpu.core_type<tc>, window_params = [{transform_indices = @transform_0, window_bounds = array<i64: 1, 4, 640>}, {pipeline_mode = #tpu.pipeline_mode<synchronous>, transform_indices = @transform_1, window_bounds = array<i64: 640, 128>}, {pipeline_mode = #tpu.pipeline_mode<synchronous>, transform_indices = @transform_2, window_bounds = array<i64: 1, 128>}, {pipeline_mode = #tpu.pipeline_mode<synchronous>, transform_indices = @transform_3, window_bounds = array<i64: 1, 128>}, {pipeline_mode = #tpu.pipeline_mode<synchronous>, transform_indices = @transform_4, window_bounds = array<i64: 5, 128>}, {pipeline_mode = #tpu.pipeline_mode<synchronous>, transform_indices = @transform_5, window_bounds = array<i64: 1, 128>}, {pipeline_mode = #tpu.pipeline_mode<synchronous>, transform_indices = @transform_6, window_bounds = array<i64: 1, 128>}, {transform_indices = @transform_7, window_bounds = array<i64: 1, 10, 384>}, {transform_indices = @transform_8, window_bounds = array<i64: 1, 128, 384>}, {transform_indices = @transform_9, window_bounds = array<i64: 1, 128, 128>}, {transform_indices = @transform_10, window_bounds = array<i64: 1, 128, 128>}, {transform_indices = @transform_11, window_bounds = array<i64: 1, 128, 128>}, {transform_indices = @transform_12, window_bounds = array<i64: 1, 5, 128>}]} {
    %0 = tpu.iota {dimensions = array<i32: 1>} : vector<1x128xi32>
    %c32_i32 = arith.constant 32 : i32
    %1 = vector.broadcast %c32_i32 : i32 to vector<1x128xi32>
    %2 = arith.cmpi slt, %0, %1 : vector<1x128xi32>
    %3 = arith.extui %2 : vector<1x128xi1> to vector<1x128xi32>
    %4 = arith.sitofp %3 : vector<1x128xi32> to vector<1x128xf32>
    %c0_i32 = arith.constant 0 : i32
    %5 = arith.cmpi eq, %arg1, %c0_i32 : i32
    %6 = arith.extui %5 : i1 to i32
    %c0_i32_0 = arith.constant 0 : i32
    %7 = arith.cmpi ne, %6, %c0_i32_0 : i32
    scf.if %7 {
      %c0_43 = arith.constant 0 : index
      %c0_44 = arith.constant 0 : index
      %137 = vector.load %arg3[%c0_43, %c0_44] : memref<640x128xbf16, #tpu.memory_space<vmem>>, vector<640x128xbf16>
      %c0_45 = arith.constant 0 : index
      %c0_46 = arith.constant 0 : index
      %c0_47 = arith.constant 0 : index
      %138 = vector.load %arg2[%c0_45, %c0_46, %c0_47] : memref<1x4x640xbf16, #tpu.memory_space<vmem>>, vector<1x4x640xbf16>
      %139 = vector.shape_cast %138 : vector<1x4x640xbf16> to vector<4x640xbf16>
      %cst_48 = arith.constant dense<0.000000e+00> : vector<4x128xf32>
      %140 = tpu.matmul %139, %137, %cst_48 {dimension_numbers = #tpu.dot_dimension_numbers<[1], [0], [0], [1], [0, 0, 1, 1], [], []>} : vector<4x640xbf16>, vector<640x128xbf16>, vector<4x128xf32> -> vector<4x128xf32>
      %c0_49 = arith.constant 0 : index
      %c0_50 = arith.constant 0 : index
      %141 = vector.load %arg4[%c0_49, %c0_50] : memref<1x128xf32, #tpu.memory_space<vmem>>, vector<1x128xf32>
      %142 = vector.broadcast %141 : vector<1x128xf32> to vector<4x128xf32>
      %143 = arith.addf %140, %142 : vector<4x128xf32>
      %c0_51 = arith.constant 0 : index
      %c0_52 = arith.constant 0 : index
      %144 = vector.load %arg5[%c0_51, %c0_52] : memref<1x128xf32, #tpu.memory_space<vmem>>, vector<1x128xf32>
      %145 = tpu.concatenate %144, %143 in 0 : vector<1x128xf32>, vector<4x128xf32> -> vector<5x128xf32>
      %c0_53 = arith.constant 0 : index
      %c0_54 = arith.constant 0 : index
      %146 = vector.load %arg6[%c0_53, %c0_54] : memref<5x128xf32, #tpu.memory_space<vmem>>, vector<5x128xf32>
      %147 = arith.addf %145, %146 : vector<5x128xf32>
      %c0_55 = arith.constant 0 : index
      %c0_56 = arith.constant 0 : index
      %c0_57 = arith.constant 0 : index
      %148 = vector.load %arg14[%c0_55, %c0_56, %c0_57] : memref<1x5x128xf32, #tpu.memory_space<vmem>>, vector<1x5x128xf32>
      %149 = vector.shape_cast %148 : vector<1x5x128xf32> to vector<5x128xf32>
      %150 = vector.shape_cast %147 : vector<5x128xf32> to vector<1x5x128xf32>
      tpu.vector_store %arg14[%c0_55, %c0_56, %c0_57], %150 {strides = array<i32>} : memref<1x5x128xf32, #tpu.memory_space<vmem>>, vector<1x5x128xf32>,
    } else {
    }
    %c0 = arith.constant 0 : index
    %c0_1 = arith.constant 0 : index
    %c0_2 = arith.constant 0 : index
    %8 = vector.load %arg14[%c0, %c0_1, %c0_2] : memref<1x5x128xf32, #tpu.memory_space<vmem>>, vector<1x5x128xf32>
    %9 = vector.shape_cast %8 : vector<1x5x128xf32> to vector<5x128xf32>
    %c0_3 = arith.constant 0 : index
    %c0_4 = arith.constant 0 : index
    %c0_5 = arith.constant 0 : index
    %10 = vector.load %arg9[%c0_3, %c0_4, %c0_5] : memref<1x10x384xf32, #tpu.memory_space<vmem>>, vector<1x10x384xf32>
    %11 = vector.shape_cast %10 : vector<1x10x384xf32> to vector<10x384xf32>
    %12 = vector.extract_strided_slice %11 {offsets = [0, 0], sizes = [1, 128], strides = [1, 1]} : vector<10x384xf32> to vector<1x128xf32>
    %13 = vector.extract_strided_slice %11 {offsets = [1, 0], sizes = [1, 128], strides = [1, 1]} : vector<10x384xf32> to vector<1x128xf32>
    %14 = vector.extract_strided_slice %11 {offsets = [2, 0], sizes = [1, 384], strides = [1, 1]} : vector<10x384xf32> to vector<1x384xf32>
    %15 = vector.extract_strided_slice %11 {offsets = [3, 0], sizes = [1, 128], strides = [1, 1]} : vector<10x384xf32> to vector<1x128xf32>
    %16 = vector.extract_strided_slice %11 {offsets = [4, 0], sizes = [1, 128], strides = [1, 1]} : vector<10x384xf32> to vector<1x128xf32>
    %17 = vector.extract_strided_slice %11 {offsets = [5, 0], sizes = [1, 128], strides = [1, 1]} : vector<10x384xf32> to vector<1x128xf32>
    %18 = vector.extract_strided_slice %11 {offsets = [6, 0], sizes = [1, 128], strides = [1, 1]} : vector<10x384xf32> to vector<1x128xf32>
    %19 = vector.extract_strided_slice %11 {offsets = [7, 0], sizes = [1, 128], strides = [1, 1]} : vector<10x384xf32> to vector<1x128xf32>
    %20 = vector.extract_strided_slice %11 {offsets = [8, 0], sizes = [1, 128], strides = [1, 1]} : vector<10x384xf32> to vector<1x128xf32>
    %21 = vector.extract_strided_slice %11 {offsets = [9, 0], sizes = [1, 128], strides = [1, 1]} : vector<10x384xf32> to vector<1x128xf32>
    %cst = arith.constant dense<0.000000e+00> : vector<5xf32>
    %22 = vector.multi_reduction <add>, %9, %cst [1] : vector<5x128xf32> to vector<5xf32>
    %23 = vector.shape_cast %22 : vector<5xf32> to vector<5x1xf32>
    %cst_6 = arith.constant 3.125000e-02 : f32
    %24 = vector.broadcast %cst_6 : f32 to vector<5x1xf32>
    %25 = arith.mulf %23, %24 : vector<5x1xf32>
    %26 = vector.broadcast %25 : vector<5x1xf32> to vector<5x128xf32>
    %27 = arith.subf %9, %26 : vector<5x128xf32>
    %28 = vector.broadcast %4 : vector<1x128xf32> to vector<5x128xf32>
    %29 = arith.mulf %27, %28 : vector<5x128xf32>
    %30 = arith.mulf %29, %29 : vector<5x128xf32>
    %cst_7 = arith.constant dense<0.000000e+00> : vector<5xf32>
    %31 = vector.multi_reduction <add>, %30, %cst_7 [1] : vector<5x128xf32> to vector<5xf32>
    %32 = vector.shape_cast %31 : vector<5xf32> to vector<5x1xf32>
    %cst_8 = arith.constant 3.125000e-02 : f32
    %33 = vector.broadcast %cst_8 : f32 to vector<5x1xf32>
    %34 = arith.mulf %32, %33 : vector<5x1xf32>
    %cst_9 = arith.constant 9.99999997E-7 : f32
    %35 = vector.broadcast %cst_9 : f32 to vector<5x1xf32>
    %36 = arith.addf %34, %35 : vector<5x1xf32>
    %37 = math.rsqrt %36 : vector<5x1xf32>
    %38 = vector.broadcast %37 : vector<5x1xf32> to vector<5x128xf32>
    %39 = arith.mulf %29, %38 : vector<5x128xf32>
    %40 = vector.broadcast %12 : vector<1x128xf32> to vector<5x128xf32>
    %41 = arith.mulf %39, %40 : vector<5x128xf32>
    %42 = vector.broadcast %13 : vector<1x128xf32> to vector<5x128xf32>
    %43 = arith.addf %41, %42 : vector<5x128xf32>
    %44 = arith.truncf %43 : vector<5x128xf32> to vector<5x128xbf16>
    %c0_10 = arith.constant 0 : index
    %c0_11 = arith.constant 0 : index
    %c0_12 = arith.constant 0 : index
    %45 = vector.load %arg10[%c0_10, %c0_11, %c0_12] : memref<1x128x384xbf16, #tpu.memory_space<vmem>>, vector<1x128x384xbf16>
    %46 = vector.shape_cast %45 : vector<1x128x384xbf16> to vector<128x384xbf16>
    %cst_13 = arith.constant dense<0.000000e+00> : vector<5x384xf32>
    %47 = tpu.matmul %44, %46, %cst_13 {dimension_numbers = #tpu.dot_dimension_numbers<[1], [0], [0], [1], [0, 0, 1, 1], [], []>} : vector<5x128xbf16>, vector<128x384xbf16>, vector<5x384xf32> -> vector<5x384xf32>
    %48 = vector.broadcast %14 : vector<1x384xf32> to vector<5x384xf32>
    %49 = arith.addf %47, %48 : vector<5x384xf32>
    %50 = vector.extract_strided_slice %49 {offsets = [0, 0], sizes = [5, 32], strides = [1, 1]} : vector<5x384xf32> to vector<5x32xf32>
    %cst_14 = arith.constant 0.353553385 : f32
    %51 = vector.broadcast %cst_14 : f32 to vector<5x32xf32>
    %52 = arith.mulf %50, %51 : vector<5x32xf32>
    %53 = vector.shape_cast %52 : vector<5x32xf32> to vector<5x4x8xf32>
    %54 = vector.extract_strided_slice %49 {offsets = [0, 128], sizes = [5, 32], strides = [1, 1]} : vector<5x384xf32> to vector<5x32xf32>
    %55 = vector.shape_cast %54 : vector<5x32xf32> to vector<5x4x8xf32>
    %56 = vector.extract_strided_slice %49 {offsets = [0, 256], sizes = [5, 32], strides = [1, 1]} : vector<5x384xf32> to vector<5x32xf32>
    %57 = vector.shape_cast %56 : vector<5x32xf32> to vector<5x4x8xf32>
    %58 = arith.truncf %53 : vector<5x4x8xf32> to vector<5x4x8xbf16>
    %59 = arith.truncf %55 : vector<5x4x8xf32> to vector<5x4x8xbf16>
    "tpu.trace_start"() <{level = 10 : i32, message = "qhd,khd->hqk"}> : () -> ()
    %cst_15 = arith.constant dense<0.000000e+00> : vector<4x5x5xf32>
    %60 = tpu.matmul %58, %59, %cst_15 {dimension_numbers = #tpu.dot_dimension_numbers<[2], [2], [0], [0], [0, 1, 0, 0, 1, 0], [1], [1]>} : vector<5x4x8xbf16>, vector<5x4x8xbf16>, vector<4x5x5xf32> -> vector<4x5x5xf32>
    "tpu.trace_stop"() : () -> ()
    %cst_16 = arith.constant dense<0xFF800000> : vector<4x5xf32>
    %61 = vector.multi_reduction <maximumf>, %60, %cst_16 [2] : vector<4x5x5xf32> to vector<4x5xf32>
    %62 = vector.shape_cast %61 : vector<4x5xf32> to vector<4x5x1xf32>
    %63 = vector.broadcast %62 : vector<4x5x1xf32> to vector<4x5x5xf32>
    %64 = arith.subf %60, %63 : vector<4x5x5xf32>
    %65 = math.exp %64 : vector<4x5x5xf32>
    %cst_17 = arith.constant dense<0.000000e+00> : vector<4x5xf32>
    %66 = vector.multi_reduction <add>, %65, %cst_17 [2] : vector<4x5x5xf32> to vector<4x5xf32>
    %67 = vector.shape_cast %66 : vector<4x5xf32> to vector<4x5x1xf32>
    %68 = vector.broadcast %67 : vector<4x5x1xf32> to vector<4x5x5xf32>
    %69 = arith.divf %65, %68 : vector<4x5x5xf32>
    %70 = arith.truncf %69 : vector<4x5x5xf32> to vector<4x5x5xbf16>
    %71 = arith.truncf %57 : vector<5x4x8xf32> to vector<5x4x8xbf16>
    "tpu.trace_start"() <{level = 10 : i32, message = "hqk,khd->qhd"}> : () -> ()
    %cst_18 = arith.constant dense<0.000000e+00> : vector<4x8x5xf32>
    %72 = tpu.matmul %71, %70, %cst_18 {dimension_numbers = #tpu.dot_dimension_numbers<[0], [2], [2], [1], [0, 1, 0, 2, 1, 1], [1], [0]>} : vector<5x4x8xbf16>, vector<4x5x5xbf16>, vector<4x8x5xf32> -> vector<4x8x5xf32>
    %73 = tpu.transpose %72, [2, 0, 1] : vector<4x8x5xf32> -> vector<5x4x8xf32>
    "tpu.trace_stop"() : () -> ()
    %74 = vector.shape_cast %73 : vector<5x4x8xf32> to vector<5x32xf32>
    %c0_19 = arith.constant 0 : index
    %c0_20 = arith.constant 0 : index
    %c0_21 = arith.constant 0 : index
    %75 = vector.load %arg11[%c0_19, %c0_20, %c0_21] : memref<1x128x128xbf16, #tpu.memory_space<vmem>>, vector<1x128x128xbf16>
    %76 = vector.shape_cast %75 : vector<1x128x128xbf16> to vector<128x128xbf16>
    %77 = vector.extract_strided_slice %76 {offsets = [0, 0], sizes = [32, 128], strides = [1, 1]} : vector<128x128xbf16> to vector<32x128xbf16>
    %78 = arith.truncf %74 : vector<5x32xf32> to vector<5x32xbf16>
    %cst_22 = arith.constant dense<0.000000e+00> : vector<5x128xf32>
    %79 = tpu.matmul %78, %77, %cst_22 {dimension_numbers = #tpu.dot_dimension_numbers<[1], [0], [0], [1], [0, 0, 1, 1], [], []>} : vector<5x32xbf16>, vector<32x128xbf16>, vector<5x128xf32> -> vector<5x128xf32>
    %80 = vector.broadcast %15 : vector<1x128xf32> to vector<5x128xf32>
    %81 = arith.addf %79, %80 : vector<5x128xf32>
    %82 = vector.broadcast %16 : vector<1x128xf32> to vector<5x128xf32>
    %83 = arith.mulf %82, %81 : vector<5x128xf32>
    %84 = arith.addf %9, %83 : vector<5x128xf32>
    %cst_23 = arith.constant dense<0.000000e+00> : vector<5xf32>
    %85 = vector.multi_reduction <add>, %84, %cst_23 [1] : vector<5x128xf32> to vector<5xf32>
    %86 = vector.shape_cast %85 : vector<5xf32> to vector<5x1xf32>
    %cst_24 = arith.constant 3.125000e-02 : f32
    %87 = vector.broadcast %cst_24 : f32 to vector<5x1xf32>
    %88 = arith.mulf %86, %87 : vector<5x1xf32>
    %89 = vector.broadcast %88 : vector<5x1xf32> to vector<5x128xf32>
    %90 = arith.subf %84, %89 : vector<5x128xf32>
    %91 = vector.broadcast %4 : vector<1x128xf32> to vector<5x128xf32>
    %92 = arith.mulf %90, %91 : vector<5x128xf32>
    %93 = arith.mulf %92, %92 : vector<5x128xf32>
    %cst_25 = arith.constant dense<0.000000e+00> : vector<5xf32>
    %94 = vector.multi_reduction <add>, %93, %cst_25 [1] : vector<5x128xf32> to vector<5xf32>
    %95 = vector.shape_cast %94 : vector<5xf32> to vector<5x1xf32>
    %cst_26 = arith.constant 3.125000e-02 : f32
    %96 = vector.broadcast %cst_26 : f32 to vector<5x1xf32>
    %97 = arith.mulf %95, %96 : vector<5x1xf32>
    %cst_27 = arith.constant 9.99999997E-7 : f32
    %98 = vector.broadcast %cst_27 : f32 to vector<5x1xf32>
    %99 = arith.addf %97, %98 : vector<5x1xf32>
    %100 = math.rsqrt %99 : vector<5x1xf32>
    %101 = vector.broadcast %100 : vector<5x1xf32> to vector<5x128xf32>
    %102 = arith.mulf %92, %101 : vector<5x128xf32>
    %103 = vector.broadcast %17 : vector<1x128xf32> to vector<5x128xf32>
    %104 = arith.mulf %102, %103 : vector<5x128xf32>
    %105 = vector.broadcast %18 : vector<1x128xf32> to vector<5x128xf32>
    %106 = arith.addf %104, %105 : vector<5x128xf32>
    %107 = arith.truncf %106 : vector<5x128xf32> to vector<5x128xbf16>
    %c0_28 = arith.constant 0 : index
    %c0_29 = arith.constant 0 : index
    %c0_30 = arith.constant 0 : index
    %108 = vector.load %arg12[%c0_28, %c0_29, %c0_30] : memref<1x128x128xbf16, #tpu.memory_space<vmem>>, vector<1x128x128xbf16>
    %109 = vector.shape_cast %108 : vector<1x128x128xbf16> to vector<128x128xbf16>
    %cst_31 = arith.constant dense<0.000000e+00> : vector<5x128xf32>
    %110 = tpu.matmul %107, %109, %cst_31 {dimension_numbers = #tpu.dot_dimension_numbers<[1], [0], [0], [1], [0, 0, 1, 1], [], []>} : vector<5x128xbf16>, vector<128x128xbf16>, vector<5x128xf32> -> vector<5x128xf32>
    %111 = vector.broadcast %19 : vector<1x128xf32> to vector<5x128xf32>
    %112 = arith.addf %110, %111 : vector<5x128xf32>
    %cst_32 = arith.constant 5.000000e-01 : f32
    %113 = vector.broadcast %cst_32 : f32 to vector<5x128xf32>
    %114 = arith.mulf %113, %112 : vector<5x128xf32>
    %cst_33 = arith.constant 4.471500e-02 : f32
    %115 = vector.broadcast %cst_33 : f32 to vector<5x128xf32>
    %116 = arith.mulf %115, %112 : vector<5x128xf32>
    %117 = arith.mulf %116, %112 : vector<5x128xf32>
    %118 = arith.mulf %117, %112 : vector<5x128xf32>
    %119 = arith.addf %112, %118 : vector<5x128xf32>
    %cst_34 = arith.constant 0.797884583 : f32
    %120 = vector.broadcast %cst_34 : f32 to vector<5x128xf32>
    %121 = arith.mulf %120, %119 : vector<5x128xf32>
    %122 = math.tanh %121 : vector<5x128xf32>
    %cst_35 = arith.constant 1.000000e+00 : f32
    %123 = vector.broadcast %cst_35 : f32 to vector<5x128xf32>
    %124 = arith.addf %123, %122 : vector<5x128xf32>
    %125 = arith.mulf %114, %124 : vector<5x128xf32>
    %126 = arith.truncf %125 : vector<5x128xf32> to vector<5x128xbf16>
    %c0_36 = arith.constant 0 : index
    %c0_37 = arith.constant 0 : index
    %c0_38 = arith.constant 0 : index
    %127 = vector.load %arg13[%c0_36, %c0_37, %c0_38] : memref<1x128x128xbf16, #tpu.memory_space<vmem>>, vector<1x128x128xbf16>
    %128 = vector.shape_cast %127 : vector<1x128x128xbf16> to vector<128x128xbf16>
    %cst_39 = arith.constant dense<0.000000e+00> : vector<5x128xf32>
    %129 = tpu.matmul %126, %128, %cst_39 {dimension_numbers = #tpu.dot_dimension_numbers<[1], [0], [0], [1], [0, 0, 1, 1], [], []>} : vector<5x128xbf16>, vector<128x128xbf16>, vector<5x128xf32> -> vector<5x128xf32>
    %130 = vector.broadcast %20 : vector<1x128xf32> to vector<5x128xf32>
    %131 = arith.addf %129, %130 : vector<5x128xf32>
    %132 = vector.broadcast %21 : vector<1x128xf32> to vector<5x128xf32>
    %133 = arith.mulf %132, %131 : vector<5x128xf32>
    %134 = arith.addf %84, %133 : vector<5x128xf32>
    %135 = vector.shape_cast %134 : vector<5x128xf32> to vector<1x5x128xf32>
    %c0_40 = arith.constant 0 : index
    %c0_41 = arith.constant 0 : index
    %c0_42 = arith.constant 0 : index
    %136 = vector.load %arg14[%c0_40, %c0_41, %c0_42] : memref<1x5x128xf32, #tpu.memory_space<vmem>>, vector<1x5x128xf32>
    tpu.vector_store %arg14[%c0_40, %c0_41, %c0_42], %135 {strides = array<i32>} : memref<1x5x128xf32, #tpu.memory_space<vmem>>, vector<1x5x128xf32>,
    return
  }
  func.func @transform_0(%arg0: i32, %arg1: i32) -> (i32, i32, i32) {
    %c0_i32 = arith.constant 0 : i32
    %c0_i32_0 = arith.constant 0 : i32
    %c0_i32_1 = arith.constant 0 : i32
    return %arg0, %c0_i32, %c0_i32_0 : i32, i32, i32
  }
  func.func @transform_1(%arg0: i32, %arg1: i32) -> (i32, i32) {
    %c0_i32 = arith.constant 0 : i32
    %c0_i32_0 = arith.constant 0 : i32
    %c0_i32_1 = arith.constant 0 : i32
    return %c0_i32, %c0_i32_0 : i32, i32
  }
  func.func @transform_2(%arg0: i32, %arg1: i32) -> (i32, i32) {
    %c0_i32 = arith.constant 0 : i32
    %c0_i32_0 = arith.constant 0 : i32
    %c0_i32_1 = arith.constant 0 : i32
    return %c0_i32, %c0_i32_0 : i32, i32
  }
  func.func @transform_3(%arg0: i32, %arg1: i32) -> (i32, i32) {
    %c0_i32 = arith.constant 0 : i32
    %c0_i32_0 = arith.constant 0 : i32
    %c0_i32_1 = arith.constant 0 : i32
    return %c0_i32, %c0_i32_0 : i32, i32
  }
  func.func @transform_4(%arg0: i32, %arg1: i32) -> (i32, i32) {
    %c0_i32 = arith.constant 0 : i32
    %c0_i32_0 = arith.constant 0 : i32
    %c0_i32_1 = arith.constant 0 : i32
    return %c0_i32, %c0_i32_0 : i32, i32
  }
  func.func @transform_5(%arg0: i32, %arg1: i32) -> (i32, i32) {
    %c0_i32 = arith.constant 0 : i32
    %c0_i32_0 = arith.constant 0 : i32
    %c0_i32_1 = arith.constant 0 : i32
    return %c0_i32, %c0_i32_0 : i32, i32
  }
  func.func @transform_6(%arg0: i32, %arg1: i32) -> (i32, i32) {
    %c0_i32 = arith.constant 0 : i32
    %c0_i32_0 = arith.constant 0 : i32
    %c0_i32_1 = arith.constant 0 : i32
    return %c0_i32, %c0_i32_0 : i32, i32
  }
  func.func @transform_7(%arg0: i32, %arg1: i32) -> (i32, i32, i32) {
    %c0_i32 = arith.constant 0 : i32
    %c0_i32_0 = arith.constant 0 : i32
    %c0_i32_1 = arith.constant 0 : i32
    return %arg1, %c0_i32, %c0_i32_0 : i32, i32, i32
  }
  func.func @transform_8(%arg0: i32, %arg1: i32) -> (i32, i32, i32) {
    %c0_i32 = arith.constant 0 : i32
    %c0_i32_0 = arith.constant 0 : i32
    %c0_i32_1 = arith.constant 0 : i32
    return %arg1, %c0_i32, %c0_i32_0 : i32, i32, i32
  }
  func.func @transform_9(%arg0: i32, %arg1: i32) -> (i32, i32, i32) {
    %c0_i32 = arith.constant 0 : i32
    %c0_i32_0 = arith.constant 0 : i32
    %c0_i32_1 = arith.constant 0 : i32
    return %arg1, %c0_i32, %c0_i32_0 : i32, i32, i32
  }
  func.func @transform_10(%arg0: i32, %arg1: i32) -> (i32, i32, i32) {
    %c0_i32 = arith.constant 0 : i32
    %c0_i32_0 = arith.constant 0 : i32
    %c0_i32_1 = arith.constant 0 : i32
    return %arg1, %c0_i32, %c0_i32_0 : i32, i32, i32
  }
  func.func @transform_11(%arg0: i32, %arg1: i32) -> (i32, i32, i32) {
    %c0_i32 = arith.constant 0 : i32
    %c0_i32_0 = arith.constant 0 : i32
    %c0_i32_1 = arith.constant 0 : i32
    return %arg1, %c0_i32, %c0_i32_0 : i32, i32, i32
  }
  func.func @transform_12(%arg0: i32, %arg1: i32) -> (i32, i32, i32) {
    %c0_i32 = arith.constant 0 : i32
    %c0_i32_0 = arith.constant 0 : i32
    %c0_i32_1 = arith.constant 0 : i32
    return %arg0, %c0_i32, %c0_i32_0 : i32, i32, i32
  }
}

</mosaic_0001>

<llo_original>
// kernel: tpu_custom_call.1
$region0: #{tpu_custom_call.1}
  #allocation0 [shape = 'u32[]', space=smem, size = 0x4, offset = 0x4, fixed_abs, tag = 'smem constant byte address 0x4 - core index']
  #allocation1 [shape = 'u32[144,128]{1,0:T(1,128)}', space=vmem, size = 0x12000, scoped, tag = 'internal scratch']
  %s0 = inlined_call_operand.vmem [shape: bf16[2,4,640], index: 0, kind: input, shape index: {}]
  %s1 = inlined_call_operand.hbm [shape: bf16[640,128], index: 1, kind: input, shape index: {}]
  %s2 = inlined_call_operand.vmem [shape: f32[1,128], index: 2, kind: input, shape index: {}]
  %s3 = inlined_call_operand.vmem [shape: f32[1,128], index: 3, kind: input, shape index: {}]
  %s4 = inlined_call_operand.vmem [shape: f32[5,128], index: 4, kind: input, shape index: {}]
  %s5 = inlined_call_operand.vmem [shape: f32[1,128], index: 5, kind: input, shape index: {}]
  %s6 = inlined_call_operand.vmem [shape: f32[1,128], index: 6, kind: input, shape index: {}]
  %s7 = inlined_call_operand.vmem [shape: f32[4,10,384], index: 7, kind: input, shape index: {}]
  %s8 = inlined_call_operand.hbm [shape: bf16[4,128,384], index: 8, kind: input, shape index: {}]
  %s9 = inlined_call_operand.vmem [shape: bf16[4,128,128], index: 9, kind: input, shape index: {}]
  %s10 = inlined_call_operand.hbm [shape: bf16[4,128,128], index: 10, kind: input, shape index: {}]
  %s11 = inlined_call_operand.hbm [shape: bf16[4,128,128], index: 11, kind: input, shape index: {}]
  %s12 = inlined_call_operand.vmem [shape: f32[2,5,128], index: 12, kind: output, shape index: {}]
  %s13 = sld [smem:[#allocation0]]
  $region101: #{tpu_custom_call.1} parent=0
    _
  %s15 = ssub.s32 1, %s13
  %s16 = scalar_select 0, %s15, %s13
  $region1: #{tpu_custom_call.1} parent=0
    #allocation2 [shape = 'u8[163840]{0}', space=vmem, size = 0x28000, scoped, tag = 'input window, operand 1, single buffered']
    #allocation3 [shape = 's32[2]{0}', space=sflag, size = 0x8, scoped, tag = 'scoped memory for tpu_custom_call.1']
    #allocation4 [shape = 'u8[196608]{0}', space=vmem, size = 0x30000, scoped, tag = 'input window, operand 8']
    #allocation5 [shape = 's32[2]{0}', space=sflag, size = 0x8, scoped, tag = 'scoped memory for tpu_custom_call.1']
    #allocation6 [shape = 'u8[65536]{0}', space=vmem, size = 0x10000, scoped, tag = 'input window, operand 10']
    #allocation7 [shape = 'u8[65536]{0}', space=vmem, size = 0x10000, scoped, tag = 'input window, operand 11']
    #allocation8 [shape = 's32[2]{0}', space=sflag, size = 0x8, scoped, tag = 'scoped memory for tpu_custom_call.1']
    %17 = vsyncpa [#allocation3], 0
    %18 = vsyncpa [#allocation5], 0
    %s19 = scalar_lea.sflag [#allocation5], 1
    %20 = vsyncpa %s19, 0
    %21 = vsyncpa [#allocation8], 0
    %s22 = scalar_lea.sflag [#allocation8], 1
    %23 = vsyncpa %s22, 0
    loop: start=0, step=1, limit=10
    $region2: #{tpu_custom_call.1} parent=1 // loop_pre_header
      _
    $region3: #{tpu_custom_call.1} parent=1 // loop_header
      %s25 = sphi 0, %s29
      %p26 = scmp.ge.s32.totalorder %s25, 10
      %s32 = sphi 0, %s44
      %s33 = sphi 0, %s40
      %s34 = sphi 0, %s32
      %s35 = sphi 0, %s33
      %s36 = sphi 0, %s34
      %s37 = sphi 0, %s35
      %s47 = sphi 0, %s49
      %s50 = sphi 0, %s47
      %s51 = sphi 0, %s50
      %s67 = sphi 0, %s51
      %s71 = sphi 0, %s71
      %s73 = sphi 0, %s71
      %s74 = sphi 0, %s73
      %s88 = sphi 0, %s74
      %s92 = sphi 0, %s92
      %s94 = sphi 0, %s92
      %s95 = sphi 0, %s94
      %s109 = sphi 0, %s95
      %s113 = sphi 0, %s113
      %s115 = sphi 0, %s113
      %s116 = sphi 0, %s115
      %s130 = sphi 0, %s116
      %s134 = sphi 0, %s134
      %s136 = sphi 0, %s134
      %s137 = sphi 0, %s136
      %s151 = sphi 0, %s137
      %s155 = sphi 0, %s155
      %s157 = sphi 0, %s155
      %s158 = sphi 0, %s157
      %s172 = sphi 0, %s158
      %s176 = sphi 0, %s176
      %s178 = sphi 0, %s176
      %s179 = sphi 0, %s178
      %s193 = sphi 0, %s179
      %s199 = sphi 0, %s201
      %s202 = sphi 0, %s199
      %s203 = sphi 0, %s202
      %s219 = sphi 0, %s203
      %s225 = sphi 0, %s227
      %s228 = sphi 0, %s225
      %s229 = sphi 0, %s228
      %s245 = sphi 0, %s229
      %s251 = sphi 0, %s253
      %s254 = sphi 0, %s251
      %s255 = sphi 0, %s254
      %s271 = sphi 0, %s255
      %s277 = sphi 0, %s279
      %s280 = sphi 0, %s277
      %s281 = sphi 0, %s280
      %s297 = sphi 0, %s281
      %s303 = sphi 0, %s305
      %s306 = sphi 0, %s303
      %s307 = sphi 0, %s306
      %s323 = sphi 0, %s307
      %s329 = sphi 0, %s331
      %s332 = sphi 0, %s329
      %s333 = sphi 0, %s332
      %s349 = sphi 0, %s333
    $region4: #{tpu_custom_call.1} parent=1 // loop_header_branch
      %28 = sbr.rel (%p26) target = $region8
    $region5: #{tpu_custom_call.1} parent=1 // loop_body
      %s30 = ssub.s32 %s25, 1
      %s31 = ssub.s32 %s25, 2
      %s38 = sadd.s32 1, %s33
      %p39 = scmp.ge.s32.totalorder %s38, 4
      %s40 = scalar_select %p39, 0, %s38
      %s41 = sadd.s32 1, %s32
      %s42 = scalar_select %p39, %s41, %s32
      %p43 = scmp.ge.s32.totalorder %s42, 2
      %s44 = scalar_select %p43, 0, %s42
      %s45 = ssub.s32 %s32, %s44
      %p46 = scmp.eq.s32.totalorder %s45, 0
      %s48 = sadd.s32 %s47, 1
      %s49 = scalar_select %p46, %s47, %s48
      %p52 = pneg %p46
      %p53 = scmp.eq.s32.totalorder %s25, 7
      %p54 = por %p52, %p53
      %p55 = scmp.ne.s32.totalorder %s47, %s50
      %p56 = scmp.eq.s32.totalorder %s25, 0
      %p57 = por %p55, %p56
      %p58 = scmp.ne.s32.totalorder %s47, %s50
      %p59 = scmp.eq.s32.totalorder %s30, 7
      %p60 = por %p58, %p59
      %p61 = scmp.ne.s32.totalorder %s50, %s51
      %p62 = scmp.eq.s32.totalorder %s30, 0
      %p63 = por %p61, %p62
      %p64 = scmp.ne.s32.totalorder %s50, %s51
      %p65 = scmp.eq.s32.totalorder %s31, 7
      %p66 = por %p64, %p65
      %p68 = scmp.ne.s32.totalorder %s51, %s67
      %p69 = scmp.eq.s32.totalorder %s31, 0
      %p70 = por %p68, %p69
      %s72 = sadd.s32 %s71, 1
      %p75 = scmp.eq.s32.totalorder %s25, 7
      %p76 = scmp.ne.s32.totalorder %s71, %s73
      %p77 = scmp.eq.s32.totalorder %s25, 0
      %p78 = por %p76, %p77
      %p79 = scmp.ne.s32.totalorder %s71, %s73
      %p80 = scmp.eq.s32.totalorder %s30, 7
      %p81 = por %p79, %p80
      %p82 = scmp.ne.s32.totalorder %s73, %s74
      %p83 = scmp.eq.s32.totalorder %s30, 0
      %p84 = por %p82, %p83
      %p85 = scmp.ne.s32.totalorder %s73, %s74
      %p86 = scmp.eq.s32.totalorder %s31, 7
      %p87 = por %p85, %p86
      %p89 = scmp.ne.s32.totalorder %s74, %s88
      %p90 = scmp.eq.s32.totalorder %s31, 0
      %p91 = por %p89, %p90
      %s93 = sadd.s32 %s92, 1
      %p96 = scmp.eq.s32.totalorder %s25, 7
      %p97 = scmp.ne.s32.totalorder %s92, %s94
      %p98 = scmp.eq.s32.totalorder %s25, 0
      %p99 = por %p97, %p98
      %p100 = scmp.ne.s32.totalorder %s92, %s94
      %p101 = scmp.eq.s32.totalorder %s30, 7
      %p102 = por %p100, %p101
      %p103 = scmp.ne.s32.totalorder %s94, %s95
      %p104 = scmp.eq.s32.totalorder %s30, 0
      %p105 = por %p103, %p104
      %p106 = scmp.ne.s32.totalorder %s94, %s95
      %p107 = scmp.eq.s32.totalorder %s31, 7
      %p108 = por %p106, %p107
      %p110 = scmp.ne.s32.totalorder %s95, %s109
      %p111 = scmp.eq.s32.totalorder %s31, 0
      %p112 = por %p110, %p111
      %s114 = sadd.s32 %s113, 1
      %p117 = scmp.eq.s32.totalorder %s25, 7
      %p118 = scmp.ne.s32.totalorder %s113, %s115
      %p119 = scmp.eq.s32.totalorder %s25, 0
      %p120 = por %p118, %p119
      %p121 = scmp.ne.s32.totalorder %s113, %s115
      %p122 = scmp.eq.s32.totalorder %s30, 7
      %p123 = por %p121, %p122
      %p124 = scmp.ne.s32.totalorder %s115, %s116
      %p125 = scmp.eq.s32.totalorder %s30, 0
      %p126 = por %p124, %p125
      %p127 = scmp.ne.s32.totalorder %s115, %s116
      %p128 = scmp.eq.s32.totalorder %s31, 7
      %p129 = por %p127, %p128
      %p131 = scmp.ne.s32.totalorder %s116, %s130
      %p132 = scmp.eq.s32.totalorder %s31, 0
      %p133 = por %p131, %p132
      %s135 = sadd.s32 %s134, 1
      %p138 = scmp.eq.s32.totalorder %s25, 7
      %p139 = scmp.ne.s32.totalorder %s134, %s136
      %p140 = scmp.eq.s32.totalorder %s25, 0
      %p141 = por %p139, %p140
      %p142 = scmp.ne.s32.totalorder %s134, %s136
      %p143 = scmp.eq.s32.totalorder %s30, 7
      %p144 = por %p142, %p143
      %p145 = scmp.ne.s32.totalorder %s136, %s137
      %p146 = scmp.eq.s32.totalorder %s30, 0
      %p147 = por %p145, %p146
      %p148 = scmp.ne.s32.totalorder %s136, %s137
      %p149 = scmp.eq.s32.totalorder %s31, 7
      %p150 = por %p148, %p149
      %p152 = scmp.ne.s32.totalorder %s137, %s151
      %p153 = scmp.eq.s32.totalorder %s31, 0
      %p154 = por %p152, %p153
      %s156 = sadd.s32 %s155, 1
      %p159 = scmp.eq.s32.totalorder %s25, 7
      %p160 = scmp.ne.s32.totalorder %s155, %s157
      %p161 = scmp.eq.s32.totalorder %s25, 0
      %p162 = por %p160, %p161
      %p163 = scmp.ne.s32.totalorder %s155, %s157
      %p164 = scmp.eq.s32.totalorder %s30, 7
      %p165 = por %p163, %p164
      %p166 = scmp.ne.s32.totalorder %s157, %s158
      %p167 = scmp.eq.s32.totalorder %s30, 0
      %p168 = por %p166, %p167
      %p169 = scmp.ne.s32.totalorder %s157, %s158
      %p170 = scmp.eq.s32.totalorder %s31, 7
      %p171 = por %p169, %p170
      %p173 = scmp.ne.s32.totalorder %s158, %s172
      %p174 = scmp.eq.s32.totalorder %s31, 0
      %p175 = por %p173, %p174
      %s177 = sadd.s32 %s176, 1
      %p180 = scmp.eq.s32.totalorder %s25, 7
      %p181 = scmp.ne.s32.totalorder %s176, %s178
      %p182 = scmp.eq.s32.totalorder %s25, 0
      %p183 = por %p181, %p182
      %p184 = scmp.ne.s32.totalorder %s176, %s178
      %p185 = scmp.eq.s32.totalorder %s30, 7
      %p186 = por %p184, %p185
      %p187 = scmp.ne.s32.totalorder %s178, %s179
      %p188 = scmp.eq.s32.totalorder %s30, 0
      %p189 = por %p187, %p188
      %p190 = scmp.ne.s32.totalorder %s178, %s179
      %p191 = scmp.eq.s32.totalorder %s31, 7
      %p192 = por %p190, %p191
      %p194 = scmp.ne.s32.totalorder %s179, %s193
      %p195 = scmp.eq.s32.totalorder %s31, 0
      %p196 = por %p194, %p195
      %s197 = ssub.s32 %s33, %s40
      %p198 = scmp.eq.s32.totalorder %s197, 0
      %s200 = sadd.s32 %s199, 1
      %s201 = scalar_select %p198, %s199, %s200
      %p204 = pneg %p198
      %p205 = scmp.eq.s32.totalorder %s25, 7
      %p206 = por %p204, %p205
      %p207 = scmp.ne.s32.totalorder %s199, %s202
      %p208 = scmp.eq.s32.totalorder %s25, 0
      %p209 = por %p207, %p208
      %p210 = scmp.ne.s32.totalorder %s199, %s202
      %p211 = scmp.eq.s32.totalorder %s30, 7
      %p212 = por %p210, %p211
      %p213 = scmp.ne.s32.totalorder %s202, %s203
      %p214 = scmp.eq.s32.totalorder %s30, 0
      %p215 = por %p213, %p214
      %p216 = scmp.ne.s32.totalorder %s202, %s203
      %p217 = scmp.eq.s32.totalorder %s31, 7
      %p218 = por %p216, %p217
      %p220 = scmp.ne.s32.totalorder %s203, %s219
      %p221 = scmp.eq.s32.totalorder %s31, 0
      %p222 = por %p220, %p221
      %s223 = ssub.s32 %s33, %s40
      %p224 = scmp.eq.s32.totalorder %s223, 0
      %s226 = sadd.s32 %s225, 1
      %s227 = scalar_select %p224, %s225, %s226
      %p230 = pneg %p224
      %p231 = scmp.eq.s32.totalorder %s25, 7
      %p232 = por %p230, %p231
      %p233 = scmp.ne.s32.totalorder %s225, %s228
      %p234 = scmp.eq.s32.totalorder %s25, 0
      %p235 = por %p233, %p234
      %p236 = scmp.ne.s32.totalorder %s225, %s228
      %p237 = scmp.eq.s32.totalorder %s30, 7
      %p238 = por %p236, %p237
      %p239 = scmp.ne.s32.totalorder %s228, %s229
      %p240 = scmp.eq.s32.totalorder %s30, 0
      %p241 = por %p239, %p240
      %p242 = scmp.ne.s32.totalorder %s228, %s229
      %p243 = scmp.eq.s32.totalorder %s31, 7
      %p244 = por %p242, %p243
      %p246 = scmp.ne.s32.totalorder %s229, %s245
      %p247 = scmp.eq.s32.totalorder %s31, 0
      %p248 = por %p246, %p247
      %s249 = ssub.s32 %s33, %s40
      %p250 = scmp.eq.s32.totalorder %s249, 0
      %s252 = sadd.s32 %s251, 1
      %s253 = scalar_select %p250, %s251, %s252
      %p256 = pneg %p250
      %p257 = scmp.eq.s32.totalorder %s25, 7
      %p258 = por %p256, %p257
      %p259 = scmp.ne.s32.totalorder %s251, %s254
      %p260 = scmp.eq.s32.totalorder %s25, 0
      %p261 = por %p259, %p260
      %p262 = scmp.ne.s32.totalorder %s251, %s254
      %p263 = scmp.eq.s32.totalorder %s30, 7
      %p264 = por %p262, %p263
      %p265 = scmp.ne.s32.totalorder %s254, %s255
      %p266 = scmp.eq.s32.totalorder %s30, 0
      %p267 = por %p265, %p266
      %p268 = scmp.ne.s32.totalorder %s254, %s255
      %p269 = scmp.eq.s32.totalorder %s31, 7
      %p270 = por %p268, %p269
      %p272 = scmp.ne.s32.totalorder %s255, %s271
      %p273 = scmp.eq.s32.totalorder %s31, 0
      %p274 = por %p272, %p273
      %s275 = ssub.s32 %s33, %s40
      %p276 = scmp.eq.s32.totalorder %s275, 0
      %s278 = sadd.s32 %s277, 1
      %s279 = scalar_select %p276, %s277, %s278
      %p282 = pneg %p276
      %p283 = scmp.eq.s32.totalorder %s25, 7
      %p284 = por %p282, %p283
      %p285 = scmp.ne.s32.totalorder %s277, %s280
      %p286 = scmp.eq.s32.totalorder %s25, 0
      %p287 = por %p285, %p286
      %p288 = scmp.ne.s32.totalorder %s277, %s280
      %p289 = scmp.eq.s32.totalorder %s30, 7
      %p290 = por %p288, %p289
      %p291 = scmp.ne.s32.totalorder %s280, %s281
      %p292 = scmp.eq.s32.totalorder %s30, 0
      %p293 = por %p291, %p292
      %p294 = scmp.ne.s32.totalorder %s280, %s281
      %p295 = scmp.eq.s32.totalorder %s31, 7
      %p296 = por %p294, %p295
      %p298 = scmp.ne.s32.totalorder %s281, %s297
      %p299 = scmp.eq.s32.totalorder %s31, 0
      %p300 = por %p298, %p299
      %s301 = ssub.s32 %s33, %s40
      %p302 = scmp.eq.s32.totalorder %s301, 0
      %s304 = sadd.s32 %s303, 1
      %s305 = scalar_select %p302, %s303, %s304
      %p308 = pneg %p302
      %p309 = scmp.eq.s32.totalorder %s25, 7
      %p310 = por %p308, %p309
      %p311 = scmp.ne.s32.totalorder %s303, %s306
      %p312 = scmp.eq.s32.totalorder %s25, 0
      %p313 = por %p311, %p312
      %p314 = scmp.ne.s32.totalorder %s303, %s306
      %p315 = scmp.eq.s32.totalorder %s30, 7
      %p316 = por %p314, %p315
      %p317 = scmp.ne.s32.totalorder %s306, %s307
      %p318 = scmp.eq.s32.totalorder %s30, 0
      %p319 = por %p317, %p318
      %p320 = scmp.ne.s32.totalorder %s306, %s307
      %p321 = scmp.eq.s32.totalorder %s31, 7
      %p322 = por %p320, %p321
      %p324 = scmp.ne.s32.totalorder %s307, %s323
      %p325 = scmp.eq.s32.totalorder %s31, 0
      %p326 = por %p324, %p325
      %s327 = ssub.s32 %s32, %s44
      %p328 = scmp.eq.s32.totalorder %s327, 0
      %s330 = sadd.s32 %s329, 1
      %s331 = scalar_select %p328, %s329, %s330
      %p334 = pneg %p328
      %p335 = scmp.eq.s32.totalorder %s25, 7
      %p336 = por %p334, %p335
      %p337 = scmp.ne.s32.totalorder %s329, %s332
      %p338 = scmp.eq.s32.totalorder %s25, 0
      %p339 = por %p337, %p338
      %p340 = scmp.ne.s32.totalorder %s329, %s332
      %p341 = scmp.eq.s32.totalorder %s30, 7
      %p342 = por %p340, %p341
      %p343 = scmp.ne.s32.totalorder %s332, %s333
      %p344 = scmp.eq.s32.totalorder %s30, 0
      %p345 = por %p343, %p344
      %p346 = scmp.ne.s32.totalorder %s332, %s333
      %p347 = scmp.eq.s32.totalorder %s31, 7
      %p348 = por %p346, %p347
      %p350 = scmp.ne.s32.totalorder %s333, %s349
      %p351 = scmp.eq.s32.totalorder %s31, 0
      %p352 = por %p350, %p351
      %p353 = scmp.le.s32.totalorder 1, %s25
      %p354 = scmp.lt.s32.totalorder %s25, 9
      %p355 = pnand %p353, %p354
      %p356 = pneg %p355
      // Predicated region
      $region9: #{tpu_custom_call.1} parent=5 // pred_check
        _
      $region10: #{tpu_custom_call.1} parent=5 // pred_check_branch
        %358 = sbr.rel (%p355) target = $region12
      $region11: #{tpu_custom_call.1} parent=5 // pred_region
        %s359 = ssub.s32 %s25, 1
        // Predicated region
        $region13: #{tpu_custom_call.1} parent=11 // pred_check
          %p360 = pneg %p84
        $region14: #{tpu_custom_call.1} parent=11 // pred_check_branch
          %362 = sbr.rel (%p360) target = $region16
        $region15: #{tpu_custom_call.1} parent=11 // pred_region
          %s364 = ssub.s32 5120, 5120
          %365 = vsyncadd [#allocation3], %s364
          %s366 = sshll.u32 [#allocation2], 4
          %s367 = int_to_ptr.vmem [resolvable:$true] %s366
          %372 = dma.hbm_to_vmem [thread:$0]  %s1, 5120, %s367, [#allocation3], 64, 64, 4
        $region16: #{tpu_custom_call.1} parent=11 // pred_fallthru
          _
        // Predicated region
        $region17: #{tpu_custom_call.1} parent=11 // pred_check
          %p373 = pneg %p105
        $region18: #{tpu_custom_call.1} parent=11 // pred_check_branch
          %375 = sbr.rel (%p373) target = $region20
        $region19: #{tpu_custom_call.1} parent=11 // pred_region
          _
        $region20: #{tpu_custom_call.1} parent=11 // pred_fallthru
          _
        // Predicated region
        $region21: #{tpu_custom_call.1} parent=11 // pred_check
          %p376 = pneg %p126
        $region22: #{tpu_custom_call.1} parent=11 // pred_check_branch
          %378 = sbr.rel (%p376) target = $region24
        $region23: #{tpu_custom_call.1} parent=11 // pred_region
          _
        $region24: #{tpu_custom_call.1} parent=11 // pred_fallthru
          _
        // Predicated region
        $region25: #{tpu_custom_call.1} parent=11 // pred_check
          %p379 = pneg %p147
        $region26: #{tpu_custom_call.1} parent=11 // pred_check_branch
          %381 = sbr.rel (%p379) target = $region28
        $region27: #{tpu_custom_call.1} parent=11 // pred_region
          _
        $region28: #{tpu_custom_call.1} parent=11 // pred_fallthru
          _
        // Predicated region
        $region29: #{tpu_custom_call.1} parent=11 // pred_check
          %p382 = pneg %p168
        $region30: #{tpu_custom_call.1} parent=11 // pred_check_branch
          %384 = sbr.rel (%p382) target = $region32
        $region31: #{tpu_custom_call.1} parent=11 // pred_region
          _
        $region32: #{tpu_custom_call.1} parent=11 // pred_fallthru
          _
        // Predicated region
        $region33: #{tpu_custom_call.1} parent=11 // pred_check
          %p385 = pneg %p189
        $region34: #{tpu_custom_call.1} parent=11 // pred_check_branch
          %387 = sbr.rel (%p385) target = $region36
        $region35: #{tpu_custom_call.1} parent=11 // pred_region
          _
        $region36: #{tpu_custom_call.1} parent=11 // pred_fallthru
          _
      $region12: #{tpu_custom_call.1} parent=5 // pred_fallthru
        _
      %p388 = scmp.lt.s32.totalorder %s25, 8
      // Predicated region
      $region37: #{tpu_custom_call.1} parent=5 // pred_check
        %p389 = pneg %p388
      $region38: #{tpu_custom_call.1} parent=5 // pred_check_branch
        %391 = sbr.rel (%p389) target = $region40
      $region39: #{tpu_custom_call.1} parent=5 // pred_region
        // Predicated region
        $region41: #{tpu_custom_call.1} parent=39 // pred_check
          %p392 = pneg %p57
        $region42: #{tpu_custom_call.1} parent=39 // pred_check_branch
          %394 = sbr.rel (%p392) target = $region44
        $region43: #{tpu_custom_call.1} parent=39 // pred_region
          %p395 = scmp.lt.s32.totalorder %s32, 1
          %s396 = scalar_select %p395, %s32, 1
          %s397 = smul.addr %s396, 5
          %s398 = smul.addr %s397, 2
          %s399 = scalar_lea.vmem %s0, %s398
        $region44: #{tpu_custom_call.1} parent=39 // pred_fallthru
          _
        // Predicated region
        $region45: #{tpu_custom_call.1} parent=39 // pred_check
          %p400 = pneg %p209
        $region46: #{tpu_custom_call.1} parent=39 // pred_check_branch
          %402 = sbr.rel (%p400) target = $region48
        $region47: #{tpu_custom_call.1} parent=39 // pred_region
          %p403 = scmp.lt.s32.totalorder %s33, 3
          %s404 = scalar_select %p403, %s33, 3
          %s405 = smul.addr %s404, 6
          %s406 = smul.addr %s405, 8
          %s407 = scalar_lea.vmem %s7, %s406
        $region48: #{tpu_custom_call.1} parent=39 // pred_fallthru
          _
        // Predicated region
        $region49: #{tpu_custom_call.1} parent=39 // pred_check
          %p408 = pneg %p235
        $region50: #{tpu_custom_call.1} parent=39 // pred_check_branch
          %410 = sbr.rel (%p408) target = $region52
        $region51: #{tpu_custom_call.1} parent=39 // pred_region
          %s411 = sand.u32 %s25, 1
          %s412 = scalar_lea.sflag [#allocation5], %s411
          %s413 = sand.u32 %s225, 1
          %s414 = smul.addr %s413, 192
          %s415 = scalar_lea.vmem [#allocation4], %s414
          %s417 = ssub.s32 3072, 3072
          %418 = vsyncadd %s412, %s417
          %s419 = smul.addr %s33, 48
          %s420 = smul.addr %s419, 64
          %s421 = scalar_lea.hbm %s8, %s420
          %s422 = sshll.u32 %s415, 4
          %s423 = int_to_ptr.vmem [resolvable:$true] %s422
          %428 = dma.hbm_to_vmem [thread:$0]  %s421, 3072, %s423, %s412, 192, 192, 12
        $region52: #{tpu_custom_call.1} parent=39 // pred_fallthru
          _
        // Predicated region
        $region53: #{tpu_custom_call.1} parent=39 // pred_check
          %p429 = pneg %p261
        $region54: #{tpu_custom_call.1} parent=39 // pred_check_branch
          %431 = sbr.rel (%p429) target = $region56
        $region55: #{tpu_custom_call.1} parent=39 // pred_region
          %p432 = scmp.lt.s32.totalorder %s33, 3
          %s433 = scalar_select %p432, %s33, 3
          %s434 = smul.addr %s433, 16
          %s435 = smul.addr %s434, 4
          %s436 = scalar_lea.vmem %s9, %s435
        $region56: #{tpu_custom_call.1} parent=39 // pred_fallthru
          _
        // Predicated region
        $region57: #{tpu_custom_call.1} parent=39 // pred_check
          %p437 = pneg %p287
        $region58: #{tpu_custom_call.1} parent=39 // pred_check_branch
          %439 = sbr.rel (%p437) target = $region60
        $region59: #{tpu_custom_call.1} parent=39 // pred_region
          %s440 = sand.u32 %s25, 1
          %s441 = scalar_lea.sflag [#allocation5], %s440
          %s442 = sand.u32 %s277, 1
          %s443 = smul.addr %s442, 64
          %s444 = scalar_lea.vmem [#allocation6], %s443
          %s446 = ssub.s32 1024, 1024
          %447 = vsyncadd %s441, %s446
          %s448 = smul.addr %s33, 16
          %s449 = smul.addr %s448, 64
          %s450 = scalar_lea.hbm %s10, %s449
          %s451 = sshll.u32 %s444, 4
          %s452 = int_to_ptr.vmem [resolvable:$true] %s451
          %457 = dma.hbm_to_vmem [thread:$0]  %s450, 1024, %s452, %s441, 64, 64, 4
        $region60: #{tpu_custom_call.1} parent=39 // pred_fallthru
          _
        // Predicated region
        $region61: #{tpu_custom_call.1} parent=39 // pred_check
          %p458 = pneg %p313
        $region62: #{tpu_custom_call.1} parent=39 // pred_check_branch
          %460 = sbr.rel (%p458) target = $region64
        $region63: #{tpu_custom_call.1} parent=39 // pred_region
          %s461 = sand.u32 %s303, 1
          %s462 = scalar_lea.sflag [#allocation8], %s461
          %s463 = sand.u32 %s303, 1
          %s464 = smul.addr %s463, 64
          %s465 = scalar_lea.vmem [#allocation7], %s464
          %s467 = ssub.s32 1024, 1024
          %468 = vsyncadd %s462, %s467
          %s469 = smul.addr %s33, 16
          %s470 = smul.addr %s469, 64
          %s471 = scalar_lea.hbm %s11, %s470
          %s472 = sshll.u32 %s465, 4
          %s473 = int_to_ptr.vmem [resolvable:$true] %s472
          %478 = dma.hbm_to_vmem [thread:$0]  %s471, 1024, %s473, %s462, 64, 64, 4
        $region64: #{tpu_custom_call.1} parent=39 // pred_fallthru
          _
      $region40: #{tpu_custom_call.1} parent=5 // pred_fallthru
        _
      %p479 = scmp.le.s32.totalorder 1, %s25
      %p480 = scmp.lt.s32.totalorder %s25, 9
      %p481 = pnand %p479, %p480
      %p482 = pneg %p481
      // Predicated region
      $region65: #{tpu_custom_call.1} parent=5 // pred_check
        _
      $region66: #{tpu_custom_call.1} parent=5 // pred_check_branch
        %484 = sbr.rel (%p481) target = $region68
      $region67: #{tpu_custom_call.1} parent=5 // pred_region
        %s485 = ssub.s32 %s25, 1
        // Predicated region
        $region69: #{tpu_custom_call.1} parent=67 // pred_check
          %p486 = pneg %p84
        $region70: #{tpu_custom_call.1} parent=67 // pred_check_branch
          %488 = sbr.rel (%p486) target = $region72
        $region71: #{tpu_custom_call.1} parent=67 // pred_region
          %489 = dma.done [#allocation3], 5120
        $region72: #{tpu_custom_call.1} parent=67 // pred_fallthru
          _
        %s490 = sand.u32 %s30, 1
        %s491 = scalar_lea.sflag [#allocation5], %s490
        %s492 = sand.u32 %s228, 1
        %s493 = smul.addr %s492, 192
        %s494 = scalar_lea.vmem [#allocation4], %s493
        // Predicated region
        $region73: #{tpu_custom_call.1} parent=67 // pred_check
          %p495 = pneg %p241
        $region74: #{tpu_custom_call.1} parent=67 // pred_check_branch
          %497 = sbr.rel (%p495) target = $region76
        $region75: #{tpu_custom_call.1} parent=67 // pred_region
          %498 = dma.done %s491, 3072
        $region76: #{tpu_custom_call.1} parent=67 // pred_fallthru
          _
        %s499 = sand.u32 %s30, 1
        %s500 = scalar_lea.sflag [#allocation5], %s499
        %s501 = sand.u32 %s280, 1
        %s502 = smul.addr %s501, 64
        %s503 = scalar_lea.vmem [#allocation6], %s502
        // Predicated region
        $region77: #{tpu_custom_call.1} parent=67 // pred_check
          %p504 = pneg %p293
        $region78: #{tpu_custom_call.1} parent=67 // pred_check_branch
          %506 = sbr.rel (%p504) target = $region80
        $region79: #{tpu_custom_call.1} parent=67 // pred_region
          %507 = dma.done %s500, 1024
        $region80: #{tpu_custom_call.1} parent=67 // pred_fallthru
          _
        %s508 = sand.u32 %s306, 1
        %s509 = scalar_lea.sflag [#allocation8], %s508
        %s510 = sand.u32 %s306, 1
        %s511 = smul.addr %s510, 64
        %s512 = scalar_lea.vmem [#allocation7], %s511
        // Predicated region
        $region81: #{tpu_custom_call.1} parent=67 // pred_check
          %p513 = pneg %p319
        $region82: #{tpu_custom_call.1} parent=67 // pred_check_branch
          %515 = sbr.rel (%p513) target = $region84
        $region83: #{tpu_custom_call.1} parent=67 // pred_region
          %516 = dma.done %s509, 1024
        $region84: #{tpu_custom_call.1} parent=67 // pred_fallthru
          _
        %p517 = scmp.lt.s32.totalorder %s34, 1
        %s518 = scalar_select %p517, %s34, 1
        %s519 = smul.addr %s518, 5
        %s520 = smul.addr %s519, 2
        %s521 = scalar_lea.vmem %s0, %s520
        %p522 = pneg %p63
        %p523 = pneg %p60
        %p524 = pneg %p84
        %p525 = pneg %p81
        %p526 = pneg %p105
        %p527 = pneg %p102
        %p528 = pneg %p126
        %p529 = pneg %p123
        %p530 = pneg %p147
        %p531 = pneg %p144
        %p532 = pneg %p168
        %p533 = pneg %p165
        %p534 = pneg %p189
        %p535 = pneg %p186
        %p536 = scmp.lt.s32.totalorder %s35, 3
        %s537 = scalar_select %p536, %s35, 3
        %s538 = smul.addr %s537, 6
        %s539 = smul.addr %s538, 8
        %s540 = scalar_lea.vmem %s7, %s539
        %p541 = pneg %p215
        %p542 = pneg %p212
        %s543 = sand.u32 %s30, 1
        %s544 = scalar_lea.sflag [#allocation5], %s543
        %s545 = sand.u32 %s228, 1
        %s546 = smul.addr %s545, 192
        %s547 = scalar_lea.vmem [#allocation4], %s546
        %p548 = pneg %p241
        %p549 = pneg %p238
        %p550 = scmp.lt.s32.totalorder %s35, 3
        %s551 = scalar_select %p550, %s35, 3
        %s552 = smul.addr %s551, 16
        %s553 = smul.addr %s552, 4
        %s554 = scalar_lea.vmem %s9, %s553
        %p555 = pneg %p267
        %p556 = pneg %p264
        %s557 = sand.u32 %s30, 1
        %s558 = scalar_lea.sflag [#allocation5], %s557
        %s559 = sand.u32 %s280, 1
        %s560 = smul.addr %s559, 64
        %s561 = scalar_lea.vmem [#allocation6], %s560
        %p562 = pneg %p293
        %p563 = pneg %p290
        %s564 = sand.u32 %s306, 1
        %s565 = scalar_lea.sflag [#allocation8], %s564
        %s566 = sand.u32 %s306, 1
        %s567 = smul.addr %s566, 64
        %s568 = scalar_lea.vmem [#allocation7], %s567
        %p569 = pneg %p319
        %p570 = pneg %p316
        %p571 = pneg %p345
        %p572 = pneg %p342
        %p573 = scmp.lt.s32.totalorder %s34, 1
        %s574 = scalar_select %p573, %s34, 1
        %s575 = smul.addr %s574, 8
        %s576 = scalar_lea.vmem %s12, %s575
        %p577 = scmp.lt.s32.totalorder %s34, 1
        %s578 = scalar_select %p577, %s34, 1
        %s579 = smul.addr %s578, 5
        %s580 = smul.addr %s579, 2
        %s581 = scalar_lea.vmem %s0, %s580
        %p582 = scmp.lt.s32.totalorder %s35, 3
        %s583 = scalar_select %p582, %s35, 3
        %s584 = smul.addr %s583, 6
        %s585 = smul.addr %s584, 8
        %s586 = scalar_lea.vmem %s7, %s585
        %p587 = scmp.lt.s32.totalorder %s35, 3
        %s588 = scalar_select %p587, %s35, 3
        %s589 = smul.addr %s588, 16
        %s590 = smul.addr %s589, 4
        %s591 = scalar_lea.vmem %s9, %s590
        %p592 = scmp.lt.s32.totalorder %s34, 1
        %s593 = scalar_select %p592, %s34, 1
        %s594 = smul.addr %s593, 8
        %s595 = scalar_lea.vmem %s12, %s594
        %v597 = vlaneseq
        %v598 = vand.u32 %v597, 127
        %vm599 = vcmp.lt.s32.totalorder %v598, 32
        %v600 = vsel %vm599, 1, 0
        %v601 = vcvt.s32.f32 %v600
        %p602 = scmp.eq.s32.totalorder %s35, 0
        // Predicated region
        $region85: #{tpu_custom_call.1} parent=67 // pred_check
          %p603 = pneg %p602
        $region86: #{tpu_custom_call.1} parent=67 // pred_check_branch
          %605 = sbr.rel (%p603) target = $region88
        $region87: #{tpu_custom_call.1} parent=67 // pred_region
          %v606 = vld [vmem:[#allocation2] sm:$0xf]
          %v607 = vld [vmem:[#allocation2 + $0x4] sm:$0xf]
          %v608 = vld [vmem:[#allocation2 + $0x8] sm:$0xf]
          %v609 = vld [vmem:[#allocation2 + $0xc] sm:$0xf]
          %v610 = vld [vmem:[#allocation2 + $0x10] sm:$0xf]
          %v611 = vld [vmem:[#allocation2 + $0x14] sm:$0xf]
          %v612 = vld [vmem:[#allocation2 + $0x18] sm:$0xf]
          %v613 = vld [vmem:[#allocation2 + $0x1c] sm:$0xf]
          %v614 = vld [vmem:[#allocation2 + $0x20] sm:$0xf]
          %v615 = vld [vmem:[#allocation2 + $0x24] sm:$0xf]
          %v616 = vld [vmem:[#allocation2 + $0x28] sm:$0xf]
          %v617 = vld [vmem:[#allocation2 + $0x2c] sm:$0xf]
          %v618 = vld [vmem:[#allocation2 + $0x30] sm:$0xf]
          %v619 = vld [vmem:[#allocation2 + $0x34] sm:$0xf]
          %v620 = vld [vmem:[#allocation2 + $0x38] sm:$0xf]
          %v621 = vld [vmem:[#allocation2 + $0x3c] sm:$0xf]
          %v622 = vld [vmem:[#allocation2 + $0x40] sm:$0xf]
          %v623 = vld [vmem:[#allocation2 + $0x44] sm:$0xf]
          %v624 = vld [vmem:[#allocation2 + $0x48] sm:$0xf]
          %v625 = vld [vmem:[#allocation2 + $0x4c] sm:$0xf]
          %v626 = vld [vmem:[#allocation2 + $0x50] sm:$0xf]
          %v627 = vld [vmem:[#allocation2 + $0x54] sm:$0xf]
          %v628 = vld [vmem:[#allocation2 + $0x58] sm:$0xf]
          %v629 = vld [vmem:[#allocation2 + $0x5c] sm:$0xf]
          %v630 = vld [vmem:[#allocation2 + $0x60] sm:$0xf]
          %v631 = vld [vmem:[#allocation2 + $0x64] sm:$0xf]
          %v632 = vld [vmem:[#allocation2 + $0x68] sm:$0xf]
          %v633 = vld [vmem:[#allocation2 + $0x6c] sm:$0xf]
          %v634 = vld [vmem:[#allocation2 + $0x70] sm:$0xf]
          %v635 = vld [vmem:[#allocation2 + $0x74] sm:$0xf]
          %v636 = vld [vmem:[#allocation2 + $0x78] sm:$0xf]
          %v637 = vld [vmem:[#allocation2 + $0x7c] sm:$0xf]
          %v638 = vld [vmem:[#allocation2 + $0x80] sm:$0xf]
          %v639 = vld [vmem:[#allocation2 + $0x84] sm:$0xf]
          %v640 = vld [vmem:[#allocation2 + $0x88] sm:$0xf]
          %v641 = vld [vmem:[#allocation2 + $0x8c] sm:$0xf]
          %v642 = vld [vmem:[#allocation2 + $0x90] sm:$0xf]
          %v643 = vld [vmem:[#allocation2 + $0x94] sm:$0xf]
          %v644 = vld [vmem:[#allocation2 + $0x98] sm:$0xf]
          %v645 = vld [vmem:[#allocation2 + $0x9c] sm:$0xf]
          %v646 = vld [vmem:[#allocation2 + $0xa0] sm:$0xf]
          %v647 = vld [vmem:[#allocation2 + $0xa4] sm:$0xf]
          %v648 = vld [vmem:[#allocation2 + $0xa8] sm:$0xf]
          %v649 = vld [vmem:[#allocation2 + $0xac] sm:$0xf]
          %v650 = vld [vmem:[#allocation2 + $0xb0] sm:$0xf]
          %v651 = vld [vmem:[#allocation2 + $0xb4] sm:$0xf]
          %v652 = vld [vmem:[#allocation2 + $0xb8] sm:$0xf]
          %v653 = vld [vmem:[#allocation2 + $0xbc] sm:$0xf]
          %v654 = vld [vmem:[#allocation2 + $0xc0] sm:$0xf]
          %v655 = vld [vmem:[#allocation2 + $0xc4] sm:$0xf]
          %v656 = vld [vmem:[#allocation2 + $0xc8] sm:$0xf]
          %v657 = vld [vmem:[#allocation2 + $0xcc] sm:$0xf]
          %v658 = vld [vmem:[#allocation2 + $0xd0] sm:$0xf]
          %v659 = vld [vmem:[#allocation2 + $0xd4] sm:$0xf]
          %v660 = vld [vmem:[#allocation2 + $0xd8] sm:$0xf]
          %v661 = vld [vmem:[#allocation2 + $0xdc] sm:$0xf]
          %v662 = vld [vmem:[#allocation2 + $0xe0] sm:$0xf]
          %v663 = vld [vmem:[#allocation2 + $0xe4] sm:$0xf]
          %v664 = vld [vmem:[#allocation2 + $0xe8] sm:$0xf]
          %v665 = vld [vmem:[#allocation2 + $0xec] sm:$0xf]
          %v666 = vld [vmem:[#allocation2 + $0xf0] sm:$0xf]
          %v667 = vld [vmem:[#allocation2 + $0xf4] sm:$0xf]
          %v668 = vld [vmem:[#allocation2 + $0xf8] sm:$0xf]
          %v669 = vld [vmem:[#allocation2 + $0xfc] sm:$0xf]
          %v670 = vld [vmem:[#allocation2 + $0x100] sm:$0xf]
          %v671 = vld [vmem:[#allocation2 + $0x104] sm:$0xf]
          %v672 = vld [vmem:[#allocation2 + $0x108] sm:$0xf]
          %v673 = vld [vmem:[#allocation2 + $0x10c] sm:$0xf]
          %v674 = vld [vmem:[#allocation2 + $0x110] sm:$0xf]
          %v675 = vld [vmem:[#allocation2 + $0x114] sm:$0xf]
          %v676 = vld [vmem:[#allocation2 + $0x118] sm:$0xf]
          %v677 = vld [vmem:[#allocation2 + $0x11c] sm:$0xf]
          %v678 = vld [vmem:[#allocation2 + $0x120] sm:$0xf]
          %v679 = vld [vmem:[#allocation2 + $0x124] sm:$0xf]
          %v680 = vld [vmem:[#allocation2 + $0x128] sm:$0xf]
          %v681 = vld [vmem:[#allocation2 + $0x12c] sm:$0xf]
          %v682 = vld [vmem:[#allocation2 + $0x130] sm:$0xf]
          %v683 = vld [vmem:[#allocation2 + $0x134] sm:$0xf]
          %v684 = vld [vmem:[#allocation2 + $0x138] sm:$0xf]
          %v685 = vld [vmem:[#allocation2 + $0x13c] sm:$0xf]
          %v686 = vld [vmem:[%s581] sm:$0xff]
          %v687 = vld [vmem:[%s581 + $0x8] sm:$0x3]
          %v688 = vld [vmem:[%s2] sm:$0x1]
          %v690 = vlaneseq
          %v691 = vshrl.u32 %v690, 7
          %v692 = vsub.s32 0, %v691
          %v693 = vrot.slane %v688, %v692
          %v697 = vcombine.high %v686, %v686
          %v699 = vunpack.c.l.s4 1983009808
          %v700 = vunpack.c.0.s8 %v699
          %v701 = vlaneseq
          %v702 = vshrl.u32 %v701, 7
          %v703 = vsub.s32 %v700, %v702
          %v704 = vrot.slane %v686, %v703
          %v706 = vunpack.c.l.s4 1983009808
          %v707 = vunpack.c.0.s8 %v706
          %v708 = vlaneseq
          %v709 = vshrl.u32 %v708, 7
          %v710 = vsub.s32 %v707, %v709
          %v711 = vrot.slane %v697, %v710
          %v712 = vcombine.high %v704, %v704
          %v713 = vcombine.high %v711, %v711
          %v715 = vunpack.c.l.s4 1983009808
          %v716 = vunpack.c.0.s8 %v715
          %v717 = vlaneseq
          %v718 = vshrl.u32 %v717, 7
          %v719 = vsub.s32 %v716, %v718
          %v720 = vrot.slane %v687, %v719
          %v806 = vunpack.c.l.b16 %v606
          %v807 = vunpack.c.l.b16 %v607
          %v808 = vunpack.c.l.b16 %v608
          %v809 = vunpack.c.l.b16 %v609
          %v810 = vunpack.c.l.b16 %v610
          %v811 = vunpack.c.l.b16 %v611
          %v812 = vunpack.c.l.b16 %v612
          %v813 = vunpack.c.l.b16 %v613
          %v814 = vunpack.c.l.b16 %v614
          %v815 = vunpack.c.l.b16 %v615
          %v816 = vunpack.c.l.b16 %v616
          %v817 = vunpack.c.l.b16 %v617
          %v818 = vunpack.c.l.b16 %v618
          %v819 = vunpack.c.l.b16 %v619
          %v820 = vunpack.c.l.b16 %v620
          %v821 = vunpack.c.l.b16 %v621
          %v822 = vunpack.c.l.b16 %v622
          %v823 = vunpack.c.l.b16 %v623
          %v824 = vunpack.c.l.b16 %v624
          %v825 = vunpack.c.l.b16 %v625
          %v826 = vunpack.c.l.b16 %v626
          %v827 = vunpack.c.l.b16 %v627
          %v828 = vunpack.c.l.b16 %v628
          %v829 = vunpack.c.l.b16 %v629
          %v830 = vunpack.c.l.b16 %v630
          %v831 = vunpack.c.l.b16 %v631
          %v832 = vunpack.c.l.b16 %v632
          %v833 = vunpack.c.l.b16 %v633
          %v834 = vunpack.c.l.b16 %v634
          %v835 = vunpack.c.l.b16 %v635
          %v836 = vunpack.c.l.b16 %v636
          %v837 = vunpack.c.l.b16 %v637
          %v838 = vunpack.c.l.b16 %v638
          %v839 = vunpack.c.l.b16 %v639
          %v840 = vunpack.c.l.b16 %v640
          %v841 = vunpack.c.l.b16 %v641
          %v842 = vunpack.c.l.b16 %v642
          %v843 = vunpack.c.l.b16 %v643
          %v844 = vunpack.c.l.b16 %v644
          %v845 = vunpack.c.l.b16 %v645
          %v846 = vunpack.c.l.b16 %v646
          %v847 = vunpack.c.l.b16 %v647
          %v848 = vunpack.c.l.b16 %v648
          %v849 = vunpack.c.l.b16 %v649
          %v850 = vunpack.c.l.b16 %v650
          %v851 = vunpack.c.l.b16 %v651
          %v852 = vunpack.c.l.b16 %v652
          %v853 = vunpack.c.l.b16 %v653
          %v854 = vunpack.c.l.b16 %v654
          %v855 = vunpack.c.l.b16 %v655
          %v856 = vunpack.c.l.b16 %v656
          %v857 = vunpack.c.l.b16 %v657
          %v858 = vunpack.c.l.b16 %v658
          %v859 = vunpack.c.l.b16 %v659
          %v860 = vunpack.c.l.b16 %v660
          %v861 = vunpack.c.l.b16 %v661
          %v862 = vunpack.c.l.b16 %v662
          %v863 = vunpack.c.l.b16 %v663
          %v864 = vunpack.c.l.b16 %v664
          %v865 = vunpack.c.l.b16 %v665
          %v866 = vunpack.c.l.b16 %v666
          %v867 = vunpack.c.l.b16 %v667
          %v868 = vunpack.c.l.b16 %v668
          %v869 = vunpack.c.l.b16 %v669
          %v870 = vunpack.c.l.b16 %v670
          %v871 = vunpack.c.l.b16 %v671
          %v872 = vunpack.c.l.b16 %v672
          %v873 = vunpack.c.l.b16 %v673
          %v874 = vunpack.c.l.b16 %v674
          %v875 = vunpack.c.l.b16 %v675
          %v876 = vunpack.c.l.b16 %v676
          %v877 = vunpack.c.l.b16 %v677
          %v878 = vunpack.c.l.b16 %v678
          %v879 = vunpack.c.l.b16 %v679
          %v880 = vunpack.c.l.b16 %v680
          %v881 = vunpack.c.l.b16 %v681
          %v882 = vunpack.c.l.b16 %v682
          %v883 = vunpack.c.l.b16 %v683
          %v884 = vunpack.c.l.b16 %v684
          %v885 = vunpack.c.l.b16 %v685
          %v886 = vpack.c.b16 %v807, %v806
          %v887 = vpack.c.b16 %v809, %v808
          %v888 = vpack.c.b16 %v811, %v810
          %v889 = vpack.c.b16 %v813, %v812
          %v890 = vpack.c.b16 %v815, %v814
          %v891 = vpack.c.b16 %v817, %v816
          %v892 = vpack.c.b16 %v819, %v818
          %v893 = vpack.c.b16 %v821, %v820
          %v894 = vpack.c.b16 %v823, %v822
          %v895 = vpack.c.b16 %v825, %v824
          %v896 = vpack.c.b16 %v827, %v826
          %v897 = vpack.c.b16 %v829, %v828
          %v898 = vpack.c.b16 %v831, %v830
          %v899 = vpack.c.b16 %v833, %v832
          %v900 = vpack.c.b16 %v835, %v834
          %v901 = vpack.c.b16 %v837, %v836
          %v902 = vpack.c.b16 %v839, %v838
          %v903 = vpack.c.b16 %v841, %v840
          %v904 = vpack.c.b16 %v843, %v842
          %v905 = vpack.c.b16 %v845, %v844
          %v906 = vpack.c.b16 %v847, %v846
          %v907 = vpack.c.b16 %v849, %v848
          %v908 = vpack.c.b16 %v851, %v850
          %v909 = vpack.c.b16 %v853, %v852
          %v910 = vpack.c.b16 %v855, %v854
          %v911 = vpack.c.b16 %v857, %v856
          %v912 = vpack.c.b16 %v859, %v858
          %v913 = vpack.c.b16 %v861, %v860
          %v914 = vpack.c.b16 %v863, %v862
          %v915 = vpack.c.b16 %v865, %v864
          %v916 = vpack.c.b16 %v867, %v866
          %v917 = vpack.c.b16 %v869, %v868
          %v918 = vpack.c.b16 %v871, %v870
          %v919 = vpack.c.b16 %v873, %v872
          %v920 = vpack.c.b16 %v875, %v874
          %v921 = vpack.c.b16 %v877, %v876
          %v922 = vpack.c.b16 %v879, %v878
          %v923 = vpack.c.b16 %v881, %v880
          %v924 = vpack.c.b16 %v883, %v882
          %v925 = vpack.c.b16 %v885, %v884
          %966 = vmatprep.subr.bf16.mxu0 0
          %967 = vmatpush1.bf16.msra.mxu0 %v886
          %968 = vmatprep.subr.bf16.mxu0 0
          %969 = vmatpush1.bf16.msra.mxu0 %v887
          %970 = vmatprep.subr.bf16.mxu0 0
          %971 = vmatpush1.bf16.msra.mxu0 %v888
          %972 = vmatprep.subr.bf16.mxu0 0
          %973 = vmatpush1.bf16.msra.mxu0 %v889
          %974 = vmatprep.subr.bf16.mxu0 0
          %975 = vmatpush1.bf16.msra.mxu0 %v890
          %976 = vmatprep.subr.bf16.mxu0 0
          %977 = vmatpush1.bf16.msra.mxu0 %v891
          %978 = vmatprep.subr.bf16.mxu0 0
          %979 = vmatpush1.bf16.msra.mxu0 %v892
          %980 = vmatprep.subr.bf16.mxu0 0
          %981 = vmatpush1.bf16.msra.mxu0 %v893
          %982 = vmatprep.subr.bf16.mxu0 0
          %983 = vmatpush1.bf16.msra.mxu0 %v894
          %984 = vmatprep.subr.bf16.mxu0 0
          %985 = vmatpush1.bf16.msra.mxu0 %v895
          %986 = vmatprep.subr.bf16.mxu0 0
          %987 = vmatpush1.bf16.msra.mxu0 %v896
          %988 = vmatprep.subr.bf16.mxu0 0
          %989 = vmatpush1.bf16.msra.mxu0 %v897
          %990 = vmatprep.subr.bf16.mxu0 0
          %991 = vmatpush1.bf16.msra.mxu0 %v898
          %992 = vmatprep.subr.bf16.mxu0 0
          %993 = vmatpush1.bf16.msra.mxu0 %v899
          %994 = vmatprep.subr.bf16.mxu0 0
          %995 = vmatpush1.bf16.msra.mxu0 %v900
          %996 = vmatprep.subr.bf16.mxu0 0
          %997 = vmatpush1.bf16.msra.mxu0 %v901
          %998 = vmatprep.mubr.bf16.mxu0 %v712
          %999 = vmatmul.mubr.bf16.gmra.mrb[0].mxu0 %v704
          %v1000 = vpop.f32.mrb[0].mxu0
          %v1001 = vadd.f32 %v693, %v1000
          %v1002 = vpop.f32.mrb[0].mxu0
          %v1003 = vpop.f32.mrb[0].mxu0
          %v1004 = vpop.f32.mrb[0].mxu0
          %1005 = vdwg.mxu0
          %1006 = vmatprep.subr.bf16.mxu0 0
          %1007 = vmatpush1.bf16.msra.mxu0 %v902
          %1008 = vmatprep.subr.bf16.mxu0 0
          %1009 = vmatpush1.bf16.msra.mxu0 %v903
          %1010 = vmatprep.subr.bf16.mxu0 0
          %1011 = vmatpush1.bf16.msra.mxu0 %v904
          %1012 = vmatprep.subr.bf16.mxu0 0
          %1013 = vmatpush1.bf16.msra.mxu0 %v905
          %1014 = vmatprep.subr.bf16.mxu0 0
          %1015 = vmatpush1.bf16.msra.mxu0 %v906
          %1016 = vmatprep.subr.bf16.mxu0 0
          %1017 = vmatpush1.bf16.msra.mxu0 %v907
          %1018 = vmatprep.subr.bf16.mxu0 0
          %1019 = vmatpush1.bf16.msra.mxu0 %v908
          %1020 = vmatprep.subr.bf16.mxu0 0
          %1021 = vmatpush1.bf16.msra.mxu0 %v909
          %1022 = vmatprep.subr.bf16.mxu0 0
          %1023 = vmatpush1.bf16.msra.mxu0 %v910
          %1024 = vmatprep.subr.bf16.mxu0 0
          %1025 = vmatpush1.bf16.msra.mxu0 %v911
          %1026 = vmatprep.subr.bf16.mxu0 0
          %1027 = vmatpush1.bf16.msra.mxu0 %v912
          %1028 = vmatprep.subr.bf16.mxu0 0
          %1029 = vmatpush1.bf16.msra.mxu0 %v913
          %1030 = vmatprep.subr.bf16.mxu0 0
          %1031 = vmatpush1.bf16.msra.mxu0 %v914
          %1032 = vmatprep.subr.bf16.mxu0 0
          %1033 = vmatpush1.bf16.msra.mxu0 %v915
          %1034 = vmatprep.subr.bf16.mxu0 0
          %1035 = vmatpush1.bf16.msra.mxu0 %v916
          %1036 = vmatprep.subr.bf16.mxu0 0
          %1037 = vmatpush1.bf16.msra.mxu0 %v917
          %1038 = vmatprep.mubr.bf16.mxu0 %v713
          %1039 = vmatmul.mubr.bf16.gmra.mrb[0].mxu0 %v711
          %v1040 = vpop.f32.mrb[0].mxu0
          %v1041 = vadd.f32 %v1001, %v1040
          %v1042 = vpop.f32.mrb[0].mxu0
          %v1043 = vpop.f32.mrb[0].mxu0
          %v1044 = vpop.f32.mrb[0].mxu0
          %1045 = vdwg.mxu0
          %1046 = vmatprep.subr.bf16.mxu0 0
          %1047 = vmatpush1.bf16.msra.mxu0 %v918
          %1048 = vmatprep.subr.bf16.mxu0 0
          %1049 = vmatpush1.bf16.msra.mxu0 %v919
          %1050 = vmatprep.subr.bf16.mxu0 0
          %1051 = vmatpush1.bf16.msra.mxu0 %v920
          %1052 = vmatprep.subr.bf16.mxu0 0
          %1053 = vmatpush1.bf16.msra.mxu0 %v921
          %1054 = vmatprep.subr.bf16.mxu0 0
          %1055 = vmatpush1.bf16.msra.mxu0 %v922
          %1056 = vmatprep.subr.bf16.mxu0 0
          %1057 = vmatpush1.bf16.msra.mxu0 %v923
          %1058 = vmatprep.subr.bf16.mxu0 0
          %1059 = vmatpush1.bf16.msra.mxu0 %v924
          %1060 = vmatprep.subr.bf16.mxu0 0
          %1061 = vmatpush1.bf16.msra.mxu0 %v925
          %1062 = vmatprep.subr.bf16.mxu0 0
          %1063 = vmatpush1.bf16.msra.mxu0 0
          %1064 = vmatprep.subr.bf16.mxu0 0
          %1065 = vmatpush1.bf16.msra.mxu0 0
          %1066 = vmatprep.subr.bf16.mxu0 0
          %1067 = vmatpush1.bf16.msra.mxu0 0
          %1068 = vmatprep.subr.bf16.mxu0 0
          %1069 = vmatpush1.bf16.msra.mxu0 0
          %1070 = vmatprep.subr.bf16.mxu0 0
          %1071 = vmatpush1.bf16.msra.mxu0 0
          %1072 = vmatprep.subr.bf16.mxu0 0
          %1073 = vmatpush1.bf16.msra.mxu0 0
          %1074 = vmatprep.subr.bf16.mxu0 0
          %1075 = vmatpush1.bf16.msra.mxu0 0
          %1076 = vmatprep.subr.bf16.mxu0 0
          %1077 = vmatpush1.bf16.msra.mxu0 0
          %1078 = vmatprep.mubr.bf16.mxu0 0
          %1079 = vmatmul.mubr.bf16.gmra.mrb[0].mxu0 %v720
          %v1080 = vpop.f32.mrb[0].mxu0
          %v1081 = vadd.f32 %v1041, %v1080
          %v1082 = vpop.f32.mrb[0].mxu0
          %v1083 = vpop.f32.mrb[0].mxu0
          %v1084 = vpop.f32.mrb[0].mxu0
          %1085 = vdwg.mxu0
          %v1086 = vld [vmem:[%s3] sm:$0x1]
          %v1088 = vrot.slane %v1081, 7
          %vm1090 = vcmask 1040384
          %v1091 = vsel %vm1090, %v1086, %v1088
          %v1092 = vld [vmem:[%s4] sm:$0x1f]
          %v1093 = vadd.f32 %v1091, %v1092
          %1094 = vst [vmem:[%s595] sm:$0x1f] %v1093
        $region88: #{tpu_custom_call.1} parent=67 // pred_fallthru
          _
        %v1095 = vld [vmem:[%s595] sm:$0x1f]
        %v1096 = vld [vmem:[%s586] sm:$0xff]
        %v1097 = vld [vmem:[%s586 + $0x8] sm:$0xff]
        %v1098 = vld [vmem:[%s586 + $0x10] sm:$0xff]
        %v1099 = vld [vmem:[%s586 + $0x18] sm:$0x3]
        %vm1100 = vcmask 1044480
        %v1101 = vsel %vm1100, %v1095, 0.0
        %1102 = vadd.xlane.f32.xlu0 %v1101
        %v1103 = vpop.xlane.xlu0 %1102
        %v1104 = vmul.f32 %v1103, 0.03125
        %v1105 = vsub.f32 %v1095, %v1104
        %v1106 = vmul.f32 %v1105, %v601
        %v1107 = vmul.f32 %v1106, %v1106
        %v1108 = vsel %vm1100, %v1107, 0.0
        %1109 = vadd.xlane.f32.xlu0 %v1108
        %v1110 = vpop.xlane.xlu0 %1109
        %v1111 = vmul.f32 %v1110, 0.03125
        %v1112 = vadd.f32 %v1111, 1e-06
        %v1113 = vrsqrt.pop %v1112
        %v1114 = vmul.f32 %v1106, %v1113
        %v1115 = vlaneseq
        %v1116 = vshrl.u32 %v1115, 7
        %v1117 = vsub.s32 0, %v1116
        %v1118 = vrot.slane %v1096, %v1117
        %v1119 = vmul.f32 %v1114, %v1118
        %v1120 = vlaneseq
        %v1121 = vshrl.u32 %v1120, 7
        %v1122 = vsub.s32 1, %v1121
        %v1123 = vrot.slane %v1096, %v1122
        %v1124 = vadd.f32 %v1119, %v1123
        %v1125 = vpack.c.bf16 %v1124, %v1124
        %v1126 = vld [vmem:[%s494] sm:$0xff]
        %v1127 = vld [vmem:[%s494 + $0x8] sm:$0xf]
        %v1128 = vld [vmem:[%s494 + $0xc] sm:$0xff]
        %v1129 = vld [vmem:[%s494 + $0x14] sm:$0xf]
        %v1130 = vld [vmem:[%s494 + $0x18] sm:$0xff]
        %v1131 = vld [vmem:[%s494 + $0x20] sm:$0xf]
        %v1132 = vld [vmem:[%s494 + $0x24] sm:$0xff]
        %v1133 = vld [vmem:[%s494 + $0x2c] sm:$0xf]
        %v1134 = vld [vmem:[%s494 + $0x30] sm:$0xff]
        %v1135 = vld [vmem:[%s494 + $0x38] sm:$0xf]
        %v1136 = vld [vmem:[%s494 + $0x3c] sm:$0xff]
        %v1137 = vld [vmem:[%s494 + $0x44] sm:$0xf]
        %v1138 = vld [vmem:[%s494 + $0x48] sm:$0xff]
        %v1139 = vld [vmem:[%s494 + $0x50] sm:$0xf]
        %v1140 = vld [vmem:[%s494 + $0x54] sm:$0xff]
        %v1141 = vld [vmem:[%s494 + $0x5c] sm:$0xf]
        %v1142 = vld [vmem:[%s494 + $0x60] sm:$0xff]
        %v1143 = vld [vmem:[%s494 + $0x68] sm:$0xf]
        %v1144 = vld [vmem:[%s494 + $0x6c] sm:$0xff]
        %v1145 = vld [vmem:[%s494 + $0x74] sm:$0xf]
        %v1146 = vld [vmem:[%s494 + $0x78] sm:$0xff]
        %v1147 = vld [vmem:[%s494 + $0x80] sm:$0xf]
        %v1148 = vld [vmem:[%s494 + $0x84] sm:$0xff]
        %v1149 = vld [vmem:[%s494 + $0x8c] sm:$0xf]
        %v1150 = vld [vmem:[%s494 + $0x90] sm:$0xff]
        %v1151 = vld [vmem:[%s494 + $0x98] sm:$0xf]
        %v1152 = vld [vmem:[%s494 + $0x9c] sm:$0xff]
        %v1153 = vld [vmem:[%s494 + $0xa4] sm:$0xf]
        %v1154 = vld [vmem:[%s494 + $0xa8] sm:$0xff]
        %v1155 = vld [vmem:[%s494 + $0xb0] sm:$0xf]
        %v1156 = vld [vmem:[%s494 + $0xb4] sm:$0xff]
        %v1157 = vld [vmem:[%s494 + $0xbc] sm:$0xf]
        %v1158 = vlaneseq
        %v1159 = vshrl.u32 %v1158, 7
        %v1160 = vsub.s32 2, %v1159
        %v1161 = vrot.slane %v1096, %v1160
        %v1162 = vlaneseq
        %v1163 = vshrl.u32 %v1162, 7
        %v1164 = vsub.s32 2, %v1163
        %v1165 = vrot.slane %v1097, %v1164
        %v1166 = vlaneseq
        %v1167 = vshrl.u32 %v1166, 7
        %v1168 = vsub.s32 2, %v1167
        %v1169 = vrot.slane %v1098, %v1168
        %v1202 = vunpack.c.l.b16 %v1126
        %v1203 = vunpack.c.h.b16 %v1126
        %v1204 = vunpack.c.l.b16 %v1127
        %v1205 = vunpack.c.l.b16 %v1128
        %v1206 = vunpack.c.h.b16 %v1128
        %v1207 = vunpack.c.l.b16 %v1129
        %v1208 = vunpack.c.l.b16 %v1130
        %v1209 = vunpack.c.h.b16 %v1130
        %v1210 = vunpack.c.l.b16 %v1131
        %v1211 = vunpack.c.l.b16 %v1132
        %v1212 = vunpack.c.h.b16 %v1132
        %v1213 = vunpack.c.l.b16 %v1133
        %v1214 = vunpack.c.l.b16 %v1134
        %v1215 = vunpack.c.h.b16 %v1134
        %v1216 = vunpack.c.l.b16 %v1135
        %v1217 = vunpack.c.l.b16 %v1136
        %v1218 = vunpack.c.h.b16 %v1136
        %v1219 = vunpack.c.l.b16 %v1137
        %v1220 = vunpack.c.l.b16 %v1138
        %v1221 = vunpack.c.h.b16 %v1138
        %v1222 = vunpack.c.l.b16 %v1139
        %v1223 = vunpack.c.l.b16 %v1140
        %v1224 = vunpack.c.h.b16 %v1140
        %v1225 = vunpack.c.l.b16 %v1141
        %v1226 = vunpack.c.l.b16 %v1142
        %v1227 = vunpack.c.h.b16 %v1142
        %v1228 = vunpack.c.l.b16 %v1143
        %v1229 = vunpack.c.l.b16 %v1144
        %v1230 = vunpack.c.h.b16 %v1144
        %v1231 = vunpack.c.l.b16 %v1145
        %v1232 = vunpack.c.l.b16 %v1146
        %v1233 = vunpack.c.h.b16 %v1146
        %v1234 = vunpack.c.l.b16 %v1147
        %v1235 = vunpack.c.l.b16 %v1148
        %v1236 = vunpack.c.h.b16 %v1148
        %v1237 = vunpack.c.l.b16 %v1149
        %v1238 = vunpack.c.l.b16 %v1150
        %v1239 = vunpack.c.h.b16 %v1150
        %v1240 = vunpack.c.l.b16 %v1151
        %v1241 = vunpack.c.l.b16 %v1152
        %v1242 = vunpack.c.h.b16 %v1152
        %v1243 = vunpack.c.l.b16 %v1153
        %v1244 = vunpack.c.l.b16 %v1154
        %v1245 = vunpack.c.h.b16 %v1154
        %v1246 = vunpack.c.l.b16 %v1155
        %v1247 = vunpack.c.l.b16 %v1156
        %v1248 = vunpack.c.h.b16 %v1156
        %v1249 = vunpack.c.l.b16 %v1157
        %v1250 = vpack.c.b16 %v1205, %v1202
        %v1251 = vpack.c.b16 %v1206, %v1203
        %v1252 = vpack.c.b16 %v1207, %v1204
        %v1253 = vpack.c.b16 %v1211, %v1208
        %v1254 = vpack.c.b16 %v1212, %v1209
        %v1255 = vpack.c.b16 %v1213, %v1210
        %v1256 = vpack.c.b16 %v1217, %v1214
        %v1257 = vpack.c.b16 %v1218, %v1215
        %v1258 = vpack.c.b16 %v1219, %v1216
        %v1259 = vpack.c.b16 %v1223, %v1220
        %v1260 = vpack.c.b16 %v1224, %v1221
        %v1261 = vpack.c.b16 %v1225, %v1222
        %v1262 = vpack.c.b16 %v1229, %v1226
        %v1263 = vpack.c.b16 %v1230, %v1227
        %v1264 = vpack.c.b16 %v1231, %v1228
        %v1265 = vpack.c.b16 %v1235, %v1232
        %v1266 = vpack.c.b16 %v1236, %v1233
        %v1267 = vpack.c.b16 %v1237, %v1234
        %v1268 = vpack.c.b16 %v1241, %v1238
        %v1269 = vpack.c.b16 %v1242, %v1239
        %v1270 = vpack.c.b16 %v1243, %v1240
        %v1271 = vpack.c.b16 %v1247, %v1244
        %v1272 = vpack.c.b16 %v1248, %v1245
        %v1273 = vpack.c.b16 %v1249, %v1246
        %1298 = vmatprep.subr.bf16.mxu0 %v1251
        %1299 = vmatpush1.bf16.msra.mxu0 %v1250
        %1300 = vmatprep.subr.bf16.mxu0 %v1254
        %1301 = vmatpush1.bf16.msra.mxu0 %v1253
        %1302 = vmatprep.subr.bf16.mxu0 %v1257
        %1303 = vmatpush1.bf16.msra.mxu0 %v1256
        %1304 = vmatprep.subr.bf16.mxu0 %v1260
        %1305 = vmatpush1.bf16.msra.mxu0 %v1259
        %1306 = vmatprep.subr.bf16.mxu0 %v1263
        %1307 = vmatpush1.bf16.msra.mxu0 %v1262
        %1308 = vmatprep.subr.bf16.mxu0 %v1266
        %1309 = vmatpush1.bf16.msra.mxu0 %v1265
        %1310 = vmatprep.subr.bf16.mxu0 %v1269
        %1311 = vmatpush1.bf16.msra.mxu0 %v1268
        %1312 = vmatprep.subr.bf16.mxu0 %v1272
        %1313 = vmatpush1.bf16.msra.mxu0 %v1271
        %1314 = vmatprep.subr.bf16.mxu0 0
        %1315 = vmatpush1.bf16.msra.mxu0 0
        %1316 = vmatprep.subr.bf16.mxu0 0
        %1317 = vmatpush1.bf16.msra.mxu0 0
        %1318 = vmatprep.subr.bf16.mxu0 0
        %1319 = vmatpush1.bf16.msra.mxu0 0
        %1320 = vmatprep.subr.bf16.mxu0 0
        %1321 = vmatpush1.bf16.msra.mxu0 0
        %1322 = vmatprep.subr.bf16.mxu0 0
        %1323 = vmatpush1.bf16.msra.mxu0 0
        %1324 = vmatprep.subr.bf16.mxu0 0
        %1325 = vmatpush1.bf16.msra.mxu0 0
        %1326 = vmatprep.subr.bf16.mxu0 0
        %1327 = vmatpush1.bf16.msra.mxu0 0
        %1328 = vmatprep.subr.bf16.mxu0 0
        %1329 = vmatpush1.bf16.msra.mxu0 0
        %1330 = vmatprep.mubr.bf16.mxu0 0
        %1331 = vmatmul.mubr.bf16.gmra.mrb[0].mxu0 %v1125
        %v1332 = vpop.f32.mrb[0].mxu0
        %v1333 = vadd.f32 %v1161, %v1332
        %v1334 = vpop.f32.mrb[0].mxu0
        %v1335 = vadd.f32 %v1165, %v1334
        %v1336 = vpop.f32.mrb[0].mxu0
        %v1337 = vpop.f32.mrb[0].mxu0
        %1338 = vdwg.mxu0
        %1339 = vmatprep.subr.bf16.mxu0 0
        %1340 = vmatpush1.bf16.msra.mxu0 %v1252
        %1341 = vmatprep.subr.bf16.mxu0 0
        %1342 = vmatpush1.bf16.msra.mxu0 %v1255
        %1343 = vmatprep.subr.bf16.mxu0 0
        %1344 = vmatpush1.bf16.msra.mxu0 %v1258
        %1345 = vmatprep.subr.bf16.mxu0 0
        %1346 = vmatpush1.bf16.msra.mxu0 %v1261
        %1347 = vmatprep.subr.bf16.mxu0 0
        %1348 = vmatpush1.bf16.msra.mxu0 %v1264
        %1349 = vmatprep.subr.bf16.mxu0 0
        %1350 = vmatpush1.bf16.msra.mxu0 %v1267
        %1351 = vmatprep.subr.bf16.mxu0 0
        %1352 = vmatpush1.bf16.msra.mxu0 %v1270
        %1353 = vmatprep.subr.bf16.mxu0 0
        %1354 = vmatpush1.bf16.msra.mxu0 %v1273
        %1355 = vmatprep.subr.bf16.mxu0 0
        %1356 = vmatpush1.bf16.msra.mxu0 0
        %1357 = vmatprep.subr.bf16.mxu0 0
        %1358 = vmatpush1.bf16.msra.mxu0 0
        %1359 = vmatprep.subr.bf16.mxu0 0
        %1360 = vmatpush1.bf16.msra.mxu0 0
        %1361 = vmatprep.subr.bf16.mxu0 0
        %1362 = vmatpush1.bf16.msra.mxu0 0
        %1363 = vmatprep.subr.bf16.mxu0 0
        %1364 = vmatpush1.bf16.msra.mxu0 0
        %1365 = vmatprep.subr.bf16.mxu0 0
        %1366 = vmatpush1.bf16.msra.mxu0 0
        %1367 = vmatprep.subr.bf16.mxu0 0
        %1368 = vmatpush1.bf16.msra.mxu0 0
        %1369 = vmatprep.subr.bf16.mxu0 0
        %1370 = vmatpush1.bf16.msra.mxu0 0
        %1371 = vmatprep.mubr.bf16.mxu0 0
        %1372 = vmatmul.mubr.bf16.gmra.mrb[0].mxu0 %v1125
        %v1373 = vpop.f32.mrb[0].mxu0
        %v1374 = vadd.f32 %v1169, %v1373
        %v1375 = vpop.f32.mrb[0].mxu0
        %v1376 = vpop.f32.mrb[0].mxu0
        %v1377 = vpop.f32.mrb[0].mxu0
        %1378 = vdwg.mxu0
        %v1379 = vmul.f32 %v1333, 0.35355338
        %1381 = vrot.lane.b32.xlu0 %v1379, 120
        %v1382 = vpop.permute.xlu0 %1381
        %1384 = vrot.lane.b32.xlu0 %v1379, 112
        %v1385 = vpop.permute.xlu0 %1384
        %1387 = vrot.lane.b32.xlu0 %v1379, 104
        %v1388 = vpop.permute.xlu0 %1387
        %v1390 = vcombine.low %v1379, %v1385
        %v1391 = vcombine.high %v1379, %v1385
        %v1393 = vunpack.c.l.s4 1983009808
        %v1394 = vunpack.c.0.s8 %v1393
        %v1395 = vlaneseq
        %v1396 = vshrl.u32 %v1395, 7
        %v1397 = vsub.s32 %v1394, %v1396
        %v1398 = vrot.slane %v1390, %v1397
        %v1400 = vunpack.c.l.s4 1983009808
        %v1401 = vunpack.c.0.s8 %v1400
        %v1402 = vlaneseq
        %v1403 = vshrl.u32 %v1402, 7
        %v1404 = vsub.s32 %v1401, %v1403
        %v1405 = vrot.slane %v1391, %v1404
        %v1406 = vcombine.low %v1382, %v1388
        %v1407 = vcombine.high %v1382, %v1388
        %v1409 = vunpack.c.l.s4 1983009808
        %v1410 = vunpack.c.0.s8 %v1409
        %v1411 = vlaneseq
        %v1412 = vshrl.u32 %v1411, 7
        %v1413 = vsub.s32 %v1410, %v1412
        %v1414 = vrot.slane %v1406, %v1413
        %v1416 = vunpack.c.l.s4 1983009808
        %v1417 = vunpack.c.0.s8 %v1416
        %v1418 = vlaneseq
        %v1419 = vshrl.u32 %v1418, 7
        %v1420 = vsub.s32 %v1417, %v1419
        %v1421 = vrot.slane %v1407, %v1420
        %v1422 = vcombine.low %v1398, %v1414
        %v1423 = vcombine.high %v1398, %v1414
        %v1425 = vunpack.c.l.s4 1934713408
        %v1426 = vunpack.c.0.s8 %v1425
        %v1427 = vlaneseq
        %v1428 = vshrl.u32 %v1427, 7
        %v1429 = vsub.s32 %v1426, %v1428
        %v1430 = vrot.slane %v1422, %v1429
        %v1432 = vunpack.c.l.s4 1934713408
        %v1433 = vunpack.c.0.s8 %v1432
        %v1434 = vlaneseq
        %v1435 = vshrl.u32 %v1434, 7
        %v1436 = vsub.s32 %v1433, %v1435
        %v1437 = vrot.slane %v1423, %v1436
        %v1438 = vcombine.low %v1405, %v1421
        %v1439 = vcombine.high %v1430, 0.0
        %v1440 = vcombine.high %v1437, 0.0
        %v1442 = vunpack.c.l.s4 1934713408
        %v1443 = vunpack.c.0.s8 %v1442
        %v1444 = vlaneseq
        %v1445 = vshrl.u32 %v1444, 7
        %v1446 = vsub.s32 %v1443, %v1445
        %v1447 = vrot.slane %v1438, %v1446
        %1449 = vrot.lane.b32.xlu0 %v1335, 120
        %v1450 = vpop.permute.xlu0 %1449
        %1452 = vrot.lane.b32.xlu0 %v1335, 112
        %v1453 = vpop.permute.xlu0 %1452
        %1455 = vrot.lane.b32.xlu0 %v1335, 104
        %v1456 = vpop.permute.xlu0 %1455
        %v1458 = vcombine.low %v1335, %v1453
        %v1459 = vcombine.high %v1335, %v1453
        %v1461 = vunpack.c.l.s4 1983009808
        %v1462 = vunpack.c.0.s8 %v1461
        %v1463 = vlaneseq
        %v1464 = vshrl.u32 %v1463, 7
        %v1465 = vsub.s32 %v1462, %v1464
        %v1466 = vrot.slane %v1458, %v1465
        %v1468 = vunpack.c.l.s4 1983009808
        %v1469 = vunpack.c.0.s8 %v1468
        %v1470 = vlaneseq
        %v1471 = vshrl.u32 %v1470, 7
        %v1472 = vsub.s32 %v1469, %v1471
        %v1473 = vrot.slane %v1459, %v1472
        %v1474 = vcombine.low %v1450, %v1456
        %v1475 = vcombine.high %v1450, %v1456
        %v1477 = vunpack.c.l.s4 1983009808
        %v1478 = vunpack.c.0.s8 %v1477
        %v1479 = vlaneseq
        %v1480 = vshrl.u32 %v1479, 7
        %v1481 = vsub.s32 %v1478, %v1480
        %v1482 = vrot.slane %v1474, %v1481
        %v1484 = vunpack.c.l.s4 1983009808
        %v1485 = vunpack.c.0.s8 %v1484
        %v1486 = vlaneseq
        %v1487 = vshrl.u32 %v1486, 7
        %v1488 = vsub.s32 %v1485, %v1487
        %v1489 = vrot.slane %v1475, %v1488
        %v1490 = vcombine.low %v1466, %v1482
        %v1491 = vcombine.high %v1466, %v1482
        %v1493 = vunpack.c.l.s4 1934713408
        %v1494 = vunpack.c.0.s8 %v1493
        %v1495 = vlaneseq
        %v1496 = vshrl.u32 %v1495, 7
        %v1497 = vsub.s32 %v1494, %v1496
        %v1498 = vrot.slane %v1490, %v1497
        %v1500 = vunpack.c.l.s4 1934713408
        %v1501 = vunpack.c.0.s8 %v1500
        %v1502 = vlaneseq
        %v1503 = vshrl.u32 %v1502, 7
        %v1504 = vsub.s32 %v1501, %v1503
        %v1505 = vrot.slane %v1491, %v1504
        %v1506 = vcombine.low %v1473, %v1489
        %v1507 = vcombine.high %v1498, 0.0
        %v1508 = vcombine.high %v1505, 0.0
        %v1510 = vunpack.c.l.s4 1934713408
        %v1511 = vunpack.c.0.s8 %v1510
        %v1512 = vlaneseq
        %v1513 = vshrl.u32 %v1512, 7
        %v1514 = vsub.s32 %v1511, %v1513
        %v1515 = vrot.slane %v1506, %v1514
        %1517 = vrot.lane.b32.xlu0 %v1374, 120
        %v1518 = vpop.permute.xlu0 %1517
        %1520 = vrot.lane.b32.xlu0 %v1374, 112
        %v1521 = vpop.permute.xlu0 %1520
        %1523 = vrot.lane.b32.xlu0 %v1374, 104
        %v1524 = vpop.permute.xlu0 %1523
        %v1526 = vcombine.low %v1374, %v1521
        %v1527 = vcombine.high %v1374, %v1521
        %v1529 = vunpack.c.l.s4 1983009808
        %v1530 = vunpack.c.0.s8 %v1529
        %v1531 = vlaneseq
        %v1532 = vshrl.u32 %v1531, 7
        %v1533 = vsub.s32 %v1530, %v1532
        %v1534 = vrot.slane %v1526, %v1533
        %v1536 = vunpack.c.l.s4 1983009808
        %v1537 = vunpack.c.0.s8 %v1536
        %v1538 = vlaneseq
        %v1539 = vshrl.u32 %v1538, 7
        %v1540 = vsub.s32 %v1537, %v1539
        %v1541 = vrot.slane %v1527, %v1540
        %v1542 = vcombine.low %v1518, %v1524
        %v1543 = vcombine.high %v1518, %v1524
        %v1545 = vunpack.c.l.s4 1983009808
        %v1546 = vunpack.c.0.s8 %v1545
        %v1547 = vlaneseq
        %v1548 = vshrl.u32 %v1547, 7
        %v1549 = vsub.s32 %v1546, %v1548
        %v1550 = vrot.slane %v1542, %v1549
        %v1552 = vunpack.c.l.s4 1983009808
        %v1553 = vunpack.c.0.s8 %v1552
        %v1554 = vlaneseq
        %v1555 = vshrl.u32 %v1554, 7
        %v1556 = vsub.s32 %v1553, %v1555
        %v1557 = vrot.slane %v1543, %v1556
        %v1558 = vcombine.low %v1534, %v1550
        %v1559 = vcombine.high %v1534, %v1550
        %v1561 = vunpack.c.l.s4 1934713408
        %v1562 = vunpack.c.0.s8 %v1561
        %v1563 = vlaneseq
        %v1564 = vshrl.u32 %v1563, 7
        %v1565 = vsub.s32 %v1562, %v1564
        %v1566 = vrot.slane %v1558, %v1565
        %v1568 = vunpack.c.l.s4 1934713408
        %v1569 = vunpack.c.0.s8 %v1568
        %v1570 = vlaneseq
        %v1571 = vshrl.u32 %v1570, 7
        %v1572 = vsub.s32 %v1569, %v1571
        %v1573 = vrot.slane %v1559, %v1572
        %v1574 = vcombine.low %v1541, %v1557
        %v1575 = vcombine.high %v1566, 0.0
        %v1576 = vcombine.high %v1573, 0.0
        %v1578 = vunpack.c.l.s4 1934713408
        %v1579 = vunpack.c.0.s8 %v1578
        %v1580 = vlaneseq
        %v1581 = vshrl.u32 %v1580, 7
        %v1582 = vsub.s32 %v1579, %v1581
        %v1583 = vrot.slane %v1574, %v1582
        %v1584 = vpack.c.bf16 %v1430, %v1430
        %v1585 = vpack.c.bf16 %v1447, %v1447
        %v1586 = vpack.c.bf16 %v1498, %v1498
        %v1587 = vpack.c.bf16 %v1507, %v1507
        %v1588 = vpack.c.bf16 %v1505, %v1505
        %v1589 = vpack.c.bf16 %v1508, %v1508
        %v1590 = vpack.c.bf16 %v1515, %v1515
        %v1591 = vcombine.low %v1584, %v1585
        %v1593 = vunpack.c.l.s4 1983009808
        %v1594 = vunpack.c.0.s8 %v1593
        %v1595 = vlaneseq
        %v1596 = vshrl.u32 %v1595, 7
        %v1597 = vsub.s32 %v1594, %v1596
        %v1598 = vrot.slane %v1591, %v1597
        %v1599 = vpack.c.bf16 %v1437, %v1437
        %v1600 = vcombine.low %v1598, %v1599
        %v1602 = vunpack.c.l.s4 1934713408
        %v1603 = vunpack.c.0.s8 %v1602
        %v1604 = vlaneseq
        %v1605 = vshrl.u32 %v1604, 7
        %v1606 = vsub.s32 %v1603, %v1605
        %v1607 = vrot.slane %v1600, %v1606
        %v1608 = vcombine.high %v1607, 0
        %v1609 = vpack.c.bf16 %v1439, %v1439
        %v1610 = vpack.c.bf16 %v1440, %v1440
        %v1611 = vcombine.low %v1609, %v1610
        %v1613 = vunpack.c.l.s4 1934713408
        %v1614 = vunpack.c.0.s8 %v1613
        %v1615 = vlaneseq
        %v1616 = vshrl.u32 %v1615, 7
        %v1617 = vsub.s32 %v1614, %v1616
        %v1618 = vrot.slane %v1611, %v1617
        %v1619 = vcombine.high %v1618, 0
        %v1622 = vpack.i.b16 %v1618, %v1607
        %v1623 = vshrl.u32 %v1607, 16
        %v1624 = vshrl.u32 %v1618, 16
        %v1625 = vpack.i.b16 %v1624, %v1623
        %v1628 = vpack.i.b16 %v1619, %v1608
        %v1629 = vshrl.u32 %v1608, 16
        %v1630 = vshrl.u32 %v1619, 16
        %v1631 = vpack.i.b16 %v1630, %v1629
        %1632 = vxpose.xlu0.c.b16.start [1/8] %v1586, 128
        %1633 = vxpose.xlu0.c.b16.cont [2/8] 0, 128
        %1634 = vxpose.xlu0.c.b16.cont [3/8] 0, 128
        %1635 = vxpose.xlu0.c.b16.cont [4/8] 0, 128
        %1636 = vxpose.xlu0.c.b16.cont [5/8] 0, 128
        %1637 = vxpose.xlu0.c.b16.cont [6/8] 0, 128
        %1638 = vxpose.xlu0.c.b16.cont [7/8] 0, 128
        %1639 = vxpose.xlu0.c.b16.end [8/8] 0, 128
        %v1640 = vpop.trf.xlu0
        %v1641 = vpop.trf.xlu0
        %v1642 = vpop.trf.xlu0
        %v1643 = vpop.trf.xlu0
        %v1644 = vpop.trf.xlu0
        %v1645 = vpop.trf.xlu0
        %v1646 = vpop.trf.xlu0
        %v1647 = vpop.trf.xlu0
        %1648 = vxpose.xlu0.c.b16.start [1/8] %v1587, 128
        %1649 = vxpose.xlu0.c.b16.cont [2/8] 0, 128
        %1650 = vxpose.xlu0.c.b16.cont [3/8] 0, 128
        %1651 = vxpose.xlu0.c.b16.cont [4/8] 0, 128
        %1652 = vxpose.xlu0.c.b16.cont [5/8] 0, 128
        %1653 = vxpose.xlu0.c.b16.cont [6/8] 0, 128
        %1654 = vxpose.xlu0.c.b16.cont [7/8] 0, 128
        %1655 = vxpose.xlu0.c.b16.end [8/8] 0, 128
        %v1656 = vpop.trf.xlu0
        %v1657 = vpop.trf.xlu0
        %v1658 = vpop.trf.xlu0
        %v1659 = vpop.trf.xlu0
        %v1660 = vpop.trf.xlu0
        %v1661 = vpop.trf.xlu0
        %v1662 = vpop.trf.xlu0
        %v1663 = vpop.trf.xlu0
        %1664 = vxpose.xlu0.c.b16.start [1/8] %v1588, 128
        %1665 = vxpose.xlu0.c.b16.cont [2/8] 0, 128
        %1666 = vxpose.xlu0.c.b16.cont [3/8] 0, 128
        %1667 = vxpose.xlu0.c.b16.cont [4/8] 0, 128
        %1668 = vxpose.xlu0.c.b16.cont [5/8] 0, 128
        %1669 = vxpose.xlu0.c.b16.cont [6/8] 0, 128
        %1670 = vxpose.xlu0.c.b16.cont [7/8] 0, 128
        %1671 = vxpose.xlu0.c.b16.end [8/8] 0, 128
        %v1672 = vpop.trf.xlu0
        %v1673 = vpop.trf.xlu0
        %v1674 = vpop.trf.xlu0
        %v1675 = vpop.trf.xlu0
        %v1676 = vpop.trf.xlu0
        %v1677 = vpop.trf.xlu0
        %v1678 = vpop.trf.xlu0
        %v1679 = vpop.trf.xlu0
        %1680 = vxpose.xlu0.c.b16.start [1/8] %v1589, 128
        %1681 = vxpose.xlu0.c.b16.cont [2/8] 0, 128
        %1682 = vxpose.xlu0.c.b16.cont [3/8] 0, 128
        %1683 = vxpose.xlu0.c.b16.cont [4/8] 0, 128
        %1684 = vxpose.xlu0.c.b16.cont [5/8] 0, 128
        %1685 = vxpose.xlu0.c.b16.cont [6/8] 0, 128
        %1686 = vxpose.xlu0.c.b16.cont [7/8] 0, 128
        %1687 = vxpose.xlu0.c.b16.end [8/8] 0, 128
        %v1688 = vpop.trf.xlu0
        %v1689 = vpop.trf.xlu0
        %v1690 = vpop.trf.xlu0
        %v1691 = vpop.trf.xlu0
        %v1692 = vpop.trf.xlu0
        %v1693 = vpop.trf.xlu0
        %v1694 = vpop.trf.xlu0
        %v1695 = vpop.trf.xlu0
        %1696 = vxpose.xlu0.c.b16.start [1/8] %v1590, 128
        %1697 = vxpose.xlu0.c.b16.cont [2/8] 0, 128
        %1698 = vxpose.xlu0.c.b16.cont [3/8] 0, 128
        %1699 = vxpose.xlu0.c.b16.cont [4/8] 0, 128
        %1700 = vxpose.xlu0.c.b16.cont [5/8] 0, 128
        %1701 = vxpose.xlu0.c.b16.cont [6/8] 0, 128
        %1702 = vxpose.xlu0.c.b16.cont [7/8] 0, 128
        %1703 = vxpose.xlu0.c.b16.end [8/8] 0, 128
        %v1704 = vpop.trf.xlu0
        %v1705 = vpop.trf.xlu0
        %v1706 = vpop.trf.xlu0
        %v1707 = vpop.trf.xlu0
        %v1708 = vpop.trf.xlu0
        %v1709 = vpop.trf.xlu0
        %v1710 = vpop.trf.xlu0
        %v1711 = vpop.trf.xlu0
        %v1712 = vcombine.low %v1640, %v1704
        %v1714 = vunpack.c.l.s4 1983009808
        %v1715 = vunpack.c.0.s8 %v1714
        %v1716 = vlaneseq
        %v1717 = vshrl.u32 %v1716, 7
        %v1718 = vsub.s32 %v1715, %v1717
        %v1719 = vrot.slane %v1712, %v1718
        %v1721 = vunpack.c.l.s4 1983009808
        %v1722 = vunpack.c.0.s8 %v1721
        %v1723 = vlaneseq
        %v1724 = vshrl.u32 %v1723, 7
        %v1725 = vsub.s32 %v1722, %v1724
        %v1726 = vrot.slane %v1672, %v1725
        %v1727 = vcombine.low %v1719, %v1726
        %v1728 = vcombine.high %v1719, %v1726
        %v1730 = vunpack.c.l.s4 1934713408
        %v1731 = vunpack.c.0.s8 %v1730
        %v1732 = vlaneseq
        %v1733 = vshrl.u32 %v1732, 7
        %v1734 = vsub.s32 %v1731, %v1733
        %v1735 = vrot.slane %v1727, %v1734
        %v1737 = vunpack.c.l.s4 1934713408
        %v1738 = vunpack.c.0.s8 %v1737
        %v1739 = vlaneseq
        %v1740 = vshrl.u32 %v1739, 7
        %v1741 = vsub.s32 %v1738, %v1740
        %v1742 = vrot.slane %v1728, %v1741
        %v1743 = vcombine.high %v1735, 0
        %v1744 = vcombine.high %v1742, 0
        %v1746 = vunpack.c.l.s4 1983009808
        %v1747 = vunpack.c.0.s8 %v1746
        %v1748 = vlaneseq
        %v1749 = vshrl.u32 %v1748, 7
        %v1750 = vsub.s32 %v1747, %v1749
        %v1751 = vrot.slane %v1656, %v1750
        %v1753 = vunpack.c.l.s4 1983009808
        %v1754 = vunpack.c.0.s8 %v1753
        %v1755 = vlaneseq
        %v1756 = vshrl.u32 %v1755, 7
        %v1757 = vsub.s32 %v1754, %v1756
        %v1758 = vrot.slane %v1688, %v1757
        %v1759 = vcombine.low %v1751, %v1758
        %v1760 = vcombine.high %v1751, %v1758
        %v1762 = vunpack.c.l.s4 1934713408
        %v1763 = vunpack.c.0.s8 %v1762
        %v1764 = vlaneseq
        %v1765 = vshrl.u32 %v1764, 7
        %v1766 = vsub.s32 %v1763, %v1765
        %v1767 = vrot.slane %v1759, %v1766
        %v1769 = vunpack.c.l.s4 1934713408
        %v1770 = vunpack.c.0.s8 %v1769
        %v1771 = vlaneseq
        %v1772 = vshrl.u32 %v1771, 7
        %v1773 = vsub.s32 %v1770, %v1772
        %v1774 = vrot.slane %v1760, %v1773
        %v1775 = vcombine.high %v1767, 0
        %v1776 = vcombine.high %v1774, 0
        %v1779 = vpack.i.b16 %v1767, %v1735
        %v1781 = vshrl.u32 %v1735, 16
        %v1782 = vshrl.u32 %v1767, 16
        %v1783 = vpack.i.b16 %v1782, %v1781
        %v1787 = vpack.i.b16 %v1775, %v1743
        %v1789 = vshrl.u32 %v1743, 16
        %v1790 = vshrl.u32 %v1775, 16
        %v1791 = vpack.i.b16 %v1790, %v1789
        %v1795 = vpack.i.b16 %v1774, %v1742
        %v1797 = vshrl.u32 %v1742, 16
        %v1798 = vshrl.u32 %v1774, 16
        %v1799 = vpack.i.b16 %v1798, %v1797
        %v1803 = vpack.i.b16 %v1776, %v1744
        %v1805 = vshrl.u32 %v1744, 16
        %v1806 = vshrl.u32 %v1776, 16
        %v1807 = vpack.i.b16 %v1806, %v1805
        %1809 = vxpose.xlu0.c.b16.start [1/8] %v1779, 128
        %1810 = vxpose.xlu0.c.b16.cont [2/8] 0, 128
        %1811 = vxpose.xlu0.c.b16.cont [3/8] 0, 128
        %1812 = vxpose.xlu0.c.b16.cont [4/8] 0, 128
        %1813 = vxpose.xlu0.c.b16.cont [5/8] 0, 128
        %1814 = vxpose.xlu0.c.b16.cont [6/8] 0, 128
        %1815 = vxpose.xlu0.c.b16.cont [7/8] 0, 128
        %1816 = vxpose.xlu0.c.b16.end [8/8] 0, 128
        %v1817 = vpop.trf.xlu0
        %v1818 = vpop.trf.xlu0
        %v1819 = vpop.trf.xlu0
        %v1820 = vpop.trf.xlu0
        %v1821 = vpop.trf.xlu0
        %v1822 = vpop.trf.xlu0
        %v1823 = vpop.trf.xlu0
        %v1824 = vpop.trf.xlu0
        %1825 = vxpose.xlu0.c.b16.start [1/8] %v1783, 128
        %1826 = vxpose.xlu0.c.b16.cont [2/8] 0, 128
        %1827 = vxpose.xlu0.c.b16.cont [3/8] 0, 128
        %1828 = vxpose.xlu0.c.b16.cont [4/8] 0, 128
        %1829 = vxpose.xlu0.c.b16.cont [5/8] 0, 128
        %1830 = vxpose.xlu0.c.b16.cont [6/8] 0, 128
        %1831 = vxpose.xlu0.c.b16.cont [7/8] 0, 128
        %1832 = vxpose.xlu0.c.b16.end [8/8] 0, 128
        %v1833 = vpop.trf.xlu0
        %v1834 = vpop.trf.xlu0
        %v1835 = vpop.trf.xlu0
        %v1836 = vpop.trf.xlu0
        %v1837 = vpop.trf.xlu0
        %v1838 = vpop.trf.xlu0
        %v1839 = vpop.trf.xlu0
        %v1840 = vpop.trf.xlu0
        %1841 = vxpose.xlu0.c.b16.start [1/8] %v1787, 128
        %1842 = vxpose.xlu0.c.b16.cont [2/8] 0, 128
        %1843 = vxpose.xlu0.c.b16.cont [3/8] 0, 128
        %1844 = vxpose.xlu0.c.b16.cont [4/8] 0, 128
        %1845 = vxpose.xlu0.c.b16.cont [5/8] 0, 128
        %1846 = vxpose.xlu0.c.b16.cont [6/8] 0, 128
        %1847 = vxpose.xlu0.c.b16.cont [7/8] 0, 128
        %1848 = vxpose.xlu0.c.b16.end [8/8] 0, 128
        %v1849 = vpop.trf.xlu0
        %v1850 = vpop.trf.xlu0
        %v1851 = vpop.trf.xlu0
        %v1852 = vpop.trf.xlu0
        %v1853 = vpop.trf.xlu0
        %v1854 = vpop.trf.xlu0
        %v1855 = vpop.trf.xlu0
        %v1856 = vpop.trf.xlu0
        %1857 = vxpose.xlu0.c.b16.start [1/8] %v1791, 128
        %1858 = vxpose.xlu0.c.b16.cont [2/8] 0, 128
        %1859 = vxpose.xlu0.c.b16.cont [3/8] 0, 128
        %1860 = vxpose.xlu0.c.b16.cont [4/8] 0, 128
        %1861 = vxpose.xlu0.c.b16.cont [5/8] 0, 128
        %1862 = vxpose.xlu0.c.b16.cont [6/8] 0, 128
        %1863 = vxpose.xlu0.c.b16.cont [7/8] 0, 128
        %1864 = vxpose.xlu0.c.b16.end [8/8] 0, 128
        %v1865 = vpop.trf.xlu0
        %v1866 = vpop.trf.xlu0
        %v1867 = vpop.trf.xlu0
        %v1868 = vpop.trf.xlu0
        %v1869 = vpop.trf.xlu0
        %v1870 = vpop.trf.xlu0
        %v1871 = vpop.trf.xlu0
        %v1872 = vpop.trf.xlu0
        %1873 = vxpose.xlu0.c.b16.start [1/8] %v1795, 128
        %1874 = vxpose.xlu0.c.b16.cont [2/8] 0, 128
        %1875 = vxpose.xlu0.c.b16.cont [3/8] 0, 128
        %1876 = vxpose.xlu0.c.b16.cont [4/8] 0, 128
        %1877 = vxpose.xlu0.c.b16.cont [5/8] 0, 128
        %1878 = vxpose.xlu0.c.b16.cont [6/8] 0, 128
        %1879 = vxpose.xlu0.c.b16.cont [7/8] 0, 128
        %1880 = vxpose.xlu0.c.b16.end [8/8] 0, 128
        %v1881 = vpop.trf.xlu0
        %v1882 = vpop.trf.xlu0
        %v1883 = vpop.trf.xlu0
        %v1884 = vpop.trf.xlu0
        %v1885 = vpop.trf.xlu0
        %v1886 = vpop.trf.xlu0
        %v1887 = vpop.trf.xlu0
        %v1888 = vpop.trf.xlu0
        %1889 = vxpose.xlu0.c.b16.start [1/8] %v1799, 128
        %1890 = vxpose.xlu0.c.b16.cont [2/8] 0, 128
        %1891 = vxpose.xlu0.c.b16.cont [3/8] 0, 128
        %1892 = vxpose.xlu0.c.b16.cont [4/8] 0, 128
        %1893 = vxpose.xlu0.c.b16.cont [5/8] 0, 128
        %1894 = vxpose.xlu0.c.b16.cont [6/8] 0, 128
        %1895 = vxpose.xlu0.c.b16.cont [7/8] 0, 128
        %1896 = vxpose.xlu0.c.b16.end [8/8] 0, 128
        %v1897 = vpop.trf.xlu0
        %v1898 = vpop.trf.xlu0
        %v1899 = vpop.trf.xlu0
        %v1900 = vpop.trf.xlu0
        %v1901 = vpop.trf.xlu0
        %v1902 = vpop.trf.xlu0
        %v1903 = vpop.trf.xlu0
        %v1904 = vpop.trf.xlu0
        %1905 = vxpose.xlu0.c.b16.start [1/8] %v1803, 128
        %1906 = vxpose.xlu0.c.b16.cont [2/8] 0, 128
        %1907 = vxpose.xlu0.c.b16.cont [3/8] 0, 128
        %1908 = vxpose.xlu0.c.b16.cont [4/8] 0, 128
        %1909 = vxpose.xlu0.c.b16.cont [5/8] 0, 128
        %1910 = vxpose.xlu0.c.b16.cont [6/8] 0, 128
        %1911 = vxpose.xlu0.c.b16.cont [7/8] 0, 128
        %1912 = vxpose.xlu0.c.b16.end [8/8] 0, 128
        %v1913 = vpop.trf.xlu0
        %v1914 = vpop.trf.xlu0
        %v1915 = vpop.trf.xlu0
        %v1916 = vpop.trf.xlu0
        %v1917 = vpop.trf.xlu0
        %v1918 = vpop.trf.xlu0
        %v1919 = vpop.trf.xlu0
        %v1920 = vpop.trf.xlu0
        %1921 = vxpose.xlu0.c.b16.start [1/8] %v1807, 128
        %1922 = vxpose.xlu0.c.b16.cont [2/8] 0, 128
        %1923 = vxpose.xlu0.c.b16.cont [3/8] 0, 128
        %1924 = vxpose.xlu0.c.b16.cont [4/8] 0, 128
        %1925 = vxpose.xlu0.c.b16.cont [5/8] 0, 128
        %1926 = vxpose.xlu0.c.b16.cont [6/8] 0, 128
        %1927 = vxpose.xlu0.c.b16.cont [7/8] 0, 128
        %1928 = vxpose.xlu0.c.b16.end [8/8] 0, 128
        %v1929 = vpop.trf.xlu0
        %v1930 = vpop.trf.xlu0
        %v1931 = vpop.trf.xlu0
        %v1932 = vpop.trf.xlu0
        %v1933 = vpop.trf.xlu0
        %v1934 = vpop.trf.xlu0
        %v1935 = vpop.trf.xlu0
        %v1936 = vpop.trf.xlu0
        %v1937 = vcombine.low %v1817, %v1881
        %v1939 = vunpack.c.l.s4 1983009808
        %v1940 = vunpack.c.0.s8 %v1939
        %v1941 = vlaneseq
        %v1942 = vshrl.u32 %v1941, 7
        %v1943 = vsub.s32 %v1940, %v1942
        %v1944 = vrot.slane %v1937, %v1943
        %v1945 = vcombine.low %v1849, %v1913
        %v1947 = vunpack.c.l.s4 1983009808
        %v1948 = vunpack.c.0.s8 %v1947
        %v1949 = vlaneseq
        %v1950 = vshrl.u32 %v1949, 7
        %v1951 = vsub.s32 %v1948, %v1950
        %v1952 = vrot.slane %v1945, %v1951
        %v1953 = vcombine.low %v1944, %v1952
        %v1955 = vunpack.c.l.s4 1934713408
        %v1956 = vunpack.c.0.s8 %v1955
        %v1957 = vlaneseq
        %v1958 = vshrl.u32 %v1957, 7
        %v1959 = vsub.s32 %v1956, %v1958
        %v1960 = vrot.slane %v1953, %v1959
        %v1961 = vcombine.high %v1960, 0
        %v1962 = vcombine.low %v1833, %v1897
        %v1964 = vunpack.c.l.s4 1983009808
        %v1965 = vunpack.c.0.s8 %v1964
        %v1966 = vlaneseq
        %v1967 = vshrl.u32 %v1966, 7
        %v1968 = vsub.s32 %v1965, %v1967
        %v1969 = vrot.slane %v1962, %v1968
        %v1970 = vcombine.low %v1865, %v1929
        %v1972 = vunpack.c.l.s4 1983009808
        %v1973 = vunpack.c.0.s8 %v1972
        %v1974 = vlaneseq
        %v1975 = vshrl.u32 %v1974, 7
        %v1976 = vsub.s32 %v1973, %v1975
        %v1977 = vrot.slane %v1970, %v1976
        %v1978 = vcombine.low %v1969, %v1977
        %v1980 = vunpack.c.l.s4 1934713408
        %v1981 = vunpack.c.0.s8 %v1980
        %v1982 = vlaneseq
        %v1983 = vshrl.u32 %v1982, 7
        %v1984 = vsub.s32 %v1981, %v1983
        %v1985 = vrot.slane %v1978, %v1984
        %v1986 = vcombine.high %v1985, 0
        %v1989 = vpack.i.b16 %v1985, %v1960
        %v1990 = vshrl.u32 %v1960, 16
        %v1991 = vshrl.u32 %v1985, 16
        %v1992 = vpack.i.b16 %v1991, %v1990
        %v1995 = vpack.i.b16 %v1986, %v1961
        %v1996 = vshrl.u32 %v1961, 16
        %v1997 = vshrl.u32 %v1986, 16
        %v1998 = vpack.i.b16 %v1997, %v1996
        %vm1999 = vcmask 64512
        %v2001 = vsel %vm1999, %v1622, 0
        %vm2003 = vcmask 1043456
        %v2005 = vsel %vm2003, %v1989, 0
        %2007 = vmatprep.subr.bf16.mxu0 0
        %2008 = vmatpush1.bf16.msra.mxu0 %v2005
        %2009 = vmatprep.subr.bf16.mxu0 0
        %2010 = vmatpush1.bf16.msra.mxu0 0
        %2011 = vmatprep.subr.bf16.mxu0 0
        %2012 = vmatpush1.bf16.msra.mxu0 0
        %2013 = vmatprep.subr.bf16.mxu0 0
        %2014 = vmatpush1.bf16.msra.mxu0 0
        %2015 = vmatprep.subr.bf16.mxu0 0
        %2016 = vmatpush1.bf16.msra.mxu0 0
        %2017 = vmatprep.subr.bf16.mxu0 0
        %2018 = vmatpush1.bf16.msra.mxu0 0
        %2019 = vmatprep.subr.bf16.mxu0 0
        %2020 = vmatpush1.bf16.msra.mxu0 0
        %2021 = vmatprep.subr.bf16.mxu0 0
        %2022 = vmatpush1.bf16.msra.mxu0 0
        %2023 = vmatprep.subr.bf16.mxu0 0
        %2024 = vmatpush1.bf16.msra.mxu0 0
        %2025 = vmatprep.subr.bf16.mxu0 0
        %2026 = vmatpush1.bf16.msra.mxu0 0
        %2027 = vmatprep.subr.bf16.mxu0 0
        %2028 = vmatpush1.bf16.msra.mxu0 0
        %2029 = vmatprep.subr.bf16.mxu0 0
        %2030 = vmatpush1.bf16.msra.mxu0 0
        %2031 = vmatprep.subr.bf16.mxu0 0
        %2032 = vmatpush1.bf16.msra.mxu0 0
        %2033 = vmatprep.subr.bf16.mxu0 0
        %2034 = vmatpush1.bf16.msra.mxu0 0
        %2035 = vmatprep.subr.bf16.mxu0 0
        %2036 = vmatpush1.bf16.msra.mxu0 0
        %2037 = vmatprep.subr.bf16.mxu0 0
        %2038 = vmatpush1.bf16.msra.mxu0 0
        %2039 = vmatprep.mubr.bf16.mxu0 0
        %2040 = vmatmul.mubr.bf16.gmra.mrb[0].mxu0 %v2001
        %v2041 = vpop.f32.mrb[0].mxu0
        %v2042 = vadd.f32 0.0, %v2041
        %v2043 = vpop.f32.mrb[0].mxu0
        %v2044 = vpop.f32.mrb[0].mxu0
        %v2045 = vpop.f32.mrb[0].mxu0
        %2046 = vdwg.mxu0
        %v2048 = vsel %vm1999, %v1625, 0
        %v2051 = vsel %vm2003, %v1992, 0
        %2053 = vmatprep.subr.bf16.mxu0 0
        %2054 = vmatpush1.bf16.msra.mxu0 %v2051
        %2055 = vmatprep.subr.bf16.mxu0 0
        %2056 = vmatpush1.bf16.msra.mxu0 0
        %2057 = vmatprep.subr.bf16.mxu0 0
        %2058 = vmatpush1.bf16.msra.mxu0 0
        %2059 = vmatprep.subr.bf16.mxu0 0
        %2060 = vmatpush1.bf16.msra.mxu0 0
        %2061 = vmatprep.subr.bf16.mxu0 0
        %2062 = vmatpush1.bf16.msra.mxu0 0
        %2063 = vmatprep.subr.bf16.mxu0 0
        %2064 = vmatpush1.bf16.msra.mxu0 0
        %2065 = vmatprep.subr.bf16.mxu0 0
        %2066 = vmatpush1.bf16.msra.mxu0 0
        %2067 = vmatprep.subr.bf16.mxu0 0
        %2068 = vmatpush1.bf16.msra.mxu0 0
        %2069 = vmatprep.subr.bf16.mxu0 0
        %2070 = vmatpush1.bf16.msra.mxu0 0
        %2071 = vmatprep.subr.bf16.mxu0 0
        %2072 = vmatpush1.bf16.msra.mxu0 0
        %2073 = vmatprep.subr.bf16.mxu0 0
        %2074 = vmatpush1.bf16.msra.mxu0 0
        %2075 = vmatprep.subr.bf16.mxu0 0
        %2076 = vmatpush1.bf16.msra.mxu0 0
        %2077 = vmatprep.subr.bf16.mxu0 0
        %2078 = vmatpush1.bf16.msra.mxu0 0
        %2079 = vmatprep.subr.bf16.mxu0 0
        %2080 = vmatpush1.bf16.msra.mxu0 0
        %2081 = vmatprep.subr.bf16.mxu0 0
        %2082 = vmatpush1.bf16.msra.mxu0 0
        %2083 = vmatprep.subr.bf16.mxu0 0
        %2084 = vmatpush1.bf16.msra.mxu0 0
        %2085 = vmatprep.mubr.bf16.mxu0 0
        %2086 = vmatmul.mubr.bf16.gmra.mrb[0].mxu0 %v2048
        %v2087 = vpop.f32.mrb[0].mxu0
        %v2088 = vadd.f32 0.0, %v2087
        %v2089 = vpop.f32.mrb[0].mxu0
        %v2090 = vpop.f32.mrb[0].mxu0
        %v2091 = vpop.f32.mrb[0].mxu0
        %2092 = vdwg.mxu0
        %v2094 = vsel %vm1999, %v1628, 0
        %v2097 = vsel %vm2003, %v1995, 0
        %2099 = vmatprep.subr.bf16.mxu0 0
        %2100 = vmatpush1.bf16.msra.mxu0 %v2097
        %2101 = vmatprep.subr.bf16.mxu0 0
        %2102 = vmatpush1.bf16.msra.mxu0 0
        %2103 = vmatprep.subr.bf16.mxu0 0
        %2104 = vmatpush1.bf16.msra.mxu0 0
        %2105 = vmatprep.subr.bf16.mxu0 0
        %2106 = vmatpush1.bf16.msra.mxu0 0
        %2107 = vmatprep.subr.bf16.mxu0 0
        %2108 = vmatpush1.bf16.msra.mxu0 0
        %2109 = vmatprep.subr.bf16.mxu0 0
        %2110 = vmatpush1.bf16.msra.mxu0 0
        %2111 = vmatprep.subr.bf16.mxu0 0
        %2112 = vmatpush1.bf16.msra.mxu0 0
        %2113 = vmatprep.subr.bf16.mxu0 0
        %2114 = vmatpush1.bf16.msra.mxu0 0
        %2115 = vmatprep.subr.bf16.mxu0 0
        %2116 = vmatpush1.bf16.msra.mxu0 0
        %2117 = vmatprep.subr.bf16.mxu0 0
        %2118 = vmatpush1.bf16.msra.mxu0 0
        %2119 = vmatprep.subr.bf16.mxu0 0
        %2120 = vmatpush1.bf16.msra.mxu0 0
        %2121 = vmatprep.subr.bf16.mxu0 0
        %2122 = vmatpush1.bf16.msra.mxu0 0
        %2123 = vmatprep.subr.bf16.mxu0 0
        %2124 = vmatpush1.bf16.msra.mxu0 0
        %2125 = vmatprep.subr.bf16.mxu0 0
        %2126 = vmatpush1.bf16.msra.mxu0 0
        %2127 = vmatprep.subr.bf16.mxu0 0
        %2128 = vmatpush1.bf16.msra.mxu0 0
        %2129 = vmatprep.subr.bf16.mxu0 0
        %2130 = vmatpush1.bf16.msra.mxu0 0
        %2131 = vmatprep.mubr.bf16.mxu0 0
        %2132 = vmatmul.mubr.bf16.gmra.mrb[0].mxu0 %v2094
        %v2133 = vpop.f32.mrb[0].mxu0
        %v2134 = vadd.f32 0.0, %v2133
        %v2135 = vpop.f32.mrb[0].mxu0
        %v2136 = vpop.f32.mrb[0].mxu0
        %v2137 = vpop.f32.mrb[0].mxu0
        %2138 = vdwg.mxu0
        %v2140 = vsel %vm1999, %v1631, 0
        %v2143 = vsel %vm2003, %v1998, 0
        %2145 = vmatprep.subr.bf16.mxu0 0
        %2146 = vmatpush1.bf16.msra.mxu0 %v2143
        %2147 = vmatprep.subr.bf16.mxu0 0
        %2148 = vmatpush1.bf16.msra.mxu0 0
        %2149 = vmatprep.subr.bf16.mxu0 0
        %2150 = vmatpush1.bf16.msra.mxu0 0
        %2151 = vmatprep.subr.bf16.mxu0 0
        %2152 = vmatpush1.bf16.msra.mxu0 0
        %2153 = vmatprep.subr.bf16.mxu0 0
        %2154 = vmatpush1.bf16.msra.mxu0 0
        %2155 = vmatprep.subr.bf16.mxu0 0
        %2156 = vmatpush1.bf16.msra.mxu0 0
        %2157 = vmatprep.subr.bf16.mxu0 0
        %2158 = vmatpush1.bf16.msra.mxu0 0
        %2159 = vmatprep.subr.bf16.mxu0 0
        %2160 = vmatpush1.bf16.msra.mxu0 0
        %2161 = vmatprep.subr.bf16.mxu0 0
        %2162 = vmatpush1.bf16.msra.mxu0 0
        %2163 = vmatprep.subr.bf16.mxu0 0
        %2164 = vmatpush1.bf16.msra.mxu0 0
        %2165 = vmatprep.subr.bf16.mxu0 0
        %2166 = vmatpush1.bf16.msra.mxu0 0
        %2167 = vmatprep.subr.bf16.mxu0 0
        %2168 = vmatpush1.bf16.msra.mxu0 0
        %2169 = vmatprep.subr.bf16.mxu0 0
        %2170 = vmatpush1.bf16.msra.mxu0 0
        %2171 = vmatprep.subr.bf16.mxu0 0
        %2172 = vmatpush1.bf16.msra.mxu0 0
        %2173 = vmatprep.subr.bf16.mxu0 0
        %2174 = vmatpush1.bf16.msra.mxu0 0
        %2175 = vmatprep.subr.bf16.mxu0 0
        %2176 = vmatpush1.bf16.msra.mxu0 0
        %2177 = vmatprep.mubr.bf16.mxu0 0
        %2178 = vmatmul.mubr.bf16.gmra.mrb[0].mxu0 %v2140
        %v2179 = vpop.f32.mrb[0].mxu0
        %v2180 = vadd.f32 0.0, %v2179
        %v2181 = vpop.f32.mrb[0].mxu0
        %v2182 = vpop.f32.mrb[0].mxu0
        %v2183 = vpop.f32.mrb[0].mxu0
        %2184 = vdwg.mxu0
        %vm2185 = vcmask 36864
        %v2186 = vsel %vm2185, %v2042, -inf
        %2187 = vmax.xlane.f32.xlu0 %v2186
        %v2188 = vpop.xlane.xlu0 %2187
        %v2189 = vsel %vm2185, %v2088, -inf
        %2190 = vmax.xlane.f32.xlu0 %v2189
        %v2191 = vpop.xlane.xlu0 %2190
        %v2192 = vsel %vm2185, %v2134, -inf
        %2193 = vmax.xlane.f32.xlu0 %v2192
        %v2194 = vpop.xlane.xlu0 %2193
        %v2195 = vsel %vm2185, %v2180, -inf
        %2196 = vmax.xlane.f32.xlu0 %v2195
        %v2197 = vpop.xlane.xlu0 %2196
        %v2198 = vsub.f32 %v2042, %v2188
        %v2199 = vsub.f32 %v2088, %v2191
        %v2200 = vsub.f32 %v2134, %v2194
        %v2201 = vsub.f32 %v2180, %v2197
        %v2202 = vmul.f32 %v2198, 1.442695
        %v2203 = vpow.pop %v2202
        %v2204 = vmul.f32 %v2199, 1.442695
        %v2205 = vpow.pop %v2204
        %v2206 = vmul.f32 %v2200, 1.442695
        %v2207 = vpow.pop %v2206
        %v2208 = vmul.f32 %v2201, 1.442695
        %v2209 = vpow.pop %v2208
        %v2210 = vsel %vm2185, %v2203, 0.0
        %2211 = vadd.xlane.f32.xlu0 %v2210
        %v2212 = vpop.xlane.xlu0 %2211
        %v2213 = vsel %vm2185, %v2205, 0.0
        %2214 = vadd.xlane.f32.xlu0 %v2213
        %v2215 = vpop.xlane.xlu0 %2214
        %v2216 = vsel %vm2185, %v2207, 0.0
        %2217 = vadd.xlane.f32.xlu0 %v2216
        %v2218 = vpop.xlane.xlu0 %2217
        %v2219 = vsel %vm2185, %v2209, 0.0
        %2220 = vadd.xlane.f32.xlu0 %v2219
        %v2221 = vpop.xlane.xlu0 %2220
        %v2222 = vrcp.pop %v2212
        %v2223 = vmul.f32 %v2203, %v2222
        %v2224 = vrcp.pop %v2215
        %v2225 = vmul.f32 %v2205, %v2224
        %v2226 = vrcp.pop %v2218
        %v2227 = vmul.f32 %v2207, %v2226
        %v2228 = vrcp.pop %v2221
        %v2229 = vmul.f32 %v2209, %v2228
        %v2230 = vpack.c.bf16 %v2223, %v2223
        %v2231 = vpack.c.bf16 %v2225, %v2225
        %v2232 = vpack.c.bf16 %v2227, %v2227
        %v2233 = vpack.c.bf16 %v2229, %v2229
        %v2234 = vpack.c.bf16 %v1566, %v1566
        %v2235 = vpack.c.bf16 %v1575, %v1575
        %v2236 = vpack.c.bf16 %v1573, %v1573
        %v2237 = vpack.c.bf16 %v1576, %v1576
        %v2238 = vpack.c.bf16 %v1583, %v1583
        %2239 = vxpose.xlu0.c.b16.start [1/8] %v2234, 128
        %2240 = vxpose.xlu0.c.b16.cont [2/8] 0, 128
        %2241 = vxpose.xlu0.c.b16.cont [3/8] 0, 128
        %2242 = vxpose.xlu0.c.b16.cont [4/8] 0, 128
        %2243 = vxpose.xlu0.c.b16.cont [5/8] 0, 128
        %2244 = vxpose.xlu0.c.b16.cont [6/8] 0, 128
        %2245 = vxpose.xlu0.c.b16.cont [7/8] 0, 128
        %2246 = vxpose.xlu0.c.b16.end [8/8] 0, 128
        %v2247 = vpop.trf.xlu0
        %v2248 = vpop.trf.xlu0
        %v2249 = vpop.trf.xlu0
        %v2250 = vpop.trf.xlu0
        %v2251 = vpop.trf.xlu0
        %v2252 = vpop.trf.xlu0
        %v2253 = vpop.trf.xlu0
        %v2254 = vpop.trf.xlu0
        %2255 = vxpose.xlu0.c.b16.start [1/8] %v2235, 128
        %2256 = vxpose.xlu0.c.b16.cont [2/8] 0, 128
        %2257 = vxpose.xlu0.c.b16.cont [3/8] 0, 128
        %2258 = vxpose.xlu0.c.b16.cont [4/8] 0, 128
        %2259 = vxpose.xlu0.c.b16.cont [5/8] 0, 128
        %2260 = vxpose.xlu0.c.b16.cont [6/8] 0, 128
        %2261 = vxpose.xlu0.c.b16.cont [7/8] 0, 128
        %2262 = vxpose.xlu0.c.b16.end [8/8] 0, 128
        %v2263 = vpop.trf.xlu0
        %v2264 = vpop.trf.xlu0
        %v2265 = vpop.trf.xlu0
        %v2266 = vpop.trf.xlu0
        %v2267 = vpop.trf.xlu0
        %v2268 = vpop.trf.xlu0
        %v2269 = vpop.trf.xlu0
        %v2270 = vpop.trf.xlu0
        %2271 = vxpose.xlu0.c.b16.start [1/8] %v2236, 128
        %2272 = vxpose.xlu0.c.b16.cont [2/8] 0, 128
        %2273 = vxpose.xlu0.c.b16.cont [3/8] 0, 128
        %2274 = vxpose.xlu0.c.b16.cont [4/8] 0, 128
        %2275 = vxpose.xlu0.c.b16.cont [5/8] 0, 128
        %2276 = vxpose.xlu0.c.b16.cont [6/8] 0, 128
        %2277 = vxpose.xlu0.c.b16.cont [7/8] 0, 128
        %2278 = vxpose.xlu0.c.b16.end [8/8] 0, 128
        %v2279 = vpop.trf.xlu0
        %v2280 = vpop.trf.xlu0
        %v2281 = vpop.trf.xlu0
        %v2282 = vpop.trf.xlu0
        %v2283 = vpop.trf.xlu0
        %v2284 = vpop.trf.xlu0
        %v2285 = vpop.trf.xlu0
        %v2286 = vpop.trf.xlu0
        %2287 = vxpose.xlu0.c.b16.start [1/8] %v2237, 128
        %2288 = vxpose.xlu0.c.b16.cont [2/8] 0, 128
        %2289 = vxpose.xlu0.c.b16.cont [3/8] 0, 128
        %2290 = vxpose.xlu0.c.b16.cont [4/8] 0, 128
        %2291 = vxpose.xlu0.c.b16.cont [5/8] 0, 128
        %2292 = vxpose.xlu0.c.b16.cont [6/8] 0, 128
        %2293 = vxpose.xlu0.c.b16.cont [7/8] 0, 128
        %2294 = vxpose.xlu0.c.b16.end [8/8] 0, 128
        %v2295 = vpop.trf.xlu0
        %v2296 = vpop.trf.xlu0
        %v2297 = vpop.trf.xlu0
        %v2298 = vpop.trf.xlu0
        %v2299 = vpop.trf.xlu0
        %v2300 = vpop.trf.xlu0
        %v2301 = vpop.trf.xlu0
        %v2302 = vpop.trf.xlu0
        %2303 = vxpose.xlu0.c.b16.start [1/8] %v2238, 128
        %2304 = vxpose.xlu0.c.b16.cont [2/8] 0, 128
        %2305 = vxpose.xlu0.c.b16.cont [3/8] 0, 128
        %2306 = vxpose.xlu0.c.b16.cont [4/8] 0, 128
        %2307 = vxpose.xlu0.c.b16.cont [5/8] 0, 128
        %2308 = vxpose.xlu0.c.b16.cont [6/8] 0, 128
        %2309 = vxpose.xlu0.c.b16.cont [7/8] 0, 128
        %2310 = vxpose.xlu0.c.b16.end [8/8] 0, 128
        %v2311 = vpop.trf.xlu0
        %v2312 = vpop.trf.xlu0
        %v2313 = vpop.trf.xlu0
        %v2314 = vpop.trf.xlu0
        %v2315 = vpop.trf.xlu0
        %v2316 = vpop.trf.xlu0
        %v2317 = vpop.trf.xlu0
        %v2318 = vpop.trf.xlu0
        %v2319 = vcombine.low %v2247, %v2311
        %v2321 = vunpack.c.l.s4 1983009808
        %v2322 = vunpack.c.0.s8 %v2321
        %v2323 = vlaneseq
        %v2324 = vshrl.u32 %v2323, 7
        %v2325 = vsub.s32 %v2322, %v2324
        %v2326 = vrot.slane %v2319, %v2325
        %v2328 = vunpack.c.l.s4 1983009808
        %v2329 = vunpack.c.0.s8 %v2328
        %v2330 = vlaneseq
        %v2331 = vshrl.u32 %v2330, 7
        %v2332 = vsub.s32 %v2329, %v2331
        %v2333 = vrot.slane %v2279, %v2332
        %v2334 = vcombine.low %v2326, %v2333
        %v2335 = vcombine.high %v2326, %v2333
        %v2337 = vunpack.c.l.s4 1934713408
        %v2338 = vunpack.c.0.s8 %v2337
        %v2339 = vlaneseq
        %v2340 = vshrl.u32 %v2339, 7
        %v2341 = vsub.s32 %v2338, %v2340
        %v2342 = vrot.slane %v2334, %v2341
        %v2344 = vunpack.c.l.s4 1934713408
        %v2345 = vunpack.c.0.s8 %v2344
        %v2346 = vlaneseq
        %v2347 = vshrl.u32 %v2346, 7
        %v2348 = vsub.s32 %v2345, %v2347
        %v2349 = vrot.slane %v2335, %v2348
        %v2350 = vcombine.high %v2342, 0
        %v2351 = vcombine.high %v2349, 0
        %v2353 = vunpack.c.l.s4 1983009808
        %v2354 = vunpack.c.0.s8 %v2353
        %v2355 = vlaneseq
        %v2356 = vshrl.u32 %v2355, 7
        %v2357 = vsub.s32 %v2354, %v2356
        %v2358 = vrot.slane %v2263, %v2357
        %v2360 = vunpack.c.l.s4 1983009808
        %v2361 = vunpack.c.0.s8 %v2360
        %v2362 = vlaneseq
        %v2363 = vshrl.u32 %v2362, 7
        %v2364 = vsub.s32 %v2361, %v2363
        %v2365 = vrot.slane %v2295, %v2364
        %v2366 = vcombine.low %v2358, %v2365
        %v2367 = vcombine.high %v2358, %v2365
        %v2369 = vunpack.c.l.s4 1934713408
        %v2370 = vunpack.c.0.s8 %v2369
        %v2371 = vlaneseq
        %v2372 = vshrl.u32 %v2371, 7
        %v2373 = vsub.s32 %v2370, %v2372
        %v2374 = vrot.slane %v2366, %v2373
        %v2376 = vunpack.c.l.s4 1934713408
        %v2377 = vunpack.c.0.s8 %v2376
        %v2378 = vlaneseq
        %v2379 = vshrl.u32 %v2378, 7
        %v2380 = vsub.s32 %v2377, %v2379
        %v2381 = vrot.slane %v2367, %v2380
        %v2382 = vcombine.high %v2374, 0
        %v2383 = vcombine.high %v2381, 0
        %v2386 = vpack.i.b16 %v2374, %v2342
        %v2388 = vshrl.u32 %v2342, 16
        %v2389 = vshrl.u32 %v2374, 16
        %v2390 = vpack.i.b16 %v2389, %v2388
        %v2394 = vpack.i.b16 %v2382, %v2350
        %v2396 = vshrl.u32 %v2350, 16
        %v2397 = vshrl.u32 %v2382, 16
        %v2398 = vpack.i.b16 %v2397, %v2396
        %v2402 = vpack.i.b16 %v2381, %v2349
        %v2404 = vshrl.u32 %v2349, 16
        %v2405 = vshrl.u32 %v2381, 16
        %v2406 = vpack.i.b16 %v2405, %v2404
        %v2410 = vpack.i.b16 %v2383, %v2351
        %v2412 = vshrl.u32 %v2351, 16
        %v2413 = vshrl.u32 %v2383, 16
        %v2414 = vpack.i.b16 %v2413, %v2412
        %2416 = vxpose.xlu0.c.b16.start [1/8] %v2386, 128
        %2417 = vxpose.xlu0.c.b16.cont [2/8] 0, 128
        %2418 = vxpose.xlu0.c.b16.cont [3/8] 0, 128
        %2419 = vxpose.xlu0.c.b16.cont [4/8] 0, 128
        %2420 = vxpose.xlu0.c.b16.cont [5/8] 0, 128
        %2421 = vxpose.xlu0.c.b16.cont [6/8] 0, 128
        %2422 = vxpose.xlu0.c.b16.cont [7/8] 0, 128
        %2423 = vxpose.xlu0.c.b16.end [8/8] 0, 128
        %v2424 = vpop.trf.xlu0
        %v2425 = vpop.trf.xlu0
        %v2426 = vpop.trf.xlu0
        %v2427 = vpop.trf.xlu0
        %v2428 = vpop.trf.xlu0
        %v2429 = vpop.trf.xlu0
        %v2430 = vpop.trf.xlu0
        %v2431 = vpop.trf.xlu0
        %2432 = vxpose.xlu0.c.b16.start [1/8] %v2390, 128
        %2433 = vxpose.xlu0.c.b16.cont [2/8] 0, 128
        %2434 = vxpose.xlu0.c.b16.cont [3/8] 0, 128
        %2435 = vxpose.xlu0.c.b16.cont [4/8] 0, 128
        %2436 = vxpose.xlu0.c.b16.cont [5/8] 0, 128
        %2437 = vxpose.xlu0.c.b16.cont [6/8] 0, 128
        %2438 = vxpose.xlu0.c.b16.cont [7/8] 0, 128
        %2439 = vxpose.xlu0.c.b16.end [8/8] 0, 128
        %v2440 = vpop.trf.xlu0
        %v2441 = vpop.trf.xlu0
        %v2442 = vpop.trf.xlu0
        %v2443 = vpop.trf.xlu0
        %v2444 = vpop.trf.xlu0
        %v2445 = vpop.trf.xlu0
        %v2446 = vpop.trf.xlu0
        %v2447 = vpop.trf.xlu0
        %2448 = vxpose.xlu0.c.b16.start [1/8] %v2394, 128
        %2449 = vxpose.xlu0.c.b16.cont [2/8] 0, 128
        %2450 = vxpose.xlu0.c.b16.cont [3/8] 0, 128
        %2451 = vxpose.xlu0.c.b16.cont [4/8] 0, 128
        %2452 = vxpose.xlu0.c.b16.cont [5/8] 0, 128
        %2453 = vxpose.xlu0.c.b16.cont [6/8] 0, 128
        %2454 = vxpose.xlu0.c.b16.cont [7/8] 0, 128
        %2455 = vxpose.xlu0.c.b16.end [8/8] 0, 128
        %v2456 = vpop.trf.xlu0
        %v2457 = vpop.trf.xlu0
        %v2458 = vpop.trf.xlu0
        %v2459 = vpop.trf.xlu0
        %v2460 = vpop.trf.xlu0
        %v2461 = vpop.trf.xlu0
        %v2462 = vpop.trf.xlu0
        %v2463 = vpop.trf.xlu0
        %2464 = vxpose.xlu0.c.b16.start [1/8] %v2398, 128
        %2465 = vxpose.xlu0.c.b16.cont [2/8] 0, 128
        %2466 = vxpose.xlu0.c.b16.cont [3/8] 0, 128
        %2467 = vxpose.xlu0.c.b16.cont [4/8] 0, 128
        %2468 = vxpose.xlu0.c.b16.cont [5/8] 0, 128
        %2469 = vxpose.xlu0.c.b16.cont [6/8] 0, 128
        %2470 = vxpose.xlu0.c.b16.cont [7/8] 0, 128
        %2471 = vxpose.xlu0.c.b16.end [8/8] 0, 128
        %v2472 = vpop.trf.xlu0
        %v2473 = vpop.trf.xlu0
        %v2474 = vpop.trf.xlu0
        %v2475 = vpop.trf.xlu0
        %v2476 = vpop.trf.xlu0
        %v2477 = vpop.trf.xlu0
        %v2478 = vpop.trf.xlu0
        %v2479 = vpop.trf.xlu0
        %2480 = vxpose.xlu0.c.b16.start [1/8] %v2402, 128
        %2481 = vxpose.xlu0.c.b16.cont [2/8] 0, 128
        %2482 = vxpose.xlu0.c.b16.cont [3/8] 0, 128
        %2483 = vxpose.xlu0.c.b16.cont [4/8] 0, 128
        %2484 = vxpose.xlu0.c.b16.cont [5/8] 0, 128
        %2485 = vxpose.xlu0.c.b16.cont [6/8] 0, 128
        %2486 = vxpose.xlu0.c.b16.cont [7/8] 0, 128
        %2487 = vxpose.xlu0.c.b16.end [8/8] 0, 128
        %v2488 = vpop.trf.xlu0
        %v2489 = vpop.trf.xlu0
        %v2490 = vpop.trf.xlu0
        %v2491 = vpop.trf.xlu0
        %v2492 = vpop.trf.xlu0
        %v2493 = vpop.trf.xlu0
        %v2494 = vpop.trf.xlu0
        %v2495 = vpop.trf.xlu0
        %2496 = vxpose.xlu0.c.b16.start [1/8] %v2406, 128
        %2497 = vxpose.xlu0.c.b16.cont [2/8] 0, 128
        %2498 = vxpose.xlu0.c.b16.cont [3/8] 0, 128
        %2499 = vxpose.xlu0.c.b16.cont [4/8] 0, 128
        %2500 = vxpose.xlu0.c.b16.cont [5/8] 0, 128
        %2501 = vxpose.xlu0.c.b16.cont [6/8] 0, 128
        %2502 = vxpose.xlu0.c.b16.cont [7/8] 0, 128
        %2503 = vxpose.xlu0.c.b16.end [8/8] 0, 128
        %v2504 = vpop.trf.xlu0
        %v2505 = vpop.trf.xlu0
        %v2506 = vpop.trf.xlu0
        %v2507 = vpop.trf.xlu0
        %v2508 = vpop.trf.xlu0
        %v2509 = vpop.trf.xlu0
        %v2510 = vpop.trf.xlu0
        %v2511 = vpop.trf.xlu0
        %2512 = vxpose.xlu0.c.b16.start [1/8] %v2410, 128
        %2513 = vxpose.xlu0.c.b16.cont [2/8] 0, 128
        %2514 = vxpose.xlu0.c.b16.cont [3/8] 0, 128
        %2515 = vxpose.xlu0.c.b16.cont [4/8] 0, 128
        %2516 = vxpose.xlu0.c.b16.cont [5/8] 0, 128
        %2517 = vxpose.xlu0.c.b16.cont [6/8] 0, 128
        %2518 = vxpose.xlu0.c.b16.cont [7/8] 0, 128
        %2519 = vxpose.xlu0.c.b16.end [8/8] 0, 128
        %v2520 = vpop.trf.xlu0
        %v2521 = vpop.trf.xlu0
        %v2522 = vpop.trf.xlu0
        %v2523 = vpop.trf.xlu0
        %v2524 = vpop.trf.xlu0
        %v2525 = vpop.trf.xlu0
        %v2526 = vpop.trf.xlu0
        %v2527 = vpop.trf.xlu0
        %2528 = vxpose.xlu0.c.b16.start [1/8] %v2414, 128
        %2529 = vxpose.xlu0.c.b16.cont [2/8] 0, 128
        %2530 = vxpose.xlu0.c.b16.cont [3/8] 0, 128
        %2531 = vxpose.xlu0.c.b16.cont [4/8] 0, 128
        %2532 = vxpose.xlu0.c.b16.cont [5/8] 0, 128
        %2533 = vxpose.xlu0.c.b16.cont [6/8] 0, 128
        %2534 = vxpose.xlu0.c.b16.cont [7/8] 0, 128
        %2535 = vxpose.xlu0.c.b16.end [8/8] 0, 128
        %v2536 = vpop.trf.xlu0
        %v2537 = vpop.trf.xlu0
        %v2538 = vpop.trf.xlu0
        %v2539 = vpop.trf.xlu0
        %v2540 = vpop.trf.xlu0
        %v2541 = vpop.trf.xlu0
        %v2542 = vpop.trf.xlu0
        %v2543 = vpop.trf.xlu0
        %v2544 = vcombine.low %v2424, %v2488
        %v2546 = vunpack.c.l.s4 1983009808
        %v2547 = vunpack.c.0.s8 %v2546
        %v2548 = vlaneseq
        %v2549 = vshrl.u32 %v2548, 7
        %v2550 = vsub.s32 %v2547, %v2549
        %v2551 = vrot.slane %v2544, %v2550
        %v2552 = vcombine.low %v2456, %v2520
        %v2554 = vunpack.c.l.s4 1983009808
        %v2555 = vunpack.c.0.s8 %v2554
        %v2556 = vlaneseq
        %v2557 = vshrl.u32 %v2556, 7
        %v2558 = vsub.s32 %v2555, %v2557
        %v2559 = vrot.slane %v2552, %v2558
        %v2560 = vcombine.low %v2551, %v2559
        %v2562 = vunpack.c.l.s4 1934713408
        %v2563 = vunpack.c.0.s8 %v2562
        %v2564 = vlaneseq
        %v2565 = vshrl.u32 %v2564, 7
        %v2566 = vsub.s32 %v2563, %v2565
        %v2567 = vrot.slane %v2560, %v2566
        %v2568 = vcombine.high %v2567, 0
        %v2569 = vcombine.low %v2440, %v2504
        %v2571 = vunpack.c.l.s4 1983009808
        %v2572 = vunpack.c.0.s8 %v2571
        %v2573 = vlaneseq
        %v2574 = vshrl.u32 %v2573, 7
        %v2575 = vsub.s32 %v2572, %v2574
        %v2576 = vrot.slane %v2569, %v2575
        %v2577 = vcombine.low %v2472, %v2536
        %v2579 = vunpack.c.l.s4 1983009808
        %v2580 = vunpack.c.0.s8 %v2579
        %v2581 = vlaneseq
        %v2582 = vshrl.u32 %v2581, 7
        %v2583 = vsub.s32 %v2580, %v2582
        %v2584 = vrot.slane %v2577, %v2583
        %v2585 = vcombine.low %v2576, %v2584
        %v2587 = vunpack.c.l.s4 1934713408
        %v2588 = vunpack.c.0.s8 %v2587
        %v2589 = vlaneseq
        %v2590 = vshrl.u32 %v2589, 7
        %v2591 = vsub.s32 %v2588, %v2590
        %v2592 = vrot.slane %v2585, %v2591
        %v2593 = vcombine.high %v2592, 0
        %v2596 = vpack.i.b16 %v2592, %v2567
        %v2597 = vshrl.u32 %v2567, 16
        %v2598 = vshrl.u32 %v2592, 16
        %v2599 = vpack.i.b16 %v2598, %v2597
        %v2602 = vpack.i.b16 %v2593, %v2568
        %v2603 = vshrl.u32 %v2568, 16
        %v2604 = vshrl.u32 %v2593, 16
        %v2605 = vpack.i.b16 %v2604, %v2603
        %vm2606 = vcmask 39936
        %v2608 = vsel %vm2606, %v2596, 0
        %v2611 = vsel %vm2606, %v2230, 0
        %2613 = vmatprep.subr.bf16.mxu0 0
        %2614 = vmatpush1.bf16.xpose.msra.mxu0 %v2611
        %2615 = vmatprep.subr.bf16.mxu0 0
        %2616 = vmatpush1.bf16.xpose.msra.mxu0 0
        %2617 = vmatprep.subr.bf16.mxu0 0
        %2618 = vmatpush1.bf16.xpose.msra.mxu0 0
        %2619 = vmatprep.subr.bf16.mxu0 0
        %2620 = vmatpush1.bf16.xpose.msra.mxu0 0
        %2621 = vmatprep.subr.bf16.mxu0 0
        %2622 = vmatpush1.bf16.xpose.msra.mxu0 0
        %2623 = vmatprep.subr.bf16.mxu0 0
        %2624 = vmatpush1.bf16.xpose.msra.mxu0 0
        %2625 = vmatprep.subr.bf16.mxu0 0
        %2626 = vmatpush1.bf16.xpose.msra.mxu0 0
        %2627 = vmatprep.subr.bf16.mxu0 0
        %2628 = vmatpush1.bf16.xpose.msra.mxu0 0
        %2629 = vmatprep.subr.bf16.mxu0 0
        %2630 = vmatpush1.bf16.xpose.msra.mxu0 0
        %2631 = vmatprep.subr.bf16.mxu0 0
        %2632 = vmatpush1.bf16.xpose.msra.mxu0 0
        %2633 = vmatprep.subr.bf16.mxu0 0
        %2634 = vmatpush1.bf16.xpose.msra.mxu0 0
        %2635 = vmatprep.subr.bf16.mxu0 0
        %2636 = vmatpush1.bf16.xpose.msra.mxu0 0
        %2637 = vmatprep.subr.bf16.mxu0 0
        %2638 = vmatpush1.bf16.xpose.msra.mxu0 0
        %2639 = vmatprep.subr.bf16.mxu0 0
        %2640 = vmatpush1.bf16.xpose.msra.mxu0 0
        %2641 = vmatprep.subr.bf16.mxu0 0
        %2642 = vmatpush1.bf16.xpose.msra.mxu0 0
        %2643 = vmatprep.subr.bf16.mxu0 0
        %2644 = vmatpush1.bf16.xpose.msra.mxu0 0
        %2645 = vmatprep.mubr.bf16.mxu0 0
        %2646 = vmatmul.mubr.bf16.gmra.mrb[0].mxu0 %v2608
        %v2647 = vpop.f32.mrb[0].mxu0
        %v2648 = vadd.f32 0.0, %v2647
        %v2649 = vpop.f32.mrb[0].mxu0
        %v2650 = vpop.f32.mrb[0].mxu0
        %v2651 = vpop.f32.mrb[0].mxu0
        %2652 = vdwg.mxu0
        %v2654 = vsel %vm2606, %v2599, 0
        %v2657 = vsel %vm2606, %v2231, 0
        %2659 = vmatprep.subr.bf16.mxu0 0
        %2660 = vmatpush1.bf16.xpose.msra.mxu0 %v2657
        %2661 = vmatprep.subr.bf16.mxu0 0
        %2662 = vmatpush1.bf16.xpose.msra.mxu0 0
        %2663 = vmatprep.subr.bf16.mxu0 0
        %2664 = vmatpush1.bf16.xpose.msra.mxu0 0
        %2665 = vmatprep.subr.bf16.mxu0 0
        %2666 = vmatpush1.bf16.xpose.msra.mxu0 0
        %2667 = vmatprep.subr.bf16.mxu0 0
        %2668 = vmatpush1.bf16.xpose.msra.mxu0 0
        %2669 = vmatprep.subr.bf16.mxu0 0
        %2670 = vmatpush1.bf16.xpose.msra.mxu0 0
        %2671 = vmatprep.subr.bf16.mxu0 0
        %2672 = vmatpush1.bf16.xpose.msra.mxu0 0
        %2673 = vmatprep.subr.bf16.mxu0 0
        %2674 = vmatpush1.bf16.xpose.msra.mxu0 0
        %2675 = vmatprep.subr.bf16.mxu0 0
        %2676 = vmatpush1.bf16.xpose.msra.mxu0 0
        %2677 = vmatprep.subr.bf16.mxu0 0
        %2678 = vmatpush1.bf16.xpose.msra.mxu0 0
        %2679 = vmatprep.subr.bf16.mxu0 0
        %2680 = vmatpush1.bf16.xpose.msra.mxu0 0
        %2681 = vmatprep.subr.bf16.mxu0 0
        %2682 = vmatpush1.bf16.xpose.msra.mxu0 0
        %2683 = vmatprep.subr.bf16.mxu0 0
        %2684 = vmatpush1.bf16.xpose.msra.mxu0 0
        %2685 = vmatprep.subr.bf16.mxu0 0
        %2686 = vmatpush1.bf16.xpose.msra.mxu0 0
        %2687 = vmatprep.subr.bf16.mxu0 0
        %2688 = vmatpush1.bf16.xpose.msra.mxu0 0
        %2689 = vmatprep.subr.bf16.mxu0 0
        %2690 = vmatpush1.bf16.xpose.msra.mxu0 0
        %2691 = vmatprep.mubr.bf16.mxu0 0
        %2692 = vmatmul.mubr.bf16.gmra.mrb[0].mxu0 %v2654
        %v2693 = vpop.f32.mrb[0].mxu0
        %v2694 = vadd.f32 0.0, %v2693
        %v2695 = vpop.f32.mrb[0].mxu0
        %v2696 = vpop.f32.mrb[0].mxu0
        %v2697 = vpop.f32.mrb[0].mxu0
        %2698 = vdwg.mxu0
        %v2700 = vsel %vm2606, %v2602, 0
        %v2703 = vsel %vm2606, %v2232, 0
        %2705 = vmatprep.subr.bf16.mxu0 0
        %2706 = vmatpush1.bf16.xpose.msra.mxu0 %v2703
        %2707 = vmatprep.subr.bf16.mxu0 0
        %2708 = vmatpush1.bf16.xpose.msra.mxu0 0
        %2709 = vmatprep.subr.bf16.mxu0 0
        %2710 = vmatpush1.bf16.xpose.msra.mxu0 0
        %2711 = vmatprep.subr.bf16.mxu0 0
        %2712 = vmatpush1.bf16.xpose.msra.mxu0 0
        %2713 = vmatprep.subr.bf16.mxu0 0
        %2714 = vmatpush1.bf16.xpose.msra.mxu0 0
        %2715 = vmatprep.subr.bf16.mxu0 0
        %2716 = vmatpush1.bf16.xpose.msra.mxu0 0
        %2717 = vmatprep.subr.bf16.mxu0 0
        %2718 = vmatpush1.bf16.xpose.msra.mxu0 0
        %2719 = vmatprep.subr.bf16.mxu0 0
        %2720 = vmatpush1.bf16.xpose.msra.mxu0 0
        %2721 = vmatprep.subr.bf16.mxu0 0
        %2722 = vmatpush1.bf16.xpose.msra.mxu0 0
        %2723 = vmatprep.subr.bf16.mxu0 0
        %2724 = vmatpush1.bf16.xpose.msra.mxu0 0
        %2725 = vmatprep.subr.bf16.mxu0 0
        %2726 = vmatpush1.bf16.xpose.msra.mxu0 0
        %2727 = vmatprep.subr.bf16.mxu0 0
        %2728 = vmatpush1.bf16.xpose.msra.mxu0 0
        %2729 = vmatprep.subr.bf16.mxu0 0
        %2730 = vmatpush1.bf16.xpose.msra.mxu0 0
        %2731 = vmatprep.subr.bf16.mxu0 0
        %2732 = vmatpush1.bf16.xpose.msra.mxu0 0
        %2733 = vmatprep.subr.bf16.mxu0 0
        %2734 = vmatpush1.bf16.xpose.msra.mxu0 0
        %2735 = vmatprep.subr.bf16.mxu0 0
        %2736 = vmatpush1.bf16.xpose.msra.mxu0 0
        %2737 = vmatprep.mubr.bf16.mxu0 0
        %2738 = vmatmul.mubr.bf16.gmra.mrb[0].mxu0 %v2700
        %v2739 = vpop.f32.mrb[0].mxu0
        %v2740 = vadd.f32 0.0, %v2739
        %v2741 = vpop.f32.mrb[0].mxu0
        %v2742 = vpop.f32.mrb[0].mxu0
        %v2743 = vpop.f32.mrb[0].mxu0
        %2744 = vdwg.mxu0
        %v2746 = vsel %vm2606, %v2605, 0
        %v2749 = vsel %vm2606, %v2233, 0
        %2751 = vmatprep.subr.bf16.mxu0 0
        %2752 = vmatpush1.bf16.xpose.msra.mxu0 %v2749
        %2753 = vmatprep.subr.bf16.mxu0 0
        %2754 = vmatpush1.bf16.xpose.msra.mxu0 0
        %2755 = vmatprep.subr.bf16.mxu0 0
        %2756 = vmatpush1.bf16.xpose.msra.mxu0 0
        %2757 = vmatprep.subr.bf16.mxu0 0
        %2758 = vmatpush1.bf16.xpose.msra.mxu0 0
        %2759 = vmatprep.subr.bf16.mxu0 0
        %2760 = vmatpush1.bf16.xpose.msra.mxu0 0
        %2761 = vmatprep.subr.bf16.mxu0 0
        %2762 = vmatpush1.bf16.xpose.msra.mxu0 0
        %2763 = vmatprep.subr.bf16.mxu0 0
        %2764 = vmatpush1.bf16.xpose.msra.mxu0 0
        %2765 = vmatprep.subr.bf16.mxu0 0
        %2766 = vmatpush1.bf16.xpose.msra.mxu0 0
        %2767 = vmatprep.subr.bf16.mxu0 0
        %2768 = vmatpush1.bf16.xpose.msra.mxu0 0
        %2769 = vmatprep.subr.bf16.mxu0 0
        %2770 = vmatpush1.bf16.xpose.msra.mxu0 0
        %2771 = vmatprep.subr.bf16.mxu0 0
        %2772 = vmatpush1.bf16.xpose.msra.mxu0 0
        %2773 = vmatprep.subr.bf16.mxu0 0
        %2774 = vmatpush1.bf16.xpose.msra.mxu0 0
        %2775 = vmatprep.subr.bf16.mxu0 0
        %2776 = vmatpush1.bf16.xpose.msra.mxu0 0
        %2777 = vmatprep.subr.bf16.mxu0 0
        %2778 = vmatpush1.bf16.xpose.msra.mxu0 0
        %2779 = vmatprep.subr.bf16.mxu0 0
        %2780 = vmatpush1.bf16.xpose.msra.mxu0 0
        %2781 = vmatprep.subr.bf16.mxu0 0
        %2782 = vmatpush1.bf16.xpose.msra.mxu0 0
        %2783 = vmatprep.mubr.bf16.mxu0 0
        %2784 = vmatmul.mubr.bf16.gmra.mrb[0].mxu0 %v2746
        %v2785 = vpop.f32.mrb[0].mxu0
        %v2786 = vadd.f32 0.0, %v2785
        %v2787 = vpop.f32.mrb[0].mxu0
        %v2788 = vpop.f32.mrb[0].mxu0
        %v2789 = vpop.f32.mrb[0].mxu0
        %2790 = vdwg.mxu0
        %2791 = vxpose.xlu0.b32.start [1/16] %v2648, 128
        %2792 = vxpose.xlu0.b32.cont [2/16] 0.0, 128
        %2793 = vxpose.xlu0.b32.cont [3/16] 0.0, 128
        %2794 = vxpose.xlu0.b32.cont [4/16] 0.0, 128
        %2795 = vxpose.xlu0.b32.cont [5/16] 0.0, 128
        %2796 = vxpose.xlu0.b32.cont [6/16] 0.0, 128
        %2797 = vxpose.xlu0.b32.cont [7/16] 0.0, 128
        %2798 = vxpose.xlu0.b32.cont [8/16] 0.0, 128
        %2799 = vxpose.xlu0.b32.cont [9/16] 0.0, 128
        %2800 = vxpose.xlu0.b32.cont [10/16] 0.0, 128
        %2801 = vxpose.xlu0.b32.cont [11/16] 0.0, 128
        %2802 = vxpose.xlu0.b32.cont [12/16] 0.0, 128
        %2803 = vxpose.xlu0.b32.cont [13/16] 0.0, 128
        %2804 = vxpose.xlu0.b32.cont [14/16] 0.0, 128
        %2805 = vxpose.xlu0.b32.cont [15/16] 0.0, 128
        %2806 = vxpose.xlu0.b32.end [16/16] 0.0, 128
        %v2807 = vpop.trf.xlu0
        %v2808 = vpop.trf.xlu0
        %v2809 = vpop.trf.xlu0
        %v2810 = vpop.trf.xlu0
        %v2811 = vpop.trf.xlu0
        %v2812 = vpop.trf.xlu0
        %v2813 = vpop.trf.xlu0
        %v2814 = vpop.trf.xlu0
        %v2815 = vpop.trf.xlu0
        %v2816 = vpop.trf.xlu0
        %v2817 = vpop.trf.xlu0
        %v2818 = vpop.trf.xlu0
        %v2819 = vpop.trf.xlu0
        %v2820 = vpop.trf.xlu0
        %v2821 = vpop.trf.xlu0
        %v2822 = vpop.trf.xlu0
        %2823 = vxpose.xlu0.b32.start [1/16] %v2694, 128
        %2824 = vxpose.xlu0.b32.cont [2/16] 0.0, 128
        %2825 = vxpose.xlu0.b32.cont [3/16] 0.0, 128
        %2826 = vxpose.xlu0.b32.cont [4/16] 0.0, 128
        %2827 = vxpose.xlu0.b32.cont [5/16] 0.0, 128
        %2828 = vxpose.xlu0.b32.cont [6/16] 0.0, 128
        %2829 = vxpose.xlu0.b32.cont [7/16] 0.0, 128
        %2830 = vxpose.xlu0.b32.cont [8/16] 0.0, 128
        %2831 = vxpose.xlu0.b32.cont [9/16] 0.0, 128
        %2832 = vxpose.xlu0.b32.cont [10/16] 0.0, 128
        %2833 = vxpose.xlu0.b32.cont [11/16] 0.0, 128
        %2834 = vxpose.xlu0.b32.cont [12/16] 0.0, 128
        %2835 = vxpose.xlu0.b32.cont [13/16] 0.0, 128
        %2836 = vxpose.xlu0.b32.cont [14/16] 0.0, 128
        %2837 = vxpose.xlu0.b32.cont [15/16] 0.0, 128
        %2838 = vxpose.xlu0.b32.end [16/16] 0.0, 128
        %v2839 = vpop.trf.xlu0
        %v2840 = vpop.trf.xlu0
        %v2841 = vpop.trf.xlu0
        %v2842 = vpop.trf.xlu0
        %v2843 = vpop.trf.xlu0
        %v2844 = vpop.trf.xlu0
        %v2845 = vpop.trf.xlu0
        %v2846 = vpop.trf.xlu0
        %v2847 = vpop.trf.xlu0
        %v2848 = vpop.trf.xlu0
        %v2849 = vpop.trf.xlu0
        %v2850 = vpop.trf.xlu0
        %v2851 = vpop.trf.xlu0
        %v2852 = vpop.trf.xlu0
        %v2853 = vpop.trf.xlu0
        %v2854 = vpop.trf.xlu0
        %2855 = vxpose.xlu0.b32.start [1/16] %v2740, 128
        %2856 = vxpose.xlu0.b32.cont [2/16] 0.0, 128
        %2857 = vxpose.xlu0.b32.cont [3/16] 0.0, 128
        %2858 = vxpose.xlu0.b32.cont [4/16] 0.0, 128
        %2859 = vxpose.xlu0.b32.cont [5/16] 0.0, 128
        %2860 = vxpose.xlu0.b32.cont [6/16] 0.0, 128
        %2861 = vxpose.xlu0.b32.cont [7/16] 0.0, 128
        %2862 = vxpose.xlu0.b32.cont [8/16] 0.0, 128
        %2863 = vxpose.xlu0.b32.cont [9/16] 0.0, 128
        %2864 = vxpose.xlu0.b32.cont [10/16] 0.0, 128
        %2865 = vxpose.xlu0.b32.cont [11/16] 0.0, 128
        %2866 = vxpose.xlu0.b32.cont [12/16] 0.0, 128
        %2867 = vxpose.xlu0.b32.cont [13/16] 0.0, 128
        %2868 = vxpose.xlu0.b32.cont [14/16] 0.0, 128
        %2869 = vxpose.xlu0.b32.cont [15/16] 0.0, 128
        %2870 = vxpose.xlu0.b32.end [16/16] 0.0, 128
        %v2871 = vpop.trf.xlu0
        %v2872 = vpop.trf.xlu0
        %v2873 = vpop.trf.xlu0
        %v2874 = vpop.trf.xlu0
        %v2875 = vpop.trf.xlu0
        %v2876 = vpop.trf.xlu0
        %v2877 = vpop.trf.xlu0
        %v2878 = vpop.trf.xlu0
        %v2879 = vpop.trf.xlu0
        %v2880 = vpop.trf.xlu0
        %v2881 = vpop.trf.xlu0
        %v2882 = vpop.trf.xlu0
        %v2883 = vpop.trf.xlu0
        %v2884 = vpop.trf.xlu0
        %v2885 = vpop.trf.xlu0
        %v2886 = vpop.trf.xlu0
        %2887 = vxpose.xlu0.b32.start [1/16] %v2786, 128
        %2888 = vxpose.xlu0.b32.cont [2/16] 0.0, 128
        %2889 = vxpose.xlu0.b32.cont [3/16] 0.0, 128
        %2890 = vxpose.xlu0.b32.cont [4/16] 0.0, 128
        %2891 = vxpose.xlu0.b32.cont [5/16] 0.0, 128
        %2892 = vxpose.xlu0.b32.cont [6/16] 0.0, 128
        %2893 = vxpose.xlu0.b32.cont [7/16] 0.0, 128
        %2894 = vxpose.xlu0.b32.cont [8/16] 0.0, 128
        %2895 = vxpose.xlu0.b32.cont [9/16] 0.0, 128
        %2896 = vxpose.xlu0.b32.cont [10/16] 0.0, 128
        %2897 = vxpose.xlu0.b32.cont [11/16] 0.0, 128
        %2898 = vxpose.xlu0.b32.cont [12/16] 0.0, 128
        %2899 = vxpose.xlu0.b32.cont [13/16] 0.0, 128
        %2900 = vxpose.xlu0.b32.cont [14/16] 0.0, 128
        %2901 = vxpose.xlu0.b32.cont [15/16] 0.0, 128
        %2902 = vxpose.xlu0.b32.end [16/16] 0.0, 128
        %v2903 = vpop.trf.xlu0
        %v2904 = vpop.trf.xlu0
        %v2905 = vpop.trf.xlu0
        %v2906 = vpop.trf.xlu0
        %v2907 = vpop.trf.xlu0
        %v2908 = vpop.trf.xlu0
        %v2909 = vpop.trf.xlu0
        %v2910 = vpop.trf.xlu0
        %v2911 = vpop.trf.xlu0
        %v2912 = vpop.trf.xlu0
        %v2913 = vpop.trf.xlu0
        %v2914 = vpop.trf.xlu0
        %v2915 = vpop.trf.xlu0
        %v2916 = vpop.trf.xlu0
        %v2917 = vpop.trf.xlu0
        %v2918 = vpop.trf.xlu0
        %v2919 = vcombine.low %v2807, %v2871
        %v2920 = vcombine.high %v2807, %v2871
        %v2922 = vunpack.c.l.s4 1983009808
        %v2923 = vunpack.c.0.s8 %v2922
        %v2924 = vlaneseq
        %v2925 = vshrl.u32 %v2924, 7
        %v2926 = vsub.s32 %v2923, %v2925
        %v2927 = vrot.slane %v2919, %v2926
        %v2929 = vunpack.c.l.s4 1983009808
        %v2930 = vunpack.c.0.s8 %v2929
        %v2931 = vlaneseq
        %v2932 = vshrl.u32 %v2931, 7
        %v2933 = vsub.s32 %v2930, %v2932
        %v2934 = vrot.slane %v2920, %v2933
        %v2935 = vcombine.low %v2839, %v2903
        %v2936 = vcombine.high %v2839, %v2903
        %v2938 = vunpack.c.l.s4 1983009808
        %v2939 = vunpack.c.0.s8 %v2938
        %v2940 = vlaneseq
        %v2941 = vshrl.u32 %v2940, 7
        %v2942 = vsub.s32 %v2939, %v2941
        %v2943 = vrot.slane %v2935, %v2942
        %v2945 = vunpack.c.l.s4 1983009808
        %v2946 = vunpack.c.0.s8 %v2945
        %v2947 = vlaneseq
        %v2948 = vshrl.u32 %v2947, 7
        %v2949 = vsub.s32 %v2946, %v2948
        %v2950 = vrot.slane %v2936, %v2949
        %v2951 = vcombine.low %v2927, %v2943
        %v2952 = vcombine.high %v2927, %v2943
        %v2954 = vunpack.c.l.s4 1934713408
        %v2955 = vunpack.c.0.s8 %v2954
        %v2956 = vlaneseq
        %v2957 = vshrl.u32 %v2956, 7
        %v2958 = vsub.s32 %v2955, %v2957
        %v2959 = vrot.slane %v2951, %v2958
        %v2961 = vunpack.c.l.s4 1934713408
        %v2962 = vunpack.c.0.s8 %v2961
        %v2963 = vlaneseq
        %v2964 = vshrl.u32 %v2963, 7
        %v2965 = vsub.s32 %v2962, %v2964
        %v2966 = vrot.slane %v2952, %v2965
        %v2967 = vcombine.low %v2934, %v2950
        %v2968 = vcombine.high %v2959, 0.0
        %v2969 = vcombine.high %v2966, 0.0
        %v2970 = vcombine.low %v2959, %v2966
        %v2972 = vunpack.c.l.s4 1983009808
        %v2973 = vunpack.c.0.s8 %v2972
        %v2974 = vlaneseq
        %v2975 = vshrl.u32 %v2974, 7
        %v2976 = vsub.s32 %v2973, %v2975
        %v2977 = vrot.slane %v2970, %v2976
        %v2978 = vcombine.low %v2968, %v2969
        %v2980 = vunpack.c.l.s4 1983009808
        %v2981 = vunpack.c.0.s8 %v2980
        %v2982 = vlaneseq
        %v2983 = vshrl.u32 %v2982, 7
        %v2984 = vsub.s32 %v2981, %v2983
        %v2985 = vrot.slane %v2978, %v2984
        %v2987 = vunpack.c.l.s4 1934713408
        %v2988 = vunpack.c.0.s8 %v2987
        %v2989 = vlaneseq
        %v2990 = vshrl.u32 %v2989, 7
        %v2991 = vsub.s32 %v2988, %v2990
        %v2992 = vrot.slane %v2967, %v2991
        %v2994 = vunpack.c.l.s4 1983009808
        %v2995 = vunpack.c.0.s8 %v2994
        %v2996 = vlaneseq
        %v2997 = vshrl.u32 %v2996, 7
        %v2998 = vsub.s32 %v2995, %v2997
        %v2999 = vrot.slane %v2992, %v2998
        %v3000 = vcombine.low %v2977, %v2985
        %v3001 = vcombine.high %v2977, %v2985
        %v3003 = vunpack.c.l.s4 1934713408
        %v3004 = vunpack.c.0.s8 %v3003
        %v3005 = vlaneseq
        %v3006 = vshrl.u32 %v3005, 7
        %v3007 = vsub.s32 %v3004, %v3006
        %v3008 = vrot.slane %v3000, %v3007
        %v3010 = vunpack.c.l.s4 1934713408
        %v3011 = vunpack.c.0.s8 %v3010
        %v3012 = vlaneseq
        %v3013 = vshrl.u32 %v3012, 7
        %v3014 = vsub.s32 %v3011, %v3013
        %v3015 = vrot.slane %v3001, %v3014
        %v3016 = vcombine.high %v2999, 0.0
        %v3018 = vunpack.c.l.s4 1934713408
        %v3019 = vunpack.c.0.s8 %v3018
        %v3020 = vlaneseq
        %v3021 = vshrl.u32 %v3020, 7
        %v3022 = vsub.s32 %v3019, %v3021
        %v3023 = vrot.slane %v2999, %v3022
        %v3025 = vunpack.c.l.s4 1934713408
        %v3026 = vunpack.c.0.s8 %v3025
        %v3027 = vlaneseq
        %v3028 = vshrl.u32 %v3027, 7
        %v3029 = vsub.s32 %v3026, %v3028
        %v3030 = vrot.slane %v3016, %v3029
        %v3031 = vcombine.low %v3008, %v3023
        %v3032 = vcombine.high %v3008, %v3023
        %v3033 = vcombine.low %v3015, %v3030
        %v3034 = vcombine.high %v3015, %v3030
        %3036 = vrot.lane.b32.xlu0 %v3032, 8
        %v3037 = vpop.permute.xlu0 %3036
        %3040 = vrot.lane.b32.xlu0 %v3033, 16
        %v3041 = vpop.permute.xlu0 %3040
        %3044 = vrot.lane.b32.xlu0 %v3034, 24
        %v3045 = vpop.permute.xlu0 %3044
        %v3047 = vsel %vm1999, %v3031, %v3037
        %vm3048 = vcmask 130048
        %v3049 = vsel %vm3048, %v3047, %v3041
        %vm3050 = vcmask 195584
        %v3051 = vsel %vm3050, %v3049, %v3045
        %v3052 = vld [vmem:[%s591] sm:$0xf]
        %v3053 = vld [vmem:[%s591 + $0x4] sm:$0xf]
        %v3054 = vld [vmem:[%s591 + $0x8] sm:$0xf]
        %v3055 = vld [vmem:[%s591 + $0xc] sm:$0xf]
        %v3056 = vpack.c.bf16 %v3051, %v3051
        %v3057 = vlaneseq
        %v3058 = vshrl.u32 %v3057, 7
        %v3059 = vsub.s32 3, %v3058
        %v3060 = vrot.slane %v1096, %v3059
        %v3065 = vunpack.c.l.b16 %v3052
        %v3066 = vunpack.c.l.b16 %v3053
        %v3067 = vunpack.c.l.b16 %v3054
        %v3068 = vunpack.c.l.b16 %v3055
        %v3069 = vpack.c.b16 %v3066, %v3065
        %v3070 = vpack.c.b16 %v3068, %v3067
        %vm3073 = vcmask 261120
        %v3075 = vsel %vm3073, %v3056, 0
        %3077 = vmatprep.subr.bf16.mxu0 0
        %3078 = vmatpush1.bf16.msra.mxu0 %v3069
        %3079 = vmatprep.subr.bf16.mxu0 0
        %3080 = vmatpush1.bf16.msra.mxu0 %v3070
        %3081 = vmatprep.subr.bf16.mxu0 0
        %3082 = vmatpush1.bf16.msra.mxu0 0
        %3083 = vmatprep.subr.bf16.mxu0 0
        %3084 = vmatpush1.bf16.msra.mxu0 0
        %3085 = vmatprep.subr.bf16.mxu0 0
        %3086 = vmatpush1.bf16.msra.mxu0 0
        %3087 = vmatprep.subr.bf16.mxu0 0
        %3088 = vmatpush1.bf16.msra.mxu0 0
        %3089 = vmatprep.subr.bf16.mxu0 0
        %3090 = vmatpush1.bf16.msra.mxu0 0
        %3091 = vmatprep.subr.bf16.mxu0 0
        %3092 = vmatpush1.bf16.msra.mxu0 0
        %3093 = vmatprep.subr.bf16.mxu0 0
        %3094 = vmatpush1.bf16.msra.mxu0 0
        %3095 = vmatprep.subr.bf16.mxu0 0
        %3096 = vmatpush1.bf16.msra.mxu0 0
        %3097 = vmatprep.subr.bf16.mxu0 0
        %3098 = vmatpush1.bf16.msra.mxu0 0
        %3099 = vmatprep.subr.bf16.mxu0 0
        %3100 = vmatpush1.bf16.msra.mxu0 0
        %3101 = vmatprep.subr.bf16.mxu0 0
        %3102 = vmatpush1.bf16.msra.mxu0 0
        %3103 = vmatprep.subr.bf16.mxu0 0
        %3104 = vmatpush1.bf16.msra.mxu0 0
        %3105 = vmatprep.subr.bf16.mxu0 0
        %3106 = vmatpush1.bf16.msra.mxu0 0
        %3107 = vmatprep.subr.bf16.mxu0 0
        %3108 = vmatpush1.bf16.msra.mxu0 0
        %3109 = vmatprep.mubr.bf16.mxu0 0
        %3110 = vmatmul.mubr.bf16.gmra.mrb[0].mxu0 %v3075
        %v3111 = vpop.f32.mrb[0].mxu0
        %v3112 = vadd.f32 %v3060, %v3111
        %v3113 = vpop.f32.mrb[0].mxu0
        %v3114 = vpop.f32.mrb[0].mxu0
        %v3115 = vpop.f32.mrb[0].mxu0
        %3116 = vdwg.mxu0
        %v3117 = vlaneseq
        %v3118 = vshrl.u32 %v3117, 7
        %v3119 = vsub.s32 4, %v3118
        %v3120 = vrot.slane %v1096, %v3119
        %v3121 = vmul.f32 %v3120, %v3112
        %v3122 = vadd.f32 %v1095, %v3121
        %v3123 = vsel %vm1100, %v3122, 0.0
        %3124 = vadd.xlane.f32.xlu0 %v3123
        %v3125 = vpop.xlane.xlu0 %3124
        %v3126 = vmul.f32 %v3125, 0.03125
        %v3127 = vsub.f32 %v3122, %v3126
        %v3128 = vmul.f32 %v3127, %v601
        %v3129 = vmul.f32 %v3128, %v3128
        %v3130 = vsel %vm1100, %v3129, 0.0
        %3131 = vadd.xlane.f32.xlu0 %v3130
        %v3132 = vpop.xlane.xlu0 %3131
        %v3133 = vmul.f32 %v3132, 0.03125
        %v3134 = vadd.f32 %v3133, 1e-06
        %v3135 = vrsqrt.pop %v3134
        %v3136 = vmul.f32 %v3128, %v3135
        %v3137 = vlaneseq
        %v3138 = vshrl.u32 %v3137, 7
        %v3139 = vsub.s32 5, %v3138
        %v3140 = vrot.slane %v1096, %v3139
        %v3141 = vmul.f32 %v3136, %v3140
        %v3142 = vlaneseq
        %v3143 = vshrl.u32 %v3142, 7
        %v3144 = vsub.s32 6, %v3143
        %v3145 = vrot.slane %v1096, %v3144
        %v3146 = vadd.f32 %v3141, %v3145
        %v3147 = vpack.c.bf16 %v3146, %v3146
        %v3148 = vld [vmem:[%s503] sm:$0xf]
        %v3149 = vld [vmem:[%s503 + $0x4] sm:$0xf]
        %v3150 = vld [vmem:[%s503 + $0x8] sm:$0xf]
        %v3151 = vld [vmem:[%s503 + $0xc] sm:$0xf]
        %v3152 = vld [vmem:[%s503 + $0x10] sm:$0xf]
        %v3153 = vld [vmem:[%s503 + $0x14] sm:$0xf]
        %v3154 = vld [vmem:[%s503 + $0x18] sm:$0xf]
        %v3155 = vld [vmem:[%s503 + $0x1c] sm:$0xf]
        %v3156 = vld [vmem:[%s503 + $0x20] sm:$0xf]
        %v3157 = vld [vmem:[%s503 + $0x24] sm:$0xf]
        %v3158 = vld [vmem:[%s503 + $0x28] sm:$0xf]
        %v3159 = vld [vmem:[%s503 + $0x2c] sm:$0xf]
        %v3160 = vld [vmem:[%s503 + $0x30] sm:$0xf]
        %v3161 = vld [vmem:[%s503 + $0x34] sm:$0xf]
        %v3162 = vld [vmem:[%s503 + $0x38] sm:$0xf]
        %v3163 = vld [vmem:[%s503 + $0x3c] sm:$0xf]
        %v3164 = vlaneseq
        %v3165 = vshrl.u32 %v3164, 7
        %v3166 = vsub.s32 7, %v3165
        %v3167 = vrot.slane %v1096, %v3166
        %v3184 = vunpack.c.l.b16 %v3148
        %v3185 = vunpack.c.l.b16 %v3149
        %v3186 = vunpack.c.l.b16 %v3150
        %v3187 = vunpack.c.l.b16 %v3151
        %v3188 = vunpack.c.l.b16 %v3152
        %v3189 = vunpack.c.l.b16 %v3153
        %v3190 = vunpack.c.l.b16 %v3154
        %v3191 = vunpack.c.l.b16 %v3155
        %v3192 = vunpack.c.l.b16 %v3156
        %v3193 = vunpack.c.l.b16 %v3157
        %v3194 = vunpack.c.l.b16 %v3158
        %v3195 = vunpack.c.l.b16 %v3159
        %v3196 = vunpack.c.l.b16 %v3160
        %v3197 = vunpack.c.l.b16 %v3161
        %v3198 = vunpack.c.l.b16 %v3162
        %v3199 = vunpack.c.l.b16 %v3163
        %v3200 = vpack.c.b16 %v3185, %v3184
        %v3201 = vpack.c.b16 %v3187, %v3186
        %v3202 = vpack.c.b16 %v3189, %v3188
        %v3203 = vpack.c.b16 %v3191, %v3190
        %v3204 = vpack.c.b16 %v3193, %v3192
        %v3205 = vpack.c.b16 %v3195, %v3194
        %v3206 = vpack.c.b16 %v3197, %v3196
        %v3207 = vpack.c.b16 %v3199, %v3198
        %3216 = vmatprep.subr.bf16.mxu0 0
        %3217 = vmatpush1.bf16.msra.mxu0 %v3200
        %3218 = vmatprep.subr.bf16.mxu0 0
        %3219 = vmatpush1.bf16.msra.mxu0 %v3201
        %3220 = vmatprep.subr.bf16.mxu0 0
        %3221 = vmatpush1.bf16.msra.mxu0 %v3202
        %3222 = vmatprep.subr.bf16.mxu0 0
        %3223 = vmatpush1.bf16.msra.mxu0 %v3203
        %3224 = vmatprep.subr.bf16.mxu0 0
        %3225 = vmatpush1.bf16.msra.mxu0 %v3204
        %3226 = vmatprep.subr.bf16.mxu0 0
        %3227 = vmatpush1.bf16.msra.mxu0 %v3205
        %3228 = vmatprep.subr.bf16.mxu0 0
        %3229 = vmatpush1.bf16.msra.mxu0 %v3206
        %3230 = vmatprep.subr.bf16.mxu0 0
        %3231 = vmatpush1.bf16.msra.mxu0 %v3207
        %3232 = vmatprep.subr.bf16.mxu0 0
        %3233 = vmatpush1.bf16.msra.mxu0 0
        %3234 = vmatprep.subr.bf16.mxu0 0
        %3235 = vmatpush1.bf16.msra.mxu0 0
        %3236 = vmatprep.subr.bf16.mxu0 0
        %3237 = vmatpush1.bf16.msra.mxu0 0
        %3238 = vmatprep.subr.bf16.mxu0 0
        %3239 = vmatpush1.bf16.msra.mxu0 0
        %3240 = vmatprep.subr.bf16.mxu0 0
        %3241 = vmatpush1.bf16.msra.mxu0 0
        %3242 = vmatprep.subr.bf16.mxu0 0
        %3243 = vmatpush1.bf16.msra.mxu0 0
        %3244 = vmatprep.subr.bf16.mxu0 0
        %3245 = vmatpush1.bf16.msra.mxu0 0
        %3246 = vmatprep.subr.bf16.mxu0 0
        %3247 = vmatpush1.bf16.msra.mxu0 0
        %3248 = vmatprep.mubr.bf16.mxu0 0
        %3249 = vmatmul.mubr.bf16.gmra.mrb[0].mxu0 %v3147
        %v3250 = vpop.f32.mrb[0].mxu0
        %v3251 = vadd.f32 %v3167, %v3250
        %v3252 = vpop.f32.mrb[0].mxu0
        %v3253 = vpop.f32.mrb[0].mxu0
        %v3254 = vpop.f32.mrb[0].mxu0
        %3255 = vdwg.mxu0
        %v3256 = vmul.f32 %v3251, 0.5
        %v3257 = vmul.f32 %v3251, 0.044715
        %v3258 = vmul.f32 %v3257, %v3251
        %v3259 = vmul.f32 %v3258, %v3251
        %v3260 = vadd.f32 %v3251, %v3259
        %v3261 = vmul.f32 %v3260, 0.7978846
        %v3262 = vtanh.pop %v3261
        %v3263 = vadd.f32 %v3262, 1.0
        %v3264 = vmul.f32 %v3256, %v3263
        %v3265 = vpack.c.bf16 %v3264, %v3264
        %v3266 = vld [vmem:[%s512] sm:$0xf]
        %v3267 = vld [vmem:[%s512 + $0x4] sm:$0xf]
        %v3268 = vld [vmem:[%s512 + $0x8] sm:$0xf]
        %v3269 = vld [vmem:[%s512 + $0xc] sm:$0xf]
        %v3270 = vld [vmem:[%s512 + $0x10] sm:$0xf]
        %v3271 = vld [vmem:[%s512 + $0x14] sm:$0xf]
        %v3272 = vld [vmem:[%s512 + $0x18] sm:$0xf]
        %v3273 = vld [vmem:[%s512 + $0x1c] sm:$0xf]
        %v3274 = vld [vmem:[%s512 + $0x20] sm:$0xf]
        %v3275 = vld [vmem:[%s512 + $0x24] sm:$0xf]
        %v3276 = vld [vmem:[%s512 + $0x28] sm:$0xf]
        %v3277 = vld [vmem:[%s512 + $0x2c] sm:$0xf]
        %v3278 = vld [vmem:[%s512 + $0x30] sm:$0xf]
        %v3279 = vld [vmem:[%s512 + $0x34] sm:$0xf]
        %v3280 = vld [vmem:[%s512 + $0x38] sm:$0xf]
        %v3281 = vld [vmem:[%s512 + $0x3c] sm:$0xf]
        %v3282 = vlaneseq
        %v3283 = vshrl.u32 %v3282, 7
        %v3284 = vsub.s32 0, %v3283
        %v3285 = vrot.slane %v1099, %v3284
        %v3302 = vunpack.c.l.b16 %v3266
        %v3303 = vunpack.c.l.b16 %v3267
        %v3304 = vunpack.c.l.b16 %v3268
        %v3305 = vunpack.c.l.b16 %v3269
        %v3306 = vunpack.c.l.b16 %v3270
        %v3307 = vunpack.c.l.b16 %v3271
        %v3308 = vunpack.c.l.b16 %v3272
        %v3309 = vunpack.c.l.b16 %v3273
        %v3310 = vunpack.c.l.b16 %v3274
        %v3311 = vunpack.c.l.b16 %v3275
        %v3312 = vunpack.c.l.b16 %v3276
        %v3313 = vunpack.c.l.b16 %v3277
        %v3314 = vunpack.c.l.b16 %v3278
        %v3315 = vunpack.c.l.b16 %v3279
        %v3316 = vunpack.c.l.b16 %v3280
        %v3317 = vunpack.c.l.b16 %v3281
        %v3318 = vpack.c.b16 %v3303, %v3302
        %v3319 = vpack.c.b16 %v3305, %v3304
        %v3320 = vpack.c.b16 %v3307, %v3306
        %v3321 = vpack.c.b16 %v3309, %v3308
        %v3322 = vpack.c.b16 %v3311, %v3310
        %v3323 = vpack.c.b16 %v3313, %v3312
        %v3324 = vpack.c.b16 %v3315, %v3314
        %v3325 = vpack.c.b16 %v3317, %v3316
        %3334 = vmatprep.subr.bf16.mxu0 0
        %3335 = vmatpush1.bf16.msra.mxu0 %v3318
        %3336 = vmatprep.subr.bf16.mxu0 0
        %3337 = vmatpush1.bf16.msra.mxu0 %v3319
        %3338 = vmatprep.subr.bf16.mxu0 0
        %3339 = vmatpush1.bf16.msra.mxu0 %v3320
        %3340 = vmatprep.subr.bf16.mxu0 0
        %3341 = vmatpush1.bf16.msra.mxu0 %v3321
        %3342 = vmatprep.subr.bf16.mxu0 0
        %3343 = vmatpush1.bf16.msra.mxu0 %v3322
        %3344 = vmatprep.subr.bf16.mxu0 0
        %3345 = vmatpush1.bf16.msra.mxu0 %v3323
        %3346 = vmatprep.subr.bf16.mxu0 0
        %3347 = vmatpush1.bf16.msra.mxu0 %v3324
        %3348 = vmatprep.subr.bf16.mxu0 0
        %3349 = vmatpush1.bf16.msra.mxu0 %v3325
        %3350 = vmatprep.subr.bf16.mxu0 0
        %3351 = vmatpush1.bf16.msra.mxu0 0
        %3352 = vmatprep.subr.bf16.mxu0 0
        %3353 = vmatpush1.bf16.msra.mxu0 0
        %3354 = vmatprep.subr.bf16.mxu0 0
        %3355 = vmatpush1.bf16.msra.mxu0 0
        %3356 = vmatprep.subr.bf16.mxu0 0
        %3357 = vmatpush1.bf16.msra.mxu0 0
        %3358 = vmatprep.subr.bf16.mxu0 0
        %3359 = vmatpush1.bf16.msra.mxu0 0
        %3360 = vmatprep.subr.bf16.mxu0 0
        %3361 = vmatpush1.bf16.msra.mxu0 0
        %3362 = vmatprep.subr.bf16.mxu0 0
        %3363 = vmatpush1.bf16.msra.mxu0 0
        %3364 = vmatprep.subr.bf16.mxu0 0
        %3365 = vmatpush1.bf16.msra.mxu0 0
        %3366 = vmatprep.mubr.bf16.mxu0 0
        %3367 = vmatmul.mubr.bf16.gmra.mrb[0].mxu0 %v3265
        %v3368 = vpop.f32.mrb[0].mxu0
        %v3369 = vadd.f32 %v3285, %v3368
        %v3370 = vpop.f32.mrb[0].mxu0
        %v3371 = vpop.f32.mrb[0].mxu0
        %v3372 = vpop.f32.mrb[0].mxu0
        %3373 = vdwg.mxu0
        %v3374 = vlaneseq
        %v3375 = vshrl.u32 %v3374, 7
        %v3376 = vsub.s32 1, %v3375
        %v3377 = vrot.slane %v1099, %v3376
        %v3378 = vmul.f32 %v3377, %v3369
        %v3379 = vadd.f32 %v3122, %v3378
        %3380 = vst [vmem:[%s595] sm:$0x1f] %v3379
        %p3381 = scmp.lt.s32.totalorder %s34, 1
        %s3382 = scalar_select %p3381, %s34, 1
        %s3383 = smul.addr %s3382, 8
        %s3384 = scalar_lea.vmem %s12, %s3383
        // Predicated region
        $region89: #{tpu_custom_call.1} parent=67 // pred_check
          %p3385 = pneg %p342
        $region90: #{tpu_custom_call.1} parent=67 // pred_check_branch
          %3387 = sbr.rel (%p3385) target = $region92
        $region91: #{tpu_custom_call.1} parent=67 // pred_region
          _
        $region92: #{tpu_custom_call.1} parent=67 // pred_fallthru
          _
      $region68: #{tpu_custom_call.1} parent=5 // pred_fallthru
        _
      %p3388 = scmp.le.s32.totalorder 2, %s25
      // Predicated region
      $region93: #{tpu_custom_call.1} parent=5 // pred_check
        %p3389 = pneg %p3388
      $region94: #{tpu_custom_call.1} parent=5 // pred_check_branch
        %3391 = sbr.rel (%p3389) target = $region96
      $region95: #{tpu_custom_call.1} parent=5 // pred_region
        %s3392 = ssub.s32 %s25, 2
        // Predicated region
        $region97: #{tpu_custom_call.1} parent=95 // pred_check
          %p3393 = pneg %p348
        $region98: #{tpu_custom_call.1} parent=95 // pred_check_branch
          %3395 = sbr.rel (%p3393) target = $region100
        $region99: #{tpu_custom_call.1} parent=95 // pred_region
          %p3396 = scmp.lt.s32.totalorder %s36, 1
          %s3397 = scalar_select %p3396, %s36, 1
          %s3398 = smul.addr %s3397, 8
          %s3399 = scalar_lea.vmem %s12, %s3398
        $region100: #{tpu_custom_call.1} parent=95 // pred_fallthru
          _
      $region96: #{tpu_custom_call.1} parent=5 // pred_fallthru
        _
    $region6: #{tpu_custom_call.1} parent=1 // loop_footer
      %s29 = sadd.s32 1, %s25
    $region7: #{tpu_custom_call.1} parent=1 // loop_footer_branch
      %24 = sbr.rel target = $region3
    $region8: #{tpu_custom_call.1} parent=1 // loop_exit
      _
    %3400 = vsyncpa [#allocation3], 1
    %s3401 = scalar_lea.sflag [#allocation3], 1
    %3402 = vsyncpa %s3401, 1
    %3403 = vsyncpa [#allocation5], 1
    %s3404 = scalar_lea.sflag [#allocation5], 1
    %3405 = vsyncpa %s3404, 1
    %3406 = vsyncpa [#allocation8], 1
    %s3407 = scalar_lea.sflag [#allocation8], 1
    %3408 = vsyncpa %s3407, 1

</llo_original>
